<compile_context>
chip_gen: v5e
topology: v5e:2x2
jax: 0.10.0
libtpu: 0.0.40
codegen_flags: <defaults>
</compile_context>

<pallas_src>
import jax
import jax.numpy as jnp
from jax.experimental import pallas as pl
from jax.experimental.pallas import tpu as pltpu


def _sigmoid(x):
    # Explicit form so the kernel and the pure-JAX reference use identical math.
    return 1.0 / (1.0 + jnp.exp(-x))


def _ggnn_fused_kernel(src_ref, tgt_ref, x_ref, w_ref, wih_ref, whh_ref,
                       bih_ref, bhh_ref, wc_ref, bc_ref, out_ref):
    N, D = x_ref.shape
    E = src_ref.shape[0]
    num_steps = w_ref.shape[0]

    # Dense adjacency A[t, s] = #edges s -> t (sum aggregation), built once.
    col_ids = jax.lax.broadcasted_iota(jnp.int32, (E, N), 1)    # node id per column
    row_ids = jax.lax.broadcasted_iota(jnp.int32, (N, E), 0)    # node id per row
    oh_src = (col_ids == src_ref[...]).astype(jnp.float32)      # (E, N)
    oh_tgt = (row_ids == tgt_ref[...]).astype(jnp.float32)      # (N, E)
    adj = jnp.dot(oh_tgt, oh_src, preferred_element_type=jnp.float32)  # (N, N)

    h = x_ref[...]
    for i in range(num_steps):  # statically unrolled; all weights stay VMEM-resident
        m = jnp.dot(h, w_ref[i], preferred_element_type=jnp.float32)
        m = jnp.dot(adj, m, preferred_element_type=jnp.float32)  # scatter-add as matmul

        # GRUCell (PyTorch gate order r, z, n); input = m, hidden = h.
        r = _sigmoid(jnp.dot(m, wih_ref[0], preferred_element_type=jnp.float32) + bih_ref[0]
                     + jnp.dot(h, whh_ref[0], preferred_element_type=jnp.float32) + bhh_ref[0])
        z = _sigmoid(jnp.dot(m, wih_ref[1], preferred_element_type=jnp.float32) + bih_ref[1]
                     + jnp.dot(h, whh_ref[1], preferred_element_type=jnp.float32) + bhh_ref[1])
        n = jnp.tanh(jnp.dot(m, wih_ref[2], preferred_element_type=jnp.float32) + bih_ref[2]
                     + r * (jnp.dot(h, whh_ref[2], preferred_element_type=jnp.float32) + bhh_ref[2]))
        h = (1.0 - z) * n + z * h

    act = jnp.maximum(h, 0.0)                       # ReLU
    pooled = jnp.max(act, axis=0, keepdims=True)    # global max pool (batch = all zeros)
    logits = jnp.dot(pooled, wc_ref[...], preferred_element_type=jnp.float32) + bc_ref[...]
    out_ref[...] = _sigmoid(logits)


@jax.jit
def ggnn_simplify_forward(params, x, edge_index):
    """Fused forward of GGNN_simplify (inference) in a single Pallas kernel."""
    D = params["ggnn_w"].shape[1]
    N, in_dim = x.shape
    E = edge_index.shape[1]
    # GatedGraphConv zero-pads node features up to out_channels.
    x_pad = jnp.pad(x.astype(jnp.float32), ((0, 0), (0, D - in_dim)))
    src = edge_index[0].astype(jnp.int32).reshape(E, 1)
    tgt = edge_index[1].astype(jnp.int32).reshape(1, E)

    vmem = pl.BlockSpec(memory_space=pltpu.MemorySpace.VMEM)
    return pl.pallas_call(
        _ggnn_fused_kernel,
        out_shape=jax.ShapeDtypeStruct((1, 2), jnp.float32),
        in_specs=[vmem] * 10,
        out_specs=vmem,
    )(src, tgt, x_pad,
      params["ggnn_w"], params["gru_wih"], params["gru_whh"],
      params["gru_bih"], params["gru_bhh"],
      params["cls_w"], params["cls_b"])


def init_ggnn_simplify_params(key, out_dim, num_steps):
    """Deterministic synthetic params (PyTorch-style uniform init), transposed layout."""
    ks = jax.random.split(key, 7)
    bound = 1.0 / jnp.sqrt(jnp.float32(out_dim))
    u = lambda k, shape: jax.random.uniform(k, shape, jnp.float32, -bound, bound)
    return {
        "ggnn_w":  u(ks[0], (num_steps, out_dim, out_dim)),  # GatedGraphConv.weight[i]
        "gru_wih": u(ks[1], (3, out_dim, out_dim)),          # GRUCell.weight_ih per gate (r,z,n), transposed
        "gru_whh": u(ks[2], (3, out_dim, out_dim)),          # GRUCell.weight_hh per gate, transposed
        "gru_bih": u(ks[3], (3, 1, out_dim)),
        "gru_bhh": u(ks[4], (3, 1, out_dim)),
        "cls_w":   u(ks[5], (out_dim, 2)),                   # Linear(out_dim, 2), transposed
        "cls_b":   u(ks[6], (1, 2)),
    }


def ref_forward(params, x, edge_index):
    """Pure-JAX reference mirroring PyG GatedGraphConv + GRUCell + pool + classifier."""
    w, wih, whh = params["ggnn_w"], params["gru_wih"], params["gru_whh"]
    bih, bhh = params["gru_bih"], params["gru_bhh"]
    wc, bc = params["cls_w"], params["cls_b"]
    N, in_dim = x.shape
    D = w.shape[1]
    h = jnp.pad(x.astype(jnp.float32), ((0, 0), (0, D - in_dim)))
    adj = jnp.zeros((N, N), jnp.float32).at[edge_index[1], edge_index[0]].add(1.0)
    for i in range(w.shape[0]):
        m = adj @ (h @ w[i])
        r = _sigmoid(m @ wih[0] + bih[0] + h @ whh[0] + bhh[0])
        z = _sigmoid(m @ wih[1] + bih[1] + h @ whh[1] + bhh[1])
        n = jnp.tanh(m @ wih[2] + bih[2] + r * (h @ whh[2] + bhh[2]))
        h = (1.0 - z) * n + z * h
    pooled = jnp.max(jnp.maximum(h, 0.0), axis=0, keepdims=True)
    return _sigmoid(pooled @ wc + bc)


if __name__ == "__main__":
    # Small shapes consistent with the module (output_dim, num_steps configurable).
    num_nodes, in_dim, out_dim, num_steps, num_edges = 16, 32, 128, 6, 128

    key = jax.random.PRNGKey(0)
    kx, ke, kp = jax.random.split(key, 3)
    x = jax.random.normal(kx, (num_nodes, in_dim), jnp.float32)
    edge_index = jax.random.randint(ke, (2, num_edges), 0, num_nodes, jnp.int32)
    params = init_ggnn_simplify_params(kp, out_dim, num_steps)

    out = ggnn_simplify_forward(params, x, edge_index)
    out = jax.block_until_ready(out)

    expected = ref_forward(params, x, edge_index)
    assert out.shape == (1, 2)
    assert jnp.allclose(out, expected, atol=1e-4, rtol=1e-4), (out, expected)

    print("KERNEL_OK")
</pallas_src>

<mosaic_0001>
module attributes {stable_mosaic.version = 11 : i64} {
  func.func @_ggnn_fused_kernel(%arg0: memref<128x1xi32, #tpu.memory_space<vmem>>, %arg1: memref<1x128xi32, #tpu.memory_space<vmem>>, %arg2: memref<16x128xf32, #tpu.memory_space<vmem>>, %arg3: memref<6x128x128xf32, #tpu.memory_space<vmem>>, %arg4: memref<3x128x128xf32, #tpu.memory_space<vmem>>, %arg5: memref<3x128x128xf32, #tpu.memory_space<vmem>>, %arg6: memref<3x1x128xf32, #tpu.memory_space<vmem>>, %arg7: memref<3x1x128xf32, #tpu.memory_space<vmem>>, %arg8: memref<128x2xf32, #tpu.memory_space<vmem>>, %arg9: memref<1x2xf32, #tpu.memory_space<vmem>>, %arg10: memref<1x2xf32, #tpu.memory_space<vmem>>) attributes {dimension_semantics = [], scalar_prefetch = 0 : i64, scratch_operands = 0 : i64, tpu.core_type = #tpu.core_type<tc>} {
    %0 = tpu.iota {dimensions = array<i32: 1>} : vector<128x16xi32>
    %1 = tpu.iota {dimensions = array<i32: 0>} : vector<16x128xi32>
    %c0 = arith.constant 0 : index
    %c0_0 = arith.constant 0 : index
    %2 = vector.load %arg0[%c0, %c0_0] : memref<128x1xi32, #tpu.memory_space<vmem>>, vector<128x1xi32>
    %3 = vector.broadcast %2 : vector<128x1xi32> to vector<128x16xi32>
    %4 = arith.cmpi eq, %0, %3 : vector<128x16xi32>
    %5 = arith.extui %4 : vector<128x16xi1> to vector<128x16xi32>
    %6 = arith.sitofp %5 : vector<128x16xi32> to vector<128x16xf32>
    %c0_1 = arith.constant 0 : index
    %c0_2 = arith.constant 0 : index
    %7 = vector.load %arg1[%c0_1, %c0_2] : memref<1x128xi32, #tpu.memory_space<vmem>>, vector<1x128xi32>
    %8 = vector.broadcast %7 : vector<1x128xi32> to vector<16x128xi32>
    %9 = arith.cmpi eq, %1, %8 : vector<16x128xi32>
    %10 = arith.extui %9 : vector<16x128xi1> to vector<16x128xi32>
    %11 = arith.sitofp %10 : vector<16x128xi32> to vector<16x128xf32>
    %cst = arith.constant dense<0.000000e+00> : vector<16x16xf32>
    %12 = tpu.matmul %11, %6, %cst {dimension_numbers = #tpu.dot_dimension_numbers<[1], [0], [0], [1], [0, 0, 1, 1], [], []>} : vector<16x128xf32>, vector<128x16xf32>, vector<16x16xf32> -> vector<16x16xf32>
    %c0_3 = arith.constant 0 : index
    %c0_4 = arith.constant 0 : index
    %13 = vector.load %arg2[%c0_3, %c0_4] : memref<16x128xf32, #tpu.memory_space<vmem>>, vector<16x128xf32>
    %c0_5 = arith.constant 0 : index
    %c0_6 = arith.constant 0 : index
    %c0_7 = arith.constant 0 : index
    %14 = vector.load %arg3[%c0_5, %c0_6, %c0_7] : memref<6x128x128xf32, #tpu.memory_space<vmem>>, vector<1x128x128xf32>
    %15 = vector.shape_cast %14 : vector<1x128x128xf32> to vector<128x128xf32>
    %cst_8 = arith.constant dense<0.000000e+00> : vector<16x128xf32>
    %16 = tpu.matmul %13, %15, %cst_8 {dimension_numbers = #tpu.dot_dimension_numbers<[1], [0], [0], [1], [0, 0, 1, 1], [], []>} : vector<16x128xf32>, vector<128x128xf32>, vector<16x128xf32> -> vector<16x128xf32>
    %cst_9 = arith.constant dense<0.000000e+00> : vector<16x128xf32>
    %17 = tpu.matmul %12, %16, %cst_9 {dimension_numbers = #tpu.dot_dimension_numbers<[1], [0], [0], [1], [0, 0, 1, 1], [], []>} : vector<16x16xf32>, vector<16x128xf32>, vector<16x128xf32> -> vector<16x128xf32>
    %c0_10 = arith.constant 0 : index
    %c0_11 = arith.constant 0 : index
    %c0_12 = arith.constant 0 : index
    %18 = vector.load %arg4[%c0_10, %c0_11, %c0_12] : memref<3x128x128xf32, #tpu.memory_space<vmem>>, vector<1x128x128xf32>
    %19 = vector.shape_cast %18 : vector<1x128x128xf32> to vector<128x128xf32>
    %cst_13 = arith.constant dense<0.000000e+00> : vector<16x128xf32>
    %20 = tpu.matmul %17, %19, %cst_13 {dimension_numbers = #tpu.dot_dimension_numbers<[1], [0], [0], [1], [0, 0, 1, 1], [], []>} : vector<16x128xf32>, vector<128x128xf32>, vector<16x128xf32> -> vector<16x128xf32>
    %c0_14 = arith.constant 0 : index
    %c0_15 = arith.constant 0 : index
    %c0_16 = arith.constant 0 : index
    %21 = vector.load %arg6[%c0_14, %c0_15, %c0_16] : memref<3x1x128xf32, #tpu.memory_space<vmem>>, vector<1x1x128xf32>
    %22 = vector.shape_cast %21 : vector<1x1x128xf32> to vector<1x128xf32>
    %23 = vector.broadcast %22 : vector<1x128xf32> to vector<16x128xf32>
    %24 = arith.addf %20, %23 : vector<16x128xf32>
    %c0_17 = arith.constant 0 : index
    %c0_18 = arith.constant 0 : index
    %c0_19 = arith.constant 0 : index
    %25 = vector.load %arg5[%c0_17, %c0_18, %c0_19] : memref<3x128x128xf32, #tpu.memory_space<vmem>>, vector<1x128x128xf32>
    %26 = vector.shape_cast %25 : vector<1x128x128xf32> to vector<128x128xf32>
    %cst_20 = arith.constant dense<0.000000e+00> : vector<16x128xf32>
    %27 = tpu.matmul %13, %26, %cst_20 {dimension_numbers = #tpu.dot_dimension_numbers<[1], [0], [0], [1], [0, 0, 1, 1], [], []>} : vector<16x128xf32>, vector<128x128xf32>, vector<16x128xf32> -> vector<16x128xf32>
    %28 = arith.addf %24, %27 : vector<16x128xf32>
    %c0_21 = arith.constant 0 : index
    %c0_22 = arith.constant 0 : index
    %c0_23 = arith.constant 0 : index
    %29 = vector.load %arg7[%c0_21, %c0_22, %c0_23] : memref<3x1x128xf32, #tpu.memory_space<vmem>>, vector<1x1x128xf32>
    %30 = vector.shape_cast %29 : vector<1x1x128xf32> to vector<1x128xf32>
    %31 = vector.broadcast %30 : vector<1x128xf32> to vector<16x128xf32>
    %32 = arith.addf %28, %31 : vector<16x128xf32>
    %cst_24 = arith.constant 0.000000e+00 : f32
    %33 = vector.broadcast %cst_24 : f32 to vector<16x128xf32>
    %34 = arith.subf %33, %32 : vector<16x128xf32>
    %35 = math.exp %34 : vector<16x128xf32>
    %cst_25 = arith.constant 1.000000e+00 : f32
    %36 = vector.broadcast %cst_25 : f32 to vector<16x128xf32>
    %37 = arith.addf %36, %35 : vector<16x128xf32>
    %cst_26 = arith.constant 1.000000e+00 : f32
    %38 = vector.broadcast %cst_26 : f32 to vector<16x128xf32>
    %39 = arith.divf %38, %37 : vector<16x128xf32>
    %c1 = arith.constant 1 : index
    %c0_27 = arith.constant 0 : index
    %c0_28 = arith.constant 0 : index
    %40 = vector.load %arg4[%c1, %c0_27, %c0_28] : memref<3x128x128xf32, #tpu.memory_space<vmem>>, vector<1x128x128xf32>
    %41 = vector.shape_cast %40 : vector<1x128x128xf32> to vector<128x128xf32>
    %cst_29 = arith.constant dense<0.000000e+00> : vector<16x128xf32>
    %42 = tpu.matmul %17, %41, %cst_29 {dimension_numbers = #tpu.dot_dimension_numbers<[1], [0], [0], [1], [0, 0, 1, 1], [], []>} : vector<16x128xf32>, vector<128x128xf32>, vector<16x128xf32> -> vector<16x128xf32>
    %c1_30 = arith.constant 1 : index
    %c0_31 = arith.constant 0 : index
    %c0_32 = arith.constant 0 : index
    %43 = vector.load %arg6[%c1_30, %c0_31, %c0_32] : memref<3x1x128xf32, #tpu.memory_space<vmem>>, vector<1x1x128xf32>
    %44 = vector.shape_cast %43 : vector<1x1x128xf32> to vector<1x128xf32>
    %45 = vector.broadcast %44 : vector<1x128xf32> to vector<16x128xf32>
    %46 = arith.addf %42, %45 : vector<16x128xf32>
    %c1_33 = arith.constant 1 : index
    %c0_34 = arith.constant 0 : index
    %c0_35 = arith.constant 0 : index
    %47 = vector.load %arg5[%c1_33, %c0_34, %c0_35] : memref<3x128x128xf32, #tpu.memory_space<vmem>>, vector<1x128x128xf32>
    %48 = vector.shape_cast %47 : vector<1x128x128xf32> to vector<128x128xf32>
    %cst_36 = arith.constant dense<0.000000e+00> : vector<16x128xf32>
    %49 = tpu.matmul %13, %48, %cst_36 {dimension_numbers = #tpu.dot_dimension_numbers<[1], [0], [0], [1], [0, 0, 1, 1], [], []>} : vector<16x128xf32>, vector<128x128xf32>, vector<16x128xf32> -> vector<16x128xf32>
    %50 = arith.addf %46, %49 : vector<16x128xf32>
    %c1_37 = arith.constant 1 : index
    %c0_38 = arith.constant 0 : index
    %c0_39 = arith.constant 0 : index
    %51 = vector.load %arg7[%c1_37, %c0_38, %c0_39] : memref<3x1x128xf32, #tpu.memory_space<vmem>>, vector<1x1x128xf32>
    %52 = vector.shape_cast %51 : vector<1x1x128xf32> to vector<1x128xf32>
    %53 = vector.broadcast %52 : vector<1x128xf32> to vector<16x128xf32>
    %54 = arith.addf %50, %53 : vector<16x128xf32>
    %cst_40 = arith.constant 0.000000e+00 : f32
    %55 = vector.broadcast %cst_40 : f32 to vector<16x128xf32>
    %56 = arith.subf %55, %54 : vector<16x128xf32>
    %57 = math.exp %56 : vector<16x128xf32>
    %cst_41 = arith.constant 1.000000e+00 : f32
    %58 = vector.broadcast %cst_41 : f32 to vector<16x128xf32>
    %59 = arith.addf %58, %57 : vector<16x128xf32>
    %cst_42 = arith.constant 1.000000e+00 : f32
    %60 = vector.broadcast %cst_42 : f32 to vector<16x128xf32>
    %61 = arith.divf %60, %59 : vector<16x128xf32>
    %c2 = arith.constant 2 : index
    %c0_43 = arith.constant 0 : index
    %c0_44 = arith.constant 0 : index
    %62 = vector.load %arg4[%c2, %c0_43, %c0_44] : memref<3x128x128xf32, #tpu.memory_space<vmem>>, vector<1x128x128xf32>
    %63 = vector.shape_cast %62 : vector<1x128x128xf32> to vector<128x128xf32>
    %cst_45 = arith.constant dense<0.000000e+00> : vector<16x128xf32>
    %64 = tpu.matmul %17, %63, %cst_45 {dimension_numbers = #tpu.dot_dimension_numbers<[1], [0], [0], [1], [0, 0, 1, 1], [], []>} : vector<16x128xf32>, vector<128x128xf32>, vector<16x128xf32> -> vector<16x128xf32>
    %c2_46 = arith.constant 2 : index
    %c0_47 = arith.constant 0 : index
    %c0_48 = arith.constant 0 : index
    %65 = vector.load %arg6[%c2_46, %c0_47, %c0_48] : memref<3x1x128xf32, #tpu.memory_space<vmem>>, vector<1x1x128xf32>
    %66 = vector.shape_cast %65 : vector<1x1x128xf32> to vector<1x128xf32>
    %67 = vector.broadcast %66 : vector<1x128xf32> to vector<16x128xf32>
    %68 = arith.addf %64, %67 : vector<16x128xf32>
    %c2_49 = arith.constant 2 : index
    %c0_50 = arith.constant 0 : index
    %c0_51 = arith.constant 0 : index
    %69 = vector.load %arg5[%c2_49, %c0_50, %c0_51] : memref<3x128x128xf32, #tpu.memory_space<vmem>>, vector<1x128x128xf32>
    %70 = vector.shape_cast %69 : vector<1x128x128xf32> to vector<128x128xf32>
    %cst_52 = arith.constant dense<0.000000e+00> : vector<16x128xf32>
    %71 = tpu.matmul %13, %70, %cst_52 {dimension_numbers = #tpu.dot_dimension_numbers<[1], [0], [0], [1], [0, 0, 1, 1], [], []>} : vector<16x128xf32>, vector<128x128xf32>, vector<16x128xf32> -> vector<16x128xf32>
    %c2_53 = arith.constant 2 : index
    %c0_54 = arith.constant 0 : index
    %c0_55 = arith.constant 0 : index
    %72 = vector.load %arg7[%c2_53, %c0_54, %c0_55] : memref<3x1x128xf32, #tpu.memory_space<vmem>>, vector<1x1x128xf32>
    %73 = vector.shape_cast %72 : vector<1x1x128xf32> to vector<1x128xf32>
    %74 = vector.broadcast %73 : vector<1x128xf32> to vector<16x128xf32>
    %75 = arith.addf %71, %74 : vector<16x128xf32>
    %76 = arith.mulf %39, %75 : vector<16x128xf32>
    %77 = arith.addf %68, %76 : vector<16x128xf32>
    %78 = math.tanh %77 : vector<16x128xf32>
    %cst_56 = arith.constant 1.000000e+00 : f32
    %79 = vector.broadcast %cst_56 : f32 to vector<16x128xf32>
    %80 = arith.subf %79, %61 : vector<16x128xf32>
    %81 = arith.mulf %80, %78 : vector<16x128xf32>
    %82 = arith.mulf %61, %13 : vector<16x128xf32>
    %83 = arith.addf %81, %82 : vector<16x128xf32>
    %c1_57 = arith.constant 1 : index
    %c0_58 = arith.constant 0 : index
    %c0_59 = arith.constant 0 : index
    %84 = vector.load %arg3[%c1_57, %c0_58, %c0_59] : memref<6x128x128xf32, #tpu.memory_space<vmem>>, vector<1x128x128xf32>
    %85 = vector.shape_cast %84 : vector<1x128x128xf32> to vector<128x128xf32>
    %cst_60 = arith.constant dense<0.000000e+00> : vector<16x128xf32>
    %86 = tpu.matmul %83, %85, %cst_60 {dimension_numbers = #tpu.dot_dimension_numbers<[1], [0], [0], [1], [0, 0, 1, 1], [], []>} : vector<16x128xf32>, vector<128x128xf32>, vector<16x128xf32> -> vector<16x128xf32>
    %cst_61 = arith.constant dense<0.000000e+00> : vector<16x128xf32>
    %87 = tpu.matmul %12, %86, %cst_61 {dimension_numbers = #tpu.dot_dimension_numbers<[1], [0], [0], [1], [0, 0, 1, 1], [], []>} : vector<16x16xf32>, vector<16x128xf32>, vector<16x128xf32> -> vector<16x128xf32>
    %c0_62 = arith.constant 0 : index
    %c0_63 = arith.constant 0 : index
    %c0_64 = arith.constant 0 : index
    %88 = vector.load %arg4[%c0_62, %c0_63, %c0_64] : memref<3x128x128xf32, #tpu.memory_space<vmem>>, vector<1x128x128xf32>
    %89 = vector.shape_cast %88 : vector<1x128x128xf32> to vector<128x128xf32>
    %cst_65 = arith.constant dense<0.000000e+00> : vector<16x128xf32>
    %90 = tpu.matmul %87, %89, %cst_65 {dimension_numbers = #tpu.dot_dimension_numbers<[1], [0], [0], [1], [0, 0, 1, 1], [], []>} : vector<16x128xf32>, vector<128x128xf32>, vector<16x128xf32> -> vector<16x128xf32>
    %c0_66 = arith.constant 0 : index
    %c0_67 = arith.constant 0 : index
    %c0_68 = arith.constant 0 : index
    %91 = vector.load %arg6[%c0_66, %c0_67, %c0_68] : memref<3x1x128xf32, #tpu.memory_space<vmem>>, vector<1x1x128xf32>
    %92 = vector.shape_cast %91 : vector<1x1x128xf32> to vector<1x128xf32>
    %93 = vector.broadcast %92 : vector<1x128xf32> to vector<16x128xf32>
    %94 = arith.addf %90, %93 : vector<16x128xf32>
    %c0_69 = arith.constant 0 : index
    %c0_70 = arith.constant 0 : index
    %c0_71 = arith.constant 0 : index
    %95 = vector.load %arg5[%c0_69, %c0_70, %c0_71] : memref<3x128x128xf32, #tpu.memory_space<vmem>>, vector<1x128x128xf32>
    %96 = vector.shape_cast %95 : vector<1x128x128xf32> to vector<128x128xf32>
    %cst_72 = arith.constant dense<0.000000e+00> : vector<16x128xf32>
    %97 = tpu.matmul %83, %96, %cst_72 {dimension_numbers = #tpu.dot_dimension_numbers<[1], [0], [0], [1], [0, 0, 1, 1], [], []>} : vector<16x128xf32>, vector<128x128xf32>, vector<16x128xf32> -> vector<16x128xf32>
    %98 = arith.addf %94, %97 : vector<16x128xf32>
    %c0_73 = arith.constant 0 : index
    %c0_74 = arith.constant 0 : index
    %c0_75 = arith.constant 0 : index
    %99 = vector.load %arg7[%c0_73, %c0_74, %c0_75] : memref<3x1x128xf32, #tpu.memory_space<vmem>>, vector<1x1x128xf32>
    %100 = vector.shape_cast %99 : vector<1x1x128xf32> to vector<1x128xf32>
    %101 = vector.broadcast %100 : vector<1x128xf32> to vector<16x128xf32>
    %102 = arith.addf %98, %101 : vector<16x128xf32>
    %cst_76 = arith.constant 0.000000e+00 : f32
    %103 = vector.broadcast %cst_76 : f32 to vector<16x128xf32>
    %104 = arith.subf %103, %102 : vector<16x128xf32>
    %105 = math.exp %104 : vector<16x128xf32>
    %cst_77 = arith.constant 1.000000e+00 : f32
    %106 = vector.broadcast %cst_77 : f32 to vector<16x128xf32>
    %107 = arith.addf %106, %105 : vector<16x128xf32>
    %cst_78 = arith.constant 1.000000e+00 : f32
    %108 = vector.broadcast %cst_78 : f32 to vector<16x128xf32>
    %109 = arith.divf %108, %107 : vector<16x128xf32>
    %c1_79 = arith.constant 1 : index
    %c0_80 = arith.constant 0 : index
    %c0_81 = arith.constant 0 : index
    %110 = vector.load %arg4[%c1_79, %c0_80, %c0_81] : memref<3x128x128xf32, #tpu.memory_space<vmem>>, vector<1x128x128xf32>
    %111 = vector.shape_cast %110 : vector<1x128x128xf32> to vector<128x128xf32>
    %cst_82 = arith.constant dense<0.000000e+00> : vector<16x128xf32>
    %112 = tpu.matmul %87, %111, %cst_82 {dimension_numbers = #tpu.dot_dimension_numbers<[1], [0], [0], [1], [0, 0, 1, 1], [], []>} : vector<16x128xf32>, vector<128x128xf32>, vector<16x128xf32> -> vector<16x128xf32>
    %c1_83 = arith.constant 1 : index
    %c0_84 = arith.constant 0 : index
    %c0_85 = arith.constant 0 : index
    %113 = vector.load %arg6[%c1_83, %c0_84, %c0_85] : memref<3x1x128xf32, #tpu.memory_space<vmem>>, vector<1x1x128xf32>
    %114 = vector.shape_cast %113 : vector<1x1x128xf32> to vector<1x128xf32>
    %115 = vector.broadcast %114 : vector<1x128xf32> to vector<16x128xf32>
    %116 = arith.addf %112, %115 : vector<16x128xf32>
    %c1_86 = arith.constant 1 : index
    %c0_87 = arith.constant 0 : index
    %c0_88 = arith.constant 0 : index
    %117 = vector.load %arg5[%c1_86, %c0_87, %c0_88] : memref<3x128x128xf32, #tpu.memory_space<vmem>>, vector<1x128x128xf32>
    %118 = vector.shape_cast %117 : vector<1x128x128xf32> to vector<128x128xf32>
    %cst_89 = arith.constant dense<0.000000e+00> : vector<16x128xf32>
    %119 = tpu.matmul %83, %118, %cst_89 {dimension_numbers = #tpu.dot_dimension_numbers<[1], [0], [0], [1], [0, 0, 1, 1], [], []>} : vector<16x128xf32>, vector<128x128xf32>, vector<16x128xf32> -> vector<16x128xf32>
    %120 = arith.addf %116, %119 : vector<16x128xf32>
    %c1_90 = arith.constant 1 : index
    %c0_91 = arith.constant 0 : index
    %c0_92 = arith.constant 0 : index
    %121 = vector.load %arg7[%c1_90, %c0_91, %c0_92] : memref<3x1x128xf32, #tpu.memory_space<vmem>>, vector<1x1x128xf32>
    %122 = vector.shape_cast %121 : vector<1x1x128xf32> to vector<1x128xf32>
    %123 = vector.broadcast %122 : vector<1x128xf32> to vector<16x128xf32>
    %124 = arith.addf %120, %123 : vector<16x128xf32>
    %cst_93 = arith.constant 0.000000e+00 : f32
    %125 = vector.broadcast %cst_93 : f32 to vector<16x128xf32>
    %126 = arith.subf %125, %124 : vector<16x128xf32>
    %127 = math.exp %126 : vector<16x128xf32>
    %cst_94 = arith.constant 1.000000e+00 : f32
    %128 = vector.broadcast %cst_94 : f32 to vector<16x128xf32>
    %129 = arith.addf %128, %127 : vector<16x128xf32>
    %cst_95 = arith.constant 1.000000e+00 : f32
    %130 = vector.broadcast %cst_95 : f32 to vector<16x128xf32>
    %131 = arith.divf %130, %129 : vector<16x128xf32>
    %c2_96 = arith.constant 2 : index
    %c0_97 = arith.constant 0 : index
    %c0_98 = arith.constant 0 : index
    %132 = vector.load %arg4[%c2_96, %c0_97, %c0_98] : memref<3x128x128xf32, #tpu.memory_space<vmem>>, vector<1x128x128xf32>
    %133 = vector.shape_cast %132 : vector<1x128x128xf32> to vector<128x128xf32>
    %cst_99 = arith.constant dense<0.000000e+00> : vector<16x128xf32>
    %134 = tpu.matmul %87, %133, %cst_99 {dimension_numbers = #tpu.dot_dimension_numbers<[1], [0], [0], [1], [0, 0, 1, 1], [], []>} : vector<16x128xf32>, vector<128x128xf32>, vector<16x128xf32> -> vector<16x128xf32>
    %c2_100 = arith.constant 2 : index
    %c0_101 = arith.constant 0 : index
    %c0_102 = arith.constant 0 : index
    %135 = vector.load %arg6[%c2_100, %c0_101, %c0_102] : memref<3x1x128xf32, #tpu.memory_space<vmem>>, vector<1x1x128xf32>
    %136 = vector.shape_cast %135 : vector<1x1x128xf32> to vector<1x128xf32>
    %137 = vector.broadcast %136 : vector<1x128xf32> to vector<16x128xf32>
    %138 = arith.addf %134, %137 : vector<16x128xf32>
    %c2_103 = arith.constant 2 : index
    %c0_104 = arith.constant 0 : index
    %c0_105 = arith.constant 0 : index
    %139 = vector.load %arg5[%c2_103, %c0_104, %c0_105] : memref<3x128x128xf32, #tpu.memory_space<vmem>>, vector<1x128x128xf32>
    %140 = vector.shape_cast %139 : vector<1x128x128xf32> to vector<128x128xf32>
    %cst_106 = arith.constant dense<0.000000e+00> : vector<16x128xf32>
    %141 = tpu.matmul %83, %140, %cst_106 {dimension_numbers = #tpu.dot_dimension_numbers<[1], [0], [0], [1], [0, 0, 1, 1], [], []>} : vector<16x128xf32>, vector<128x128xf32>, vector<16x128xf32> -> vector<16x128xf32>
    %c2_107 = arith.constant 2 : index
    %c0_108 = arith.constant 0 : index
    %c0_109 = arith.constant 0 : index
    %142 = vector.load %arg7[%c2_107, %c0_108, %c0_109] : memref<3x1x128xf32, #tpu.memory_space<vmem>>, vector<1x1x128xf32>
    %143 = vector.shape_cast %142 : vector<1x1x128xf32> to vector<1x128xf32>
    %144 = vector.broadcast %143 : vector<1x128xf32> to vector<16x128xf32>
    %145 = arith.addf %141, %144 : vector<16x128xf32>
    %146 = arith.mulf %109, %145 : vector<16x128xf32>
    %147 = arith.addf %138, %146 : vector<16x128xf32>
    %148 = math.tanh %147 : vector<16x128xf32>
    %cst_110 = arith.constant 1.000000e+00 : f32
    %149 = vector.broadcast %cst_110 : f32 to vector<16x128xf32>
    %150 = arith.subf %149, %131 : vector<16x128xf32>
    %151 = arith.mulf %150, %148 : vector<16x128xf32>
    %152 = arith.mulf %131, %83 : vector<16x128xf32>
    %153 = arith.addf %151, %152 : vector<16x128xf32>
    %c2_111 = arith.constant 2 : index
    %c0_112 = arith.constant 0 : index
    %c0_113 = arith.constant 0 : index
    %154 = vector.load %arg3[%c2_111, %c0_112, %c0_113] : memref<6x128x128xf32, #tpu.memory_space<vmem>>, vector<1x128x128xf32>
    %155 = vector.shape_cast %154 : vector<1x128x128xf32> to vector<128x128xf32>
    %cst_114 = arith.constant dense<0.000000e+00> : vector<16x128xf32>
    %156 = tpu.matmul %153, %155, %cst_114 {dimension_numbers = #tpu.dot_dimension_numbers<[1], [0], [0], [1], [0, 0, 1, 1], [], []>} : vector<16x128xf32>, vector<128x128xf32>, vector<16x128xf32> -> vector<16x128xf32>
    %cst_115 = arith.constant dense<0.000000e+00> : vector<16x128xf32>
    %157 = tpu.matmul %12, %156, %cst_115 {dimension_numbers = #tpu.dot_dimension_numbers<[1], [0], [0], [1], [0, 0, 1, 1], [], []>} : vector<16x16xf32>, vector<16x128xf32>, vector<16x128xf32> -> vector<16x128xf32>
    %c0_116 = arith.constant 0 : index
    %c0_117 = arith.constant 0 : index
    %c0_118 = arith.constant 0 : index
    %158 = vector.load %arg4[%c0_116, %c0_117, %c0_118] : memref<3x128x128xf32, #tpu.memory_space<vmem>>, vector<1x128x128xf32>
    %159 = vector.shape_cast %158 : vector<1x128x128xf32> to vector<128x128xf32>
    %cst_119 = arith.constant dense<0.000000e+00> : vector<16x128xf32>
    %160 = tpu.matmul %157, %159, %cst_119 {dimension_numbers = #tpu.dot_dimension_numbers<[1], [0], [0], [1], [0, 0, 1, 1], [], []>} : vector<16x128xf32>, vector<128x128xf32>, vector<16x128xf32> -> vector<16x128xf32>
    %c0_120 = arith.constant 0 : index
    %c0_121 = arith.constant 0 : index
    %c0_122 = arith.constant 0 : index
    %161 = vector.load %arg6[%c0_120, %c0_121, %c0_122] : memref<3x1x128xf32, #tpu.memory_space<vmem>>, vector<1x1x128xf32>
    %162 = vector.shape_cast %161 : vector<1x1x128xf32> to vector<1x128xf32>
    %163 = vector.broadcast %162 : vector<1x128xf32> to vector<16x128xf32>
    %164 = arith.addf %160, %163 : vector<16x128xf32>
    %c0_123 = arith.constant 0 : index
    %c0_124 = arith.constant 0 : index
    %c0_125 = arith.constant 0 : index
    %165 = vector.load %arg5[%c0_123, %c0_124, %c0_125] : memref<3x128x128xf32, #tpu.memory_space<vmem>>, vector<1x128x128xf32>
    %166 = vector.shape_cast %165 : vector<1x128x128xf32> to vector<128x128xf32>
    %cst_126 = arith.constant dense<0.000000e+00> : vector<16x128xf32>
    %167 = tpu.matmul %153, %166, %cst_126 {dimension_numbers = #tpu.dot_dimension_numbers<[1], [0], [0], [1], [0, 0, 1, 1], [], []>} : vector<16x128xf32>, vector<128x128xf32>, vector<16x128xf32> -> vector<16x128xf32>
    %168 = arith.addf %164, %167 : vector<16x128xf32>
    %c0_127 = arith.constant 0 : index
    %c0_128 = arith.constant 0 : index
    %c0_129 = arith.constant 0 : index
    %169 = vector.load %arg7[%c0_127, %c0_128, %c0_129] : memref<3x1x128xf32, #tpu.memory_space<vmem>>, vector<1x1x128xf32>
    %170 = vector.shape_cast %169 : vector<1x1x128xf32> to vector<1x128xf32>
    %171 = vector.broadcast %170 : vector<1x128xf32> to vector<16x128xf32>
    %172 = arith.addf %168, %171 : vector<16x128xf32>
    %cst_130 = arith.constant 0.000000e+00 : f32
    %173 = vector.broadcast %cst_130 : f32 to vector<16x128xf32>
    %174 = arith.subf %173, %172 : vector<16x128xf32>
    %175 = math.exp %174 : vector<16x128xf32>
    %cst_131 = arith.constant 1.000000e+00 : f32
    %176 = vector.broadcast %cst_131 : f32 to vector<16x128xf32>
    %177 = arith.addf %176, %175 : vector<16x128xf32>
    %cst_132 = arith.constant 1.000000e+00 : f32
    %178 = vector.broadcast %cst_132 : f32 to vector<16x128xf32>
    %179 = arith.divf %178, %177 : vector<16x128xf32>
    %c1_133 = arith.constant 1 : index
    %c0_134 = arith.constant 0 : index
    %c0_135 = arith.constant 0 : index
    %180 = vector.load %arg4[%c1_133, %c0_134, %c0_135] : memref<3x128x128xf32, #tpu.memory_space<vmem>>, vector<1x128x128xf32>
    %181 = vector.shape_cast %180 : vector<1x128x128xf32> to vector<128x128xf32>
    %cst_136 = arith.constant dense<0.000000e+00> : vector<16x128xf32>
    %182 = tpu.matmul %157, %181, %cst_136 {dimension_numbers = #tpu.dot_dimension_numbers<[1], [0], [0], [1], [0, 0, 1, 1], [], []>} : vector<16x128xf32>, vector<128x128xf32>, vector<16x128xf32> -> vector<16x128xf32>
    %c1_137 = arith.constant 1 : index
    %c0_138 = arith.constant 0 : index
    %c0_139 = arith.constant 0 : index
    %183 = vector.load %arg6[%c1_137, %c0_138, %c0_139] : memref<3x1x128xf32, #tpu.memory_space<vmem>>, vector<1x1x128xf32>
    %184 = vector.shape_cast %183 : vector<1x1x128xf32> to vector<1x128xf32>
    %185 = vector.broadcast %184 : vector<1x128xf32> to vector<16x128xf32>
    %186 = arith.addf %182, %185 : vector<16x128xf32>
    %c1_140 = arith.constant 1 : index
    %c0_141 = arith.constant 0 : index
    %c0_142 = arith.constant 0 : index
    %187 = vector.load %arg5[%c1_140, %c0_141, %c0_142] : memref<3x128x128xf32, #tpu.memory_space<vmem>>, vector<1x128x128xf32>
    %188 = vector.shape_cast %187 : vector<1x128x128xf32> to vector<128x128xf32>
    %cst_143 = arith.constant dense<0.000000e+00> : vector<16x128xf32>
    %189 = tpu.matmul %153, %188, %cst_143 {dimension_numbers = #tpu.dot_dimension_numbers<[1], [0], [0], [1], [0, 0, 1, 1], [], []>} : vector<16x128xf32>, vector<128x128xf32>, vector<16x128xf32> -> vector<16x128xf32>
    %190 = arith.addf %186, %189 : vector<16x128xf32>
    %c1_144 = arith.constant 1 : index
    %c0_145 = arith.constant 0 : index
    %c0_146 = arith.constant 0 : index
    %191 = vector.load %arg7[%c1_144, %c0_145, %c0_146] : memref<3x1x128xf32, #tpu.memory_space<vmem>>, vector<1x1x128xf32>
    %192 = vector.shape_cast %191 : vector<1x1x128xf32> to vector<1x128xf32>
    %193 = vector.broadcast %192 : vector<1x128xf32> to vector<16x128xf32>
    %194 = arith.addf %190, %193 : vector<16x128xf32>
    %cst_147 = arith.constant 0.000000e+00 : f32
    %195 = vector.broadcast %cst_147 : f32 to vector<16x128xf32>
    %196 = arith.subf %195, %194 : vector<16x128xf32>
    %197 = math.exp %196 : vector<16x128xf32>
    %cst_148 = arith.constant 1.000000e+00 : f32
    %198 = vector.broadcast %cst_148 : f32 to vector<16x128xf32>
    %199 = arith.addf %198, %197 : vector<16x128xf32>
    %cst_149 = arith.constant 1.000000e+00 : f32
    %200 = vector.broadcast %cst_149 : f32 to vector<16x128xf32>
    %201 = arith.divf %200, %199 : vector<16x128xf32>
    %c2_150 = arith.constant 2 : index
    %c0_151 = arith.constant 0 : index
    %c0_152 = arith.constant 0 : index
    %202 = vector.load %arg4[%c2_150, %c0_151, %c0_152] : memref<3x128x128xf32, #tpu.memory_space<vmem>>, vector<1x128x128xf32>
    %203 = vector.shape_cast %202 : vector<1x128x128xf32> to vector<128x128xf32>
    %cst_153 = arith.constant dense<0.000000e+00> : vector<16x128xf32>
    %204 = tpu.matmul %157, %203, %cst_153 {dimension_numbers = #tpu.dot_dimension_numbers<[1], [0], [0], [1], [0, 0, 1, 1], [], []>} : vector<16x128xf32>, vector<128x128xf32>, vector<16x128xf32> -> vector<16x128xf32>
    %c2_154 = arith.constant 2 : index
    %c0_155 = arith.constant 0 : index
    %c0_156 = arith.constant 0 : index
    %205 = vector.load %arg6[%c2_154, %c0_155, %c0_156] : memref<3x1x128xf32, #tpu.memory_space<vmem>>, vector<1x1x128xf32>
    %206 = vector.shape_cast %205 : vector<1x1x128xf32> to vector<1x128xf32>
    %207 = vector.broadcast %206 : vector<1x128xf32> to vector<16x128xf32>
    %208 = arith.addf %204, %207 : vector<16x128xf32>
    %c2_157 = arith.constant 2 : index
    %c0_158 = arith.constant 0 : index
    %c0_159 = arith.constant 0 : index
    %209 = vector.load %arg5[%c2_157, %c0_158, %c0_159] : memref<3x128x128xf32, #tpu.memory_space<vmem>>, vector<1x128x128xf32>
    %210 = vector.shape_cast %209 : vector<1x128x128xf32> to vector<128x128xf32>
    %cst_160 = arith.constant dense<0.000000e+00> : vector<16x128xf32>
    %211 = tpu.matmul %153, %210, %cst_160 {dimension_numbers = #tpu.dot_dimension_numbers<[1], [0], [0], [1], [0, 0, 1, 1], [], []>} : vector<16x128xf32>, vector<128x128xf32>, vector<16x128xf32> -> vector<16x128xf32>
    %c2_161 = arith.constant 2 : index
    %c0_162 = arith.constant 0 : index
    %c0_163 = arith.constant 0 : index
    %212 = vector.load %arg7[%c2_161, %c0_162, %c0_163] : memref<3x1x128xf32, #tpu.memory_space<vmem>>, vector<1x1x128xf32>
    %213 = vector.shape_cast %212 : vector<1x1x128xf32> to vector<1x128xf32>
    %214 = vector.broadcast %213 : vector<1x128xf32> to vector<16x128xf32>
    %215 = arith.addf %211, %214 : vector<16x128xf32>
    %216 = arith.mulf %179, %215 : vector<16x128xf32>
    %217 = arith.addf %208, %216 : vector<16x128xf32>
    %218 = math.tanh %217 : vector<16x128xf32>
    %cst_164 = arith.constant 1.000000e+00 : f32
    %219 = vector.broadcast %cst_164 : f32 to vector<16x128xf32>
    %220 = arith.subf %219, %201 : vector<16x128xf32>
    %221 = arith.mulf %220, %218 : vector<16x128xf32>
    %222 = arith.mulf %201, %153 : vector<16x128xf32>
    %223 = arith.addf %221, %222 : vector<16x128xf32>
    %c3 = arith.constant 3 : index
    %c0_165 = arith.constant 0 : index
    %c0_166 = arith.constant 0 : index
    %224 = vector.load %arg3[%c3, %c0_165, %c0_166] : memref<6x128x128xf32, #tpu.memory_space<vmem>>, vector<1x128x128xf32>
    %225 = vector.shape_cast %224 : vector<1x128x128xf32> to vector<128x128xf32>
    %cst_167 = arith.constant dense<0.000000e+00> : vector<16x128xf32>
    %226 = tpu.matmul %223, %225, %cst_167 {dimension_numbers = #tpu.dot_dimension_numbers<[1], [0], [0], [1], [0, 0, 1, 1], [], []>} : vector<16x128xf32>, vector<128x128xf32>, vector<16x128xf32> -> vector<16x128xf32>
    %cst_168 = arith.constant dense<0.000000e+00> : vector<16x128xf32>
    %227 = tpu.matmul %12, %226, %cst_168 {dimension_numbers = #tpu.dot_dimension_numbers<[1], [0], [0], [1], [0, 0, 1, 1], [], []>} : vector<16x16xf32>, vector<16x128xf32>, vector<16x128xf32> -> vector<16x128xf32>
    %c0_169 = arith.constant 0 : index
    %c0_170 = arith.constant 0 : index
    %c0_171 = arith.constant 0 : index
    %228 = vector.load %arg4[%c0_169, %c0_170, %c0_171] : memref<3x128x128xf32, #tpu.memory_space<vmem>>, vector<1x128x128xf32>
    %229 = vector.shape_cast %228 : vector<1x128x128xf32> to vector<128x128xf32>
    %cst_172 = arith.constant dense<0.000000e+00> : vector<16x128xf32>
    %230 = tpu.matmul %227, %229, %cst_172 {dimension_numbers = #tpu.dot_dimension_numbers<[1], [0], [0], [1], [0, 0, 1, 1], [], []>} : vector<16x128xf32>, vector<128x128xf32>, vector<16x128xf32> -> vector<16x128xf32>
    %c0_173 = arith.constant 0 : index
    %c0_174 = arith.constant 0 : index
    %c0_175 = arith.constant 0 : index
    %231 = vector.load %arg6[%c0_173, %c0_174, %c0_175] : memref<3x1x128xf32, #tpu.memory_space<vmem>>, vector<1x1x128xf32>
    %232 = vector.shape_cast %231 : vector<1x1x128xf32> to vector<1x128xf32>
    %233 = vector.broadcast %232 : vector<1x128xf32> to vector<16x128xf32>
    %234 = arith.addf %230, %233 : vector<16x128xf32>
    %c0_176 = arith.constant 0 : index
    %c0_177 = arith.constant 0 : index
    %c0_178 = arith.constant 0 : index
    %235 = vector.load %arg5[%c0_176, %c0_177, %c0_178] : memref<3x128x128xf32, #tpu.memory_space<vmem>>, vector<1x128x128xf32>
    %236 = vector.shape_cast %235 : vector<1x128x128xf32> to vector<128x128xf32>
    %cst_179 = arith.constant dense<0.000000e+00> : vector<16x128xf32>
    %237 = tpu.matmul %223, %236, %cst_179 {dimension_numbers = #tpu.dot_dimension_numbers<[1], [0], [0], [1], [0, 0, 1, 1], [], []>} : vector<16x128xf32>, vector<128x128xf32>, vector<16x128xf32> -> vector<16x128xf32>
    %238 = arith.addf %234, %237 : vector<16x128xf32>
    %c0_180 = arith.constant 0 : index
    %c0_181 = arith.constant 0 : index
    %c0_182 = arith.constant 0 : index
    %239 = vector.load %arg7[%c0_180, %c0_181, %c0_182] : memref<3x1x128xf32, #tpu.memory_space<vmem>>, vector<1x1x128xf32>
    %240 = vector.shape_cast %239 : vector<1x1x128xf32> to vector<1x128xf32>
    %241 = vector.broadcast %240 : vector<1x128xf32> to vector<16x128xf32>
    %242 = arith.addf %238, %241 : vector<16x128xf32>
    %cst_183 = arith.constant 0.000000e+00 : f32
    %243 = vector.broadcast %cst_183 : f32 to vector<16x128xf32>
    %244 = arith.subf %243, %242 : vector<16x128xf32>
    %245 = math.exp %244 : vector<16x128xf32>
    %cst_184 = arith.constant 1.000000e+00 : f32
    %246 = vector.broadcast %cst_184 : f32 to vector<16x128xf32>
    %247 = arith.addf %246, %245 : vector<16x128xf32>
    %cst_185 = arith.constant 1.000000e+00 : f32
    %248 = vector.broadcast %cst_185 : f32 to vector<16x128xf32>
    %249 = arith.divf %248, %247 : vector<16x128xf32>
    %c1_186 = arith.constant 1 : index
    %c0_187 = arith.constant 0 : index
    %c0_188 = arith.constant 0 : index
    %250 = vector.load %arg4[%c1_186, %c0_187, %c0_188] : memref<3x128x128xf32, #tpu.memory_space<vmem>>, vector<1x128x128xf32>
    %251 = vector.shape_cast %250 : vector<1x128x128xf32> to vector<128x128xf32>
    %cst_189 = arith.constant dense<0.000000e+00> : vector<16x128xf32>
    %252 = tpu.matmul %227, %251, %cst_189 {dimension_numbers = #tpu.dot_dimension_numbers<[1], [0], [0], [1], [0, 0, 1, 1], [], []>} : vector<16x128xf32>, vector<128x128xf32>, vector<16x128xf32> -> vector<16x128xf32>
    %c1_190 = arith.constant 1 : index
    %c0_191 = arith.constant 0 : index
    %c0_192 = arith.constant 0 : index
    %253 = vector.load %arg6[%c1_190, %c0_191, %c0_192] : memref<3x1x128xf32, #tpu.memory_space<vmem>>, vector<1x1x128xf32>
    %254 = vector.shape_cast %253 : vector<1x1x128xf32> to vector<1x128xf32>
    %255 = vector.broadcast %254 : vector<1x128xf32> to vector<16x128xf32>
    %256 = arith.addf %252, %255 : vector<16x128xf32>
    %c1_193 = arith.constant 1 : index
    %c0_194 = arith.constant 0 : index
    %c0_195 = arith.constant 0 : index
    %257 = vector.load %arg5[%c1_193, %c0_194, %c0_195] : memref<3x128x128xf32, #tpu.memory_space<vmem>>, vector<1x128x128xf32>
    %258 = vector.shape_cast %257 : vector<1x128x128xf32> to vector<128x128xf32>
    %cst_196 = arith.constant dense<0.000000e+00> : vector<16x128xf32>
    %259 = tpu.matmul %223, %258, %cst_196 {dimension_numbers = #tpu.dot_dimension_numbers<[1], [0], [0], [1], [0, 0, 1, 1], [], []>} : vector<16x128xf32>, vector<128x128xf32>, vector<16x128xf32> -> vector<16x128xf32>
    %260 = arith.addf %256, %259 : vector<16x128xf32>
    %c1_197 = arith.constant 1 : index
    %c0_198 = arith.constant 0 : index
    %c0_199 = arith.constant 0 : index
    %261 = vector.load %arg7[%c1_197, %c0_198, %c0_199] : memref<3x1x128xf32, #tpu.memory_space<vmem>>, vector<1x1x128xf32>
    %262 = vector.shape_cast %261 : vector<1x1x128xf32> to vector<1x128xf32>
    %263 = vector.broadcast %262 : vector<1x128xf32> to vector<16x128xf32>
    %264 = arith.addf %260, %263 : vector<16x128xf32>
    %cst_200 = arith.constant 0.000000e+00 : f32
    %265 = vector.broadcast %cst_200 : f32 to vector<16x128xf32>
    %266 = arith.subf %265, %264 : vector<16x128xf32>
    %267 = math.exp %266 : vector<16x128xf32>
    %cst_201 = arith.constant 1.000000e+00 : f32
    %268 = vector.broadcast %cst_201 : f32 to vector<16x128xf32>
    %269 = arith.addf %268, %267 : vector<16x128xf32>
    %cst_202 = arith.constant 1.000000e+00 : f32
    %270 = vector.broadcast %cst_202 : f32 to vector<16x128xf32>
    %271 = arith.divf %270, %269 : vector<16x128xf32>
    %c2_203 = arith.constant 2 : index
    %c0_204 = arith.constant 0 : index
    %c0_205 = arith.constant 0 : index
    %272 = vector.load %arg4[%c2_203, %c0_204, %c0_205] : memref<3x128x128xf32, #tpu.memory_space<vmem>>, vector<1x128x128xf32>
    %273 = vector.shape_cast %272 : vector<1x128x128xf32> to vector<128x128xf32>
    %cst_206 = arith.constant dense<0.000000e+00> : vector<16x128xf32>
    %274 = tpu.matmul %227, %273, %cst_206 {dimension_numbers = #tpu.dot_dimension_numbers<[1], [0], [0], [1], [0, 0, 1, 1], [], []>} : vector<16x128xf32>, vector<128x128xf32>, vector<16x128xf32> -> vector<16x128xf32>
    %c2_207 = arith.constant 2 : index
    %c0_208 = arith.constant 0 : index
    %c0_209 = arith.constant 0 : index
    %275 = vector.load %arg6[%c2_207, %c0_208, %c0_209] : memref<3x1x128xf32, #tpu.memory_space<vmem>>, vector<1x1x128xf32>
    %276 = vector.shape_cast %275 : vector<1x1x128xf32> to vector<1x128xf32>
    %277 = vector.broadcast %276 : vector<1x128xf32> to vector<16x128xf32>
    %278 = arith.addf %274, %277 : vector<16x128xf32>
    %c2_210 = arith.constant 2 : index
    %c0_211 = arith.constant 0 : index
    %c0_212 = arith.constant 0 : index
    %279 = vector.load %arg5[%c2_210, %c0_211, %c0_212] : memref<3x128x128xf32, #tpu.memory_space<vmem>>, vector<1x128x128xf32>
    %280 = vector.shape_cast %279 : vector<1x128x128xf32> to vector<128x128xf32>
    %cst_213 = arith.constant dense<0.000000e+00> : vector<16x128xf32>
    %281 = tpu.matmul %223, %280, %cst_213 {dimension_numbers = #tpu.dot_dimension_numbers<[1], [0], [0], [1], [0, 0, 1, 1], [], []>} : vector<16x128xf32>, vector<128x128xf32>, vector<16x128xf32> -> vector<16x128xf32>
    %c2_214 = arith.constant 2 : index
    %c0_215 = arith.constant 0 : index
    %c0_216 = arith.constant 0 : index
    %282 = vector.load %arg7[%c2_214, %c0_215, %c0_216] : memref<3x1x128xf32, #tpu.memory_space<vmem>>, vector<1x1x128xf32>
    %283 = vector.shape_cast %282 : vector<1x1x128xf32> to vector<1x128xf32>
    %284 = vector.broadcast %283 : vector<1x128xf32> to vector<16x128xf32>
    %285 = arith.addf %281, %284 : vector<16x128xf32>
    %286 = arith.mulf %249, %285 : vector<16x128xf32>
    %287 = arith.addf %278, %286 : vector<16x128xf32>
    %288 = math.tanh %287 : vector<16x128xf32>
    %cst_217 = arith.constant 1.000000e+00 : f32
    %289 = vector.broadcast %cst_217 : f32 to vector<16x128xf32>
    %290 = arith.subf %289, %271 : vector<16x128xf32>
    %291 = arith.mulf %290, %288 : vector<16x128xf32>
    %292 = arith.mulf %271, %223 : vector<16x128xf32>
    %293 = arith.addf %291, %292 : vector<16x128xf32>
    %c4 = arith.constant 4 : index
    %c0_218 = arith.constant 0 : index
    %c0_219 = arith.constant 0 : index
    %294 = vector.load %arg3[%c4, %c0_218, %c0_219] : memref<6x128x128xf32, #tpu.memory_space<vmem>>, vector<1x128x128xf32>
    %295 = vector.shape_cast %294 : vector<1x128x128xf32> to vector<128x128xf32>
    %cst_220 = arith.constant dense<0.000000e+00> : vector<16x128xf32>
    %296 = tpu.matmul %293, %295, %cst_220 {dimension_numbers = #tpu.dot_dimension_numbers<[1], [0], [0], [1], [0, 0, 1, 1], [], []>} : vector<16x128xf32>, vector<128x128xf32>, vector<16x128xf32> -> vector<16x128xf32>
    %cst_221 = arith.constant dense<0.000000e+00> : vector<16x128xf32>
    %297 = tpu.matmul %12, %296, %cst_221 {dimension_numbers = #tpu.dot_dimension_numbers<[1], [0], [0], [1], [0, 0, 1, 1], [], []>} : vector<16x16xf32>, vector<16x128xf32>, vector<16x128xf32> -> vector<16x128xf32>
    %c0_222 = arith.constant 0 : index
    %c0_223 = arith.constant 0 : index
    %c0_224 = arith.constant 0 : index
    %298 = vector.load %arg4[%c0_222, %c0_223, %c0_224] : memref<3x128x128xf32, #tpu.memory_space<vmem>>, vector<1x128x128xf32>
    %299 = vector.shape_cast %298 : vector<1x128x128xf32> to vector<128x128xf32>
    %cst_225 = arith.constant dense<0.000000e+00> : vector<16x128xf32>
    %300 = tpu.matmul %297, %299, %cst_225 {dimension_numbers = #tpu.dot_dimension_numbers<[1], [0], [0], [1], [0, 0, 1, 1], [], []>} : vector<16x128xf32>, vector<128x128xf32>, vector<16x128xf32> -> vector<16x128xf32>
    %c0_226 = arith.constant 0 : index
    %c0_227 = arith.constant 0 : index
    %c0_228 = arith.constant 0 : index
    %301 = vector.load %arg6[%c0_226, %c0_227, %c0_228] : memref<3x1x128xf32, #tpu.memory_space<vmem>>, vector<1x1x128xf32>
    %302 = vector.shape_cast %301 : vector<1x1x128xf32> to vector<1x128xf32>
    %303 = vector.broadcast %302 : vector<1x128xf32> to vector<16x128xf32>
    %304 = arith.addf %300, %303 : vector<16x128xf32>
    %c0_229 = arith.constant 0 : index
    %c0_230 = arith.constant 0 : index
    %c0_231 = arith.constant 0 : index
    %305 = vector.load %arg5[%c0_229, %c0_230, %c0_231] : memref<3x128x128xf32, #tpu.memory_space<vmem>>, vector<1x128x128xf32>
    %306 = vector.shape_cast %305 : vector<1x128x128xf32> to vector<128x128xf32>
    %cst_232 = arith.constant dense<0.000000e+00> : vector<16x128xf32>
    %307 = tpu.matmul %293, %306, %cst_232 {dimension_numbers = #tpu.dot_dimension_numbers<[1], [0], [0], [1], [0, 0, 1, 1], [], []>} : vector<16x128xf32>, vector<128x128xf32>, vector<16x128xf32> -> vector<16x128xf32>
    %308 = arith.addf %304, %307 : vector<16x128xf32>
    %c0_233 = arith.constant 0 : index
    %c0_234 = arith.constant 0 : index
    %c0_235 = arith.constant 0 : index
    %309 = vector.load %arg7[%c0_233, %c0_234, %c0_235] : memref<3x1x128xf32, #tpu.memory_space<vmem>>, vector<1x1x128xf32>
    %310 = vector.shape_cast %309 : vector<1x1x128xf32> to vector<1x128xf32>
    %311 = vector.broadcast %310 : vector<1x128xf32> to vector<16x128xf32>
    %312 = arith.addf %308, %311 : vector<16x128xf32>
    %cst_236 = arith.constant 0.000000e+00 : f32
    %313 = vector.broadcast %cst_236 : f32 to vector<16x128xf32>
    %314 = arith.subf %313, %312 : vector<16x128xf32>
    %315 = math.exp %314 : vector<16x128xf32>
    %cst_237 = arith.constant 1.000000e+00 : f32
    %316 = vector.broadcast %cst_237 : f32 to vector<16x128xf32>
    %317 = arith.addf %316, %315 : vector<16x128xf32>
    %cst_238 = arith.constant 1.000000e+00 : f32
    %318 = vector.broadcast %cst_238 : f32 to vector<16x128xf32>
    %319 = arith.divf %318, %317 : vector<16x128xf32>
    %c1_239 = arith.constant 1 : index
    %c0_240 = arith.constant 0 : index
    %c0_241 = arith.constant 0 : index
    %320 = vector.load %arg4[%c1_239, %c0_240, %c0_241] : memref<3x128x128xf32, #tpu.memory_space<vmem>>, vector<1x128x128xf32>
    %321 = vector.shape_cast %320 : vector<1x128x128xf32> to vector<128x128xf32>
    %cst_242 = arith.constant dense<0.000000e+00> : vector<16x128xf32>
    %322 = tpu.matmul %297, %321, %cst_242 {dimension_numbers = #tpu.dot_dimension_numbers<[1], [0], [0], [1], [0, 0, 1, 1], [], []>} : vector<16x128xf32>, vector<128x128xf32>, vector<16x128xf32> -> vector<16x128xf32>
    %c1_243 = arith.constant 1 : index
    %c0_244 = arith.constant 0 : index
    %c0_245 = arith.constant 0 : index
    %323 = vector.load %arg6[%c1_243, %c0_244, %c0_245] : memref<3x1x128xf32, #tpu.memory_space<vmem>>, vector<1x1x128xf32>
    %324 = vector.shape_cast %323 : vector<1x1x128xf32> to vector<1x128xf32>
    %325 = vector.broadcast %324 : vector<1x128xf32> to vector<16x128xf32>
    %326 = arith.addf %322, %325 : vector<16x128xf32>
    %c1_246 = arith.constant 1 : index
    %c0_247 = arith.constant 0 : index
    %c0_248 = arith.constant 0 : index
    %327 = vector.load %arg5[%c1_246, %c0_247, %c0_248] : memref<3x128x128xf32, #tpu.memory_space<vmem>>, vector<1x128x128xf32>
    %328 = vector.shape_cast %327 : vector<1x128x128xf32> to vector<128x128xf32>
    %cst_249 = arith.constant dense<0.000000e+00> : vector<16x128xf32>
    %329 = tpu.matmul %293, %328, %cst_249 {dimension_numbers = #tpu.dot_dimension_numbers<[1], [0], [0], [1], [0, 0, 1, 1], [], []>} : vector<16x128xf32>, vector<128x128xf32>, vector<16x128xf32> -> vector<16x128xf32>
    %330 = arith.addf %326, %329 : vector<16x128xf32>
    %c1_250 = arith.constant 1 : index
    %c0_251 = arith.constant 0 : index
    %c0_252 = arith.constant 0 : index
    %331 = vector.load %arg7[%c1_250, %c0_251, %c0_252] : memref<3x1x128xf32, #tpu.memory_space<vmem>>, vector<1x1x128xf32>
    %332 = vector.shape_cast %331 : vector<1x1x128xf32> to vector<1x128xf32>
    %333 = vector.broadcast %332 : vector<1x128xf32> to vector<16x128xf32>
    %334 = arith.addf %330, %333 : vector<16x128xf32>
    %cst_253 = arith.constant 0.000000e+00 : f32
    %335 = vector.broadcast %cst_253 : f32 to vector<16x128xf32>
    %336 = arith.subf %335, %334 : vector<16x128xf32>
    %337 = math.exp %336 : vector<16x128xf32>
    %cst_254 = arith.constant 1.000000e+00 : f32
    %338 = vector.broadcast %cst_254 : f32 to vector<16x128xf32>
    %339 = arith.addf %338, %337 : vector<16x128xf32>
    %cst_255 = arith.constant 1.000000e+00 : f32
    %340 = vector.broadcast %cst_255 : f32 to vector<16x128xf32>
    %341 = arith.divf %340, %339 : vector<16x128xf32>
    %c2_256 = arith.constant 2 : index
    %c0_257 = arith.constant 0 : index
    %c0_258 = arith.constant 0 : index
    %342 = vector.load %arg4[%c2_256, %c0_257, %c0_258] : memref<3x128x128xf32, #tpu.memory_space<vmem>>, vector<1x128x128xf32>
    %343 = vector.shape_cast %342 : vector<1x128x128xf32> to vector<128x128xf32>
    %cst_259 = arith.constant dense<0.000000e+00> : vector<16x128xf32>
    %344 = tpu.matmul %297, %343, %cst_259 {dimension_numbers = #tpu.dot_dimension_numbers<[1], [0], [0], [1], [0, 0, 1, 1], [], []>} : vector<16x128xf32>, vector<128x128xf32>, vector<16x128xf32> -> vector<16x128xf32>
    %c2_260 = arith.constant 2 : index
    %c0_261 = arith.constant 0 : index
    %c0_262 = arith.constant 0 : index
    %345 = vector.load %arg6[%c2_260, %c0_261, %c0_262] : memref<3x1x128xf32, #tpu.memory_space<vmem>>, vector<1x1x128xf32>
    %346 = vector.shape_cast %345 : vector<1x1x128xf32> to vector<1x128xf32>
    %347 = vector.broadcast %346 : vector<1x128xf32> to vector<16x128xf32>
    %348 = arith.addf %344, %347 : vector<16x128xf32>
    %c2_263 = arith.constant 2 : index
    %c0_264 = arith.constant 0 : index
    %c0_265 = arith.constant 0 : index
    %349 = vector.load %arg5[%c2_263, %c0_264, %c0_265] : memref<3x128x128xf32, #tpu.memory_space<vmem>>, vector<1x128x128xf32>
    %350 = vector.shape_cast %349 : vector<1x128x128xf32> to vector<128x128xf32>
    %cst_266 = arith.constant dense<0.000000e+00> : vector<16x128xf32>
    %351 = tpu.matmul %293, %350, %cst_266 {dimension_numbers = #tpu.dot_dimension_numbers<[1], [0], [0], [1], [0, 0, 1, 1], [], []>} : vector<16x128xf32>, vector<128x128xf32>, vector<16x128xf32> -> vector<16x128xf32>
    %c2_267 = arith.constant 2 : index
    %c0_268 = arith.constant 0 : index
    %c0_269 = arith.constant 0 : index
    %352 = vector.load %arg7[%c2_267, %c0_268, %c0_269] : memref<3x1x128xf32, #tpu.memory_space<vmem>>, vector<1x1x128xf32>
    %353 = vector.shape_cast %352 : vector<1x1x128xf32> to vector<1x128xf32>
    %354 = vector.broadcast %353 : vector<1x128xf32> to vector<16x128xf32>
    %355 = arith.addf %351, %354 : vector<16x128xf32>
    %356 = arith.mulf %319, %355 : vector<16x128xf32>
    %357 = arith.addf %348, %356 : vector<16x128xf32>
    %358 = math.tanh %357 : vector<16x128xf32>
    %cst_270 = arith.constant 1.000000e+00 : f32
    %359 = vector.broadcast %cst_270 : f32 to vector<16x128xf32>
    %360 = arith.subf %359, %341 : vector<16x128xf32>
    %361 = arith.mulf %360, %358 : vector<16x128xf32>
    %362 = arith.mulf %341, %293 : vector<16x128xf32>
    %363 = arith.addf %361, %362 : vector<16x128xf32>
    %c5 = arith.constant 5 : index
    %c0_271 = arith.constant 0 : index
    %c0_272 = arith.constant 0 : index
    %364 = vector.load %arg3[%c5, %c0_271, %c0_272] : memref<6x128x128xf32, #tpu.memory_space<vmem>>, vector<1x128x128xf32>
    %365 = vector.shape_cast %364 : vector<1x128x128xf32> to vector<128x128xf32>
    %cst_273 = arith.constant dense<0.000000e+00> : vector<16x128xf32>
    %366 = tpu.matmul %363, %365, %cst_273 {dimension_numbers = #tpu.dot_dimension_numbers<[1], [0], [0], [1], [0, 0, 1, 1], [], []>} : vector<16x128xf32>, vector<128x128xf32>, vector<16x128xf32> -> vector<16x128xf32>
    %cst_274 = arith.constant dense<0.000000e+00> : vector<16x128xf32>
    %367 = tpu.matmul %12, %366, %cst_274 {dimension_numbers = #tpu.dot_dimension_numbers<[1], [0], [0], [1], [0, 0, 1, 1], [], []>} : vector<16x16xf32>, vector<16x128xf32>, vector<16x128xf32> -> vector<16x128xf32>
    %c0_275 = arith.constant 0 : index
    %c0_276 = arith.constant 0 : index
    %c0_277 = arith.constant 0 : index
    %368 = vector.load %arg4[%c0_275, %c0_276, %c0_277] : memref<3x128x128xf32, #tpu.memory_space<vmem>>, vector<1x128x128xf32>
    %369 = vector.shape_cast %368 : vector<1x128x128xf32> to vector<128x128xf32>
    %cst_278 = arith.constant dense<0.000000e+00> : vector<16x128xf32>
    %370 = tpu.matmul %367, %369, %cst_278 {dimension_numbers = #tpu.dot_dimension_numbers<[1], [0], [0], [1], [0, 0, 1, 1], [], []>} : vector<16x128xf32>, vector<128x128xf32>, vector<16x128xf32> -> vector<16x128xf32>
    %c0_279 = arith.constant 0 : index
    %c0_280 = arith.constant 0 : index
    %c0_281 = arith.constant 0 : index
    %371 = vector.load %arg6[%c0_279, %c0_280, %c0_281] : memref<3x1x128xf32, #tpu.memory_space<vmem>>, vector<1x1x128xf32>
    %372 = vector.shape_cast %371 : vector<1x1x128xf32> to vector<1x128xf32>
    %373 = vector.broadcast %372 : vector<1x128xf32> to vector<16x128xf32>
    %374 = arith.addf %370, %373 : vector<16x128xf32>
    %c0_282 = arith.constant 0 : index
    %c0_283 = arith.constant 0 : index
    %c0_284 = arith.constant 0 : index
    %375 = vector.load %arg5[%c0_282, %c0_283, %c0_284] : memref<3x128x128xf32, #tpu.memory_space<vmem>>, vector<1x128x128xf32>
    %376 = vector.shape_cast %375 : vector<1x128x128xf32> to vector<128x128xf32>
    %cst_285 = arith.constant dense<0.000000e+00> : vector<16x128xf32>
    %377 = tpu.matmul %363, %376, %cst_285 {dimension_numbers = #tpu.dot_dimension_numbers<[1], [0], [0], [1], [0, 0, 1, 1], [], []>} : vector<16x128xf32>, vector<128x128xf32>, vector<16x128xf32> -> vector<16x128xf32>
    %378 = arith.addf %374, %377 : vector<16x128xf32>
    %c0_286 = arith.constant 0 : index
    %c0_287 = arith.constant 0 : index
    %c0_288 = arith.constant 0 : index
    %379 = vector.load %arg7[%c0_286, %c0_287, %c0_288] : memref<3x1x128xf32, #tpu.memory_space<vmem>>, vector<1x1x128xf32>
    %380 = vector.shape_cast %379 : vector<1x1x128xf32> to vector<1x128xf32>
    %381 = vector.broadcast %380 : vector<1x128xf32> to vector<16x128xf32>
    %382 = arith.addf %378, %381 : vector<16x128xf32>
    %cst_289 = arith.constant 0.000000e+00 : f32
    %383 = vector.broadcast %cst_289 : f32 to vector<16x128xf32>
    %384 = arith.subf %383, %382 : vector<16x128xf32>
    %385 = math.exp %384 : vector<16x128xf32>
    %cst_290 = arith.constant 1.000000e+00 : f32
    %386 = vector.broadcast %cst_290 : f32 to vector<16x128xf32>
    %387 = arith.addf %386, %385 : vector<16x128xf32>
    %cst_291 = arith.constant 1.000000e+00 : f32
    %388 = vector.broadcast %cst_291 : f32 to vector<16x128xf32>
    %389 = arith.divf %388, %387 : vector<16x128xf32>
    %c1_292 = arith.constant 1 : index
    %c0_293 = arith.constant 0 : index
    %c0_294 = arith.constant 0 : index
    %390 = vector.load %arg4[%c1_292, %c0_293, %c0_294] : memref<3x128x128xf32, #tpu.memory_space<vmem>>, vector<1x128x128xf32>
    %391 = vector.shape_cast %390 : vector<1x128x128xf32> to vector<128x128xf32>
    %cst_295 = arith.constant dense<0.000000e+00> : vector<16x128xf32>
    %392 = tpu.matmul %367, %391, %cst_295 {dimension_numbers = #tpu.dot_dimension_numbers<[1], [0], [0], [1], [0, 0, 1, 1], [], []>} : vector<16x128xf32>, vector<128x128xf32>, vector<16x128xf32> -> vector<16x128xf32>
    %c1_296 = arith.constant 1 : index
    %c0_297 = arith.constant 0 : index
    %c0_298 = arith.constant 0 : index
    %393 = vector.load %arg6[%c1_296, %c0_297, %c0_298] : memref<3x1x128xf32, #tpu.memory_space<vmem>>, vector<1x1x128xf32>
    %394 = vector.shape_cast %393 : vector<1x1x128xf32> to vector<1x128xf32>
    %395 = vector.broadcast %394 : vector<1x128xf32> to vector<16x128xf32>
    %396 = arith.addf %392, %395 : vector<16x128xf32>
    %c1_299 = arith.constant 1 : index
    %c0_300 = arith.constant 0 : index
    %c0_301 = arith.constant 0 : index
    %397 = vector.load %arg5[%c1_299, %c0_300, %c0_301] : memref<3x128x128xf32, #tpu.memory_space<vmem>>, vector<1x128x128xf32>
    %398 = vector.shape_cast %397 : vector<1x128x128xf32> to vector<128x128xf32>
    %cst_302 = arith.constant dense<0.000000e+00> : vector<16x128xf32>
    %399 = tpu.matmul %363, %398, %cst_302 {dimension_numbers = #tpu.dot_dimension_numbers<[1], [0], [0], [1], [0, 0, 1, 1], [], []>} : vector<16x128xf32>, vector<128x128xf32>, vector<16x128xf32> -> vector<16x128xf32>
    %400 = arith.addf %396, %399 : vector<16x128xf32>
    %c1_303 = arith.constant 1 : index
    %c0_304 = arith.constant 0 : index
    %c0_305 = arith.constant 0 : index
    %401 = vector.load %arg7[%c1_303, %c0_304, %c0_305] : memref<3x1x128xf32, #tpu.memory_space<vmem>>, vector<1x1x128xf32>
    %402 = vector.shape_cast %401 : vector<1x1x128xf32> to vector<1x128xf32>
    %403 = vector.broadcast %402 : vector<1x128xf32> to vector<16x128xf32>
    %404 = arith.addf %400, %403 : vector<16x128xf32>
    %cst_306 = arith.constant 0.000000e+00 : f32
    %405 = vector.broadcast %cst_306 : f32 to vector<16x128xf32>
    %406 = arith.subf %405, %404 : vector<16x128xf32>
    %407 = math.exp %406 : vector<16x128xf32>
    %cst_307 = arith.constant 1.000000e+00 : f32
    %408 = vector.broadcast %cst_307 : f32 to vector<16x128xf32>
    %409 = arith.addf %408, %407 : vector<16x128xf32>
    %cst_308 = arith.constant 1.000000e+00 : f32
    %410 = vector.broadcast %cst_308 : f32 to vector<16x128xf32>
    %411 = arith.divf %410, %409 : vector<16x128xf32>
    %c2_309 = arith.constant 2 : index
    %c0_310 = arith.constant 0 : index
    %c0_311 = arith.constant 0 : index
    %412 = vector.load %arg4[%c2_309, %c0_310, %c0_311] : memref<3x128x128xf32, #tpu.memory_space<vmem>>, vector<1x128x128xf32>
    %413 = vector.shape_cast %412 : vector<1x128x128xf32> to vector<128x128xf32>
    %cst_312 = arith.constant dense<0.000000e+00> : vector<16x128xf32>
    %414 = tpu.matmul %367, %413, %cst_312 {dimension_numbers = #tpu.dot_dimension_numbers<[1], [0], [0], [1], [0, 0, 1, 1], [], []>} : vector<16x128xf32>, vector<128x128xf32>, vector<16x128xf32> -> vector<16x128xf32>
    %c2_313 = arith.constant 2 : index
    %c0_314 = arith.constant 0 : index
    %c0_315 = arith.constant 0 : index
    %415 = vector.load %arg6[%c2_313, %c0_314, %c0_315] : memref<3x1x128xf32, #tpu.memory_space<vmem>>, vector<1x1x128xf32>
    %416 = vector.shape_cast %415 : vector<1x1x128xf32> to vector<1x128xf32>
    %417 = vector.broadcast %416 : vector<1x128xf32> to vector<16x128xf32>
    %418 = arith.addf %414, %417 : vector<16x128xf32>
    %c2_316 = arith.constant 2 : index
    %c0_317 = arith.constant 0 : index
    %c0_318 = arith.constant 0 : index
    %419 = vector.load %arg5[%c2_316, %c0_317, %c0_318] : memref<3x128x128xf32, #tpu.memory_space<vmem>>, vector<1x128x128xf32>
    %420 = vector.shape_cast %419 : vector<1x128x128xf32> to vector<128x128xf32>
    %cst_319 = arith.constant dense<0.000000e+00> : vector<16x128xf32>
    %421 = tpu.matmul %363, %420, %cst_319 {dimension_numbers = #tpu.dot_dimension_numbers<[1], [0], [0], [1], [0, 0, 1, 1], [], []>} : vector<16x128xf32>, vector<128x128xf32>, vector<16x128xf32> -> vector<16x128xf32>
    %c2_320 = arith.constant 2 : index
    %c0_321 = arith.constant 0 : index
    %c0_322 = arith.constant 0 : index
    %422 = vector.load %arg7[%c2_320, %c0_321, %c0_322] : memref<3x1x128xf32, #tpu.memory_space<vmem>>, vector<1x1x128xf32>
    %423 = vector.shape_cast %422 : vector<1x1x128xf32> to vector<1x128xf32>
    %424 = vector.broadcast %423 : vector<1x128xf32> to vector<16x128xf32>
    %425 = arith.addf %421, %424 : vector<16x128xf32>
    %426 = arith.mulf %389, %425 : vector<16x128xf32>
    %427 = arith.addf %418, %426 : vector<16x128xf32>
    %428 = math.tanh %427 : vector<16x128xf32>
    %cst_323 = arith.constant 1.000000e+00 : f32
    %429 = vector.broadcast %cst_323 : f32 to vector<16x128xf32>
    %430 = arith.subf %429, %411 : vector<16x128xf32>
    %431 = arith.mulf %430, %428 : vector<16x128xf32>
    %432 = arith.mulf %411, %363 : vector<16x128xf32>
    %433 = arith.addf %431, %432 : vector<16x128xf32>
    %cst_324 = arith.constant 0.000000e+00 : f32
    %434 = vector.broadcast %cst_324 : f32 to vector<16x128xf32>
    %435 = arith.maximumf %433, %434 : vector<16x128xf32>
    %cst_325 = arith.constant dense<0xFF800000> : vector<128xf32>
    %436 = vector.multi_reduction <maximumf>, %435, %cst_325 [0] : vector<16x128xf32> to vector<128xf32>
    %437 = vector.shape_cast %436 : vector<128xf32> to vector<1x128xf32>
    %c0_326 = arith.constant 0 : index
    %c0_327 = arith.constant 0 : index
    %438 = vector.load %arg8[%c0_326, %c0_327] : memref<128x2xf32, #tpu.memory_space<vmem>>, vector<128x2xf32>
    %cst_328 = arith.constant dense<0.000000e+00> : vector<1x2xf32>
    %439 = tpu.matmul %437, %438, %cst_328 {dimension_numbers = #tpu.dot_dimension_numbers<[1], [0], [0], [1], [0, 0, 1, 1], [], []>} : vector<1x128xf32>, vector<128x2xf32>, vector<1x2xf32> -> vector<1x2xf32>
    %c0_329 = arith.constant 0 : index
    %c0_330 = arith.constant 0 : index
    %440 = vector.load %arg9[%c0_329, %c0_330] : memref<1x2xf32, #tpu.memory_space<vmem>>, vector<1x2xf32>
    %441 = arith.addf %439, %440 : vector<1x2xf32>
    %cst_331 = arith.constant 0.000000e+00 : f32
    %442 = vector.broadcast %cst_331 : f32 to vector<1x2xf32>
    %443 = arith.subf %442, %441 : vector<1x2xf32>
    %444 = math.exp %443 : vector<1x2xf32>
    %cst_332 = arith.constant 1.000000e+00 : f32
    %445 = vector.broadcast %cst_332 : f32 to vector<1x2xf32>
    %446 = arith.addf %445, %444 : vector<1x2xf32>
    %cst_333 = arith.constant 1.000000e+00 : f32
    %447 = vector.broadcast %cst_333 : f32 to vector<1x2xf32>
    %448 = arith.divf %447, %446 : vector<1x2xf32>
    %c0_334 = arith.constant 0 : index
    %c0_335 = arith.constant 0 : index
    %449 = vector.load %arg10[%c0_334, %c0_335] : memref<1x2xf32, #tpu.memory_space<vmem>>, vector<1x2xf32>
    tpu.vector_store %arg10[%c0_334, %c0_335], %448 {strides = array<i32>} : memref<1x2xf32, #tpu.memory_space<vmem>>, vector<1x2xf32>,
    return
  }
}

</mosaic_0001>

<llo_original>
// kernel: ggnn_simplify_forward.1
$region0: #{ggnn_simplify_forward.1}
  #allocation0 [shape = 'u32[]', space=smem, size = 0x4, offset = 0x4, fixed_abs, tag = 'smem constant byte address 0x4 - core index']
  #allocation1 [shape = 'u32[72,128]{1,0:T(1,128)}', space=vmem, size = 0x9000, scoped, tag = 'internal scratch']
  %s0 = inlined_call_operand.vmem [shape: s32[128,1], index: 0, kind: input, shape index: {}]
  %s1 = inlined_call_operand.vmem [shape: s32[1,128], index: 1, kind: input, shape index: {}]
  %s2 = inlined_call_operand.vmem [shape: f32[16,128], index: 2, kind: input, shape index: {}]
  %s3 = inlined_call_operand.hbm [shape: f32[6,128,128], index: 3, kind: input, shape index: {}]
  %s4 = inlined_call_operand.hbm [shape: f32[3,128,128], index: 4, kind: input, shape index: {}]
  %s5 = inlined_call_operand.hbm [shape: f32[3,128,128], index: 5, kind: input, shape index: {}]
  %s6 = inlined_call_operand.vmem [shape: f32[3,1,128], index: 6, kind: input, shape index: {}]
  %s7 = inlined_call_operand.vmem [shape: f32[3,1,128], index: 7, kind: input, shape index: {}]
  %s8 = inlined_call_operand.vmem [shape: f32[128,2], index: 8, kind: input, shape index: {}]
  %s9 = inlined_call_operand.vmem [shape: f32[1,2], index: 9, kind: input, shape index: {}]
  %s10 = inlined_call_operand.hbm [shape: f32[1,2], index: 10, kind: output, shape index: {}]
  %s11 = sld [smem:[#allocation0]]
  $region62: #{ggnn_simplify_forward.1} parent=0
    _
  %s13 = ssub.s32 1, %s11
  %s14 = scalar_select 0, %s13, %s11
  $region1: #{ggnn_simplify_forward.1} parent=0
    #allocation2 [shape = 'u8[393216]{0}', space=vmem, size = 0x60000, scoped, tag = 'input window, operand 3, single buffered']
    #allocation3 [shape = 's32[1]{0}', space=sflag, size = 0x4, scoped, tag = 'scoped memory for ggnn_simplify_forward.1']
    #allocation4 [shape = 's32[1]{0}', space=sflag, size = 0x4, scoped, tag = 'scoped memory for ggnn_simplify_forward.1']
    #allocation5 [shape = 'u8[196608]{0}', space=vmem, size = 0x30000, scoped, tag = 'input window, operand 4, single buffered']
    #allocation6 [shape = 's32[1]{0}', space=sflag, size = 0x4, scoped, tag = 'scoped memory for ggnn_simplify_forward.1']
    #allocation7 [shape = 'u8[196608]{0}', space=vmem, size = 0x30000, scoped, tag = 'input window, operand 5, single buffered']
    #allocation8 [shape = 'u8[512]{0}', space=vmem, size = 0x400, scoped, tag = 'output window, operand 0, single buffered']
    %15 = vsyncpa [#allocation3], 0
    %16 = vsyncpa [#allocation6], 0
    %17 = vsyncpa [#allocation4], 0
    // Predicated region
    $region2: #{ggnn_simplify_forward.1} parent=1 // pred_check
      _
    $region3: #{ggnn_simplify_forward.1} parent=1 // pred_check_branch
      %19 = sbr.rel (0) target = $region5
    $region4: #{ggnn_simplify_forward.1} parent=1 // pred_region
      _
    $region5: #{ggnn_simplify_forward.1} parent=1 // pred_fallthru
      _
    // Predicated region
    $region6: #{ggnn_simplify_forward.1} parent=1 // pred_check
      _
    $region7: #{ggnn_simplify_forward.1} parent=1 // pred_check_branch
      %21 = sbr.rel (0) target = $region9
    $region8: #{ggnn_simplify_forward.1} parent=1 // pred_region
      _
    $region9: #{ggnn_simplify_forward.1} parent=1 // pred_fallthru
      _
    // Predicated region
    $region10: #{ggnn_simplify_forward.1} parent=1 // pred_check
      _
    $region11: #{ggnn_simplify_forward.1} parent=1 // pred_check_branch
      %23 = sbr.rel (0) target = $region13
    $region12: #{ggnn_simplify_forward.1} parent=1 // pred_region
      _
    $region13: #{ggnn_simplify_forward.1} parent=1 // pred_fallthru
      _
    // Predicated region
    $region14: #{ggnn_simplify_forward.1} parent=1 // pred_check
      _
    $region15: #{ggnn_simplify_forward.1} parent=1 // pred_check_branch
      %25 = sbr.rel (0) target = $region17
    $region16: #{ggnn_simplify_forward.1} parent=1 // pred_region
      %27 = vsyncadd [#allocation3], 0
      %s28 = sshll.u32 %s3, 4
      %s29 = int_to_ptr.hbm [resolvable:$true] %s28
      %s30 = sshll.u32 [#allocation2], 4
      %s31 = int_to_ptr.vmem [resolvable:$true] %s30
      %36 = dma.hbm_to_vmem [thread:$0]  %s29, 12288, %s31, [#allocation3], 128, 128, 8
    $region17: #{ggnn_simplify_forward.1} parent=1 // pred_fallthru
      _
    // Predicated region
    $region18: #{ggnn_simplify_forward.1} parent=1 // pred_check
      _
    $region19: #{ggnn_simplify_forward.1} parent=1 // pred_check_branch
      %38 = sbr.rel (0) target = $region21
    $region20: #{ggnn_simplify_forward.1} parent=1 // pred_region
      %40 = vsyncadd [#allocation6], 0
      %s41 = sshll.u32 %s4, 4
      %s42 = int_to_ptr.hbm [resolvable:$true] %s41
      %s43 = sshll.u32 [#allocation5], 4
      %s44 = int_to_ptr.vmem [resolvable:$true] %s43
      %49 = dma.hbm_to_vmem [thread:$0]  %s42, 6144, %s44, [#allocation6], 128, 128, 8
    $region21: #{ggnn_simplify_forward.1} parent=1 // pred_fallthru
      _
    // Predicated region
    $region22: #{ggnn_simplify_forward.1} parent=1 // pred_check
      _
    $region23: #{ggnn_simplify_forward.1} parent=1 // pred_check_branch
      %51 = sbr.rel (0) target = $region25
    $region24: #{ggnn_simplify_forward.1} parent=1 // pred_region
      %53 = vsyncadd [#allocation6], 0
      %s54 = sshll.u32 %s5, 4
      %s55 = int_to_ptr.hbm [resolvable:$true] %s54
      %s56 = sshll.u32 [#allocation7], 4
      %s57 = int_to_ptr.vmem [resolvable:$true] %s56
      %62 = dma.hbm_to_vmem [thread:$0]  %s55, 6144, %s57, [#allocation6], 128, 128, 8
    $region25: #{ggnn_simplify_forward.1} parent=1 // pred_fallthru
      _
    // Predicated region
    $region26: #{ggnn_simplify_forward.1} parent=1 // pred_check
      _
    $region27: #{ggnn_simplify_forward.1} parent=1 // pred_check_branch
      %64 = sbr.rel (0) target = $region29
    $region28: #{ggnn_simplify_forward.1} parent=1 // pred_region
      _
    $region29: #{ggnn_simplify_forward.1} parent=1 // pred_fallthru
      _
    // Predicated region
    $region30: #{ggnn_simplify_forward.1} parent=1 // pred_check
      _
    $region31: #{ggnn_simplify_forward.1} parent=1 // pred_check_branch
      %66 = sbr.rel (0) target = $region33
    $region32: #{ggnn_simplify_forward.1} parent=1 // pred_region
      _
    $region33: #{ggnn_simplify_forward.1} parent=1 // pred_fallthru
      _
    // Predicated region
    $region34: #{ggnn_simplify_forward.1} parent=1 // pred_check
      _
    $region35: #{ggnn_simplify_forward.1} parent=1 // pred_check_branch
      %68 = sbr.rel (0) target = $region37
    $region36: #{ggnn_simplify_forward.1} parent=1 // pred_region
      _
    $region37: #{ggnn_simplify_forward.1} parent=1 // pred_fallthru
      _
    // Predicated region
    $region38: #{ggnn_simplify_forward.1} parent=1 // pred_check
      _
    $region39: #{ggnn_simplify_forward.1} parent=1 // pred_check_branch
      %70 = sbr.rel (0) target = $region41
    $region40: #{ggnn_simplify_forward.1} parent=1 // pred_region
      _
    $region41: #{ggnn_simplify_forward.1} parent=1 // pred_fallthru
      _
    // Predicated region
    $region42: #{ggnn_simplify_forward.1} parent=1 // pred_check
      _
    $region43: #{ggnn_simplify_forward.1} parent=1 // pred_check_branch
      %72 = sbr.rel (0) target = $region45
    $region44: #{ggnn_simplify_forward.1} parent=1 // pred_region
      %74 = dma.done [#allocation3], 12288
    $region45: #{ggnn_simplify_forward.1} parent=1 // pred_fallthru
      _
    // Predicated region
    $region46: #{ggnn_simplify_forward.1} parent=1 // pred_check
      _
    $region47: #{ggnn_simplify_forward.1} parent=1 // pred_check_branch
      %76 = sbr.rel (0) target = $region49
    $region48: #{ggnn_simplify_forward.1} parent=1 // pred_region
      %78 = dma.done [#allocation6], 6144
    $region49: #{ggnn_simplify_forward.1} parent=1 // pred_fallthru
      _
    // Predicated region
    $region50: #{ggnn_simplify_forward.1} parent=1 // pred_check
      _
    $region51: #{ggnn_simplify_forward.1} parent=1 // pred_check_branch
      %80 = sbr.rel (0) target = $region53
    $region52: #{ggnn_simplify_forward.1} parent=1 // pred_region
      %82 = dma.done [#allocation6], 6144
    $region53: #{ggnn_simplify_forward.1} parent=1 // pred_fallthru
      _
    %v83 = vlaneseq
    %v84 = vand.u32 %v83, 127
    %v85 = vlaneseq
    %v86 = vshrl.u32 %v85, 7
    %v87 = vadd.s32 %v86, 8
    %v88 = vld [vmem:[%s0] sm:$0xff]
    %v89 = vld [vmem:[%s0 + $0x8] sm:$0xff]
    %v90 = vld [vmem:[%s0 + $0x10] sm:$0xff]
    %v91 = vld [vmem:[%s0 + $0x18] sm:$0xff]
    %v92 = vld [vmem:[%s0 + $0x20] sm:$0xff]
    %v93 = vld [vmem:[%s0 + $0x28] sm:$0xff]
    %v94 = vld [vmem:[%s0 + $0x30] sm:$0xff]
    %v95 = vld [vmem:[%s0 + $0x38] sm:$0xff]
    %v96 = vld [vmem:[%s0 + $0x40] sm:$0xff]
    %v97 = vld [vmem:[%s0 + $0x48] sm:$0xff]
    %v98 = vld [vmem:[%s0 + $0x50] sm:$0xff]
    %v99 = vld [vmem:[%s0 + $0x58] sm:$0xff]
    %v100 = vld [vmem:[%s0 + $0x60] sm:$0xff]
    %v101 = vld [vmem:[%s0 + $0x68] sm:$0xff]
    %v102 = vld [vmem:[%s0 + $0x70] sm:$0xff]
    %v103 = vld [vmem:[%s0 + $0x78] sm:$0xff]
    %104 = vset.pattern.permute.xlu0 0
    %105 = vperm.xlu0 %104, %v88
    %v106 = vpop.permute.xlu0 %105
    %107 = vset.pattern.permute.xlu0 0
    %108 = vperm.xlu0 %107, %v89
    %v109 = vpop.permute.xlu0 %108
    %110 = vset.pattern.permute.xlu0 0
    %111 = vperm.xlu0 %110, %v90
    %v112 = vpop.permute.xlu0 %111
    %113 = vset.pattern.permute.xlu0 0
    %114 = vperm.xlu0 %113, %v91
    %v115 = vpop.permute.xlu0 %114
    %116 = vset.pattern.permute.xlu0 0
    %117 = vperm.xlu0 %116, %v92
    %v118 = vpop.permute.xlu0 %117
    %119 = vset.pattern.permute.xlu0 0
    %120 = vperm.xlu0 %119, %v93
    %v121 = vpop.permute.xlu0 %120
    %122 = vset.pattern.permute.xlu0 0
    %123 = vperm.xlu0 %122, %v94
    %v124 = vpop.permute.xlu0 %123
    %125 = vset.pattern.permute.xlu0 0
    %126 = vperm.xlu0 %125, %v95
    %v127 = vpop.permute.xlu0 %126
    %128 = vset.pattern.permute.xlu0 0
    %129 = vperm.xlu0 %128, %v96
    %v130 = vpop.permute.xlu0 %129
    %131 = vset.pattern.permute.xlu0 0
    %132 = vperm.xlu0 %131, %v97
    %v133 = vpop.permute.xlu0 %132
    %134 = vset.pattern.permute.xlu0 0
    %135 = vperm.xlu0 %134, %v98
    %v136 = vpop.permute.xlu0 %135
    %137 = vset.pattern.permute.xlu0 0
    %138 = vperm.xlu0 %137, %v99
    %v139 = vpop.permute.xlu0 %138
    %140 = vset.pattern.permute.xlu0 0
    %141 = vperm.xlu0 %140, %v100
    %v142 = vpop.permute.xlu0 %141
    %143 = vset.pattern.permute.xlu0 0
    %144 = vperm.xlu0 %143, %v101
    %v145 = vpop.permute.xlu0 %144
    %146 = vset.pattern.permute.xlu0 0
    %147 = vperm.xlu0 %146, %v102
    %v148 = vpop.permute.xlu0 %147
    %149 = vset.pattern.permute.xlu0 0
    %150 = vperm.xlu0 %149, %v103
    %v151 = vpop.permute.xlu0 %150
    %vm152 = vcmp.eq.s32.totalorder %v84, %v106
    %vm153 = vcmp.eq.s32.totalorder %v84, %v109
    %vm154 = vcmp.eq.s32.totalorder %v84, %v112
    %vm155 = vcmp.eq.s32.totalorder %v84, %v115
    %vm156 = vcmp.eq.s32.totalorder %v84, %v118
    %vm157 = vcmp.eq.s32.totalorder %v84, %v121
    %vm158 = vcmp.eq.s32.totalorder %v84, %v124
    %vm159 = vcmp.eq.s32.totalorder %v84, %v127
    %vm160 = vcmp.eq.s32.totalorder %v84, %v130
    %vm161 = vcmp.eq.s32.totalorder %v84, %v133
    %vm162 = vcmp.eq.s32.totalorder %v84, %v136
    %vm163 = vcmp.eq.s32.totalorder %v84, %v139
    %vm164 = vcmp.eq.s32.totalorder %v84, %v142
    %vm165 = vcmp.eq.s32.totalorder %v84, %v145
    %vm166 = vcmp.eq.s32.totalorder %v84, %v148
    %vm167 = vcmp.eq.s32.totalorder %v84, %v151
    %v168 = vsel %vm152, 1, 0
    %v169 = vsel %vm153, 1, 0
    %v170 = vsel %vm154, 1, 0
    %v171 = vsel %vm155, 1, 0
    %v172 = vsel %vm156, 1, 0
    %v173 = vsel %vm157, 1, 0
    %v174 = vsel %vm158, 1, 0
    %v175 = vsel %vm159, 1, 0
    %v176 = vsel %vm160, 1, 0
    %v177 = vsel %vm161, 1, 0
    %v178 = vsel %vm162, 1, 0
    %v179 = vsel %vm163, 1, 0
    %v180 = vsel %vm164, 1, 0
    %v181 = vsel %vm165, 1, 0
    %v182 = vsel %vm166, 1, 0
    %v183 = vsel %vm167, 1, 0
    %v184 = vcvt.s32.f32 %v168
    %v185 = vcvt.s32.f32 %v169
    %v186 = vcvt.s32.f32 %v170
    %v187 = vcvt.s32.f32 %v171
    %v188 = vcvt.s32.f32 %v172
    %v189 = vcvt.s32.f32 %v173
    %v190 = vcvt.s32.f32 %v174
    %v191 = vcvt.s32.f32 %v175
    %v192 = vcvt.s32.f32 %v176
    %v193 = vcvt.s32.f32 %v177
    %v194 = vcvt.s32.f32 %v178
    %v195 = vcvt.s32.f32 %v179
    %v196 = vcvt.s32.f32 %v180
    %v197 = vcvt.s32.f32 %v181
    %v198 = vcvt.s32.f32 %v182
    %v199 = vcvt.s32.f32 %v183
    %v200 = vld [vmem:[%s1] sm:$0x1]
    %v201 = vperm.slane %v200, 0
    %vm202 = vcmp.eq.s32.totalorder %v86, %v201
    %vm203 = vcmp.eq.s32.totalorder %v87, %v201
    %v204 = vsel %vm202, 1, 0
    %v205 = vsel %vm203, 1, 0
    %v206 = vcvt.s32.f32 %v204
    %v207 = vcvt.s32.f32 %v205
    %208 = vmatpush.msra.mxu0 %v199
    %209 = vmatpush.msra.mxu0 %v198
    %210 = vmatpush.msra.mxu0 %v197
    %211 = vmatpush.msra.mxu0 %v196
    %212 = vmatpush.msra.mxu0 %v195
    %213 = vmatpush.msra.mxu0 %v194
    %214 = vmatpush.msra.mxu0 %v193
    %215 = vmatpush.msra.mxu0 %v192
    %216 = vmatpush.msra.mxu0 %v191
    %217 = vmatpush.msra.mxu0 %v190
    %218 = vmatpush.msra.mxu0 %v189
    %219 = vmatpush.msra.mxu0 %v188
    %220 = vmatpush.msra.mxu0 %v187
    %221 = vmatpush.msra.mxu0 %v186
    %222 = vmatpush.msra.mxu0 %v185
    %223 = vmatpush.msra.mxu0 %v184
    %224 = vmatmul.f32.gmra.mxu0 %v206
    %v225 = vpop.f32.mrf.mxu0
    %v226 = vadd.f32 0.0, %v225
    %227 = vmatmul.f32.gmra.mxu0 %v207
    %v228 = vpop.f32.mrf.mxu0
    %v229 = vadd.f32 0.0, %v228
    %230 = vdwg.mxu0
    %v231 = vld [vmem:[%s2] sm:$0xff]
    %v232 = vld [vmem:[%s2 + $0x8] sm:$0xff]
    %v233 = vld [vmem:[#allocation2] sm:$0xff]
    %v234 = vld [vmem:[#allocation2 + $0x8] sm:$0xff]
    %v235 = vld [vmem:[#allocation2 + $0x10] sm:$0xff]
    %v236 = vld [vmem:[#allocation2 + $0x18] sm:$0xff]
    %v237 = vld [vmem:[#allocation2 + $0x20] sm:$0xff]
    %v238 = vld [vmem:[#allocation2 + $0x28] sm:$0xff]
    %v239 = vld [vmem:[#allocation2 + $0x30] sm:$0xff]
    %v240 = vld [vmem:[#allocation2 + $0x38] sm:$0xff]
    %v241 = vld [vmem:[#allocation2 + $0x40] sm:$0xff]
    %v242 = vld [vmem:[#allocation2 + $0x48] sm:$0xff]
    %v243 = vld [vmem:[#allocation2 + $0x50] sm:$0xff]
    %v244 = vld [vmem:[#allocation2 + $0x58] sm:$0xff]
    %v245 = vld [vmem:[#allocation2 + $0x60] sm:$0xff]
    %v246 = vld [vmem:[#allocation2 + $0x68] sm:$0xff]
    %v247 = vld [vmem:[#allocation2 + $0x70] sm:$0xff]
    %v248 = vld [vmem:[#allocation2 + $0x78] sm:$0xff]
    %249 = vmatpush.msra.mxu0 %v248
    %250 = vmatpush.msra.mxu0 %v247
    %251 = vmatpush.msra.mxu0 %v246
    %252 = vmatpush.msra.mxu0 %v245
    %253 = vmatpush.msra.mxu0 %v244
    %254 = vmatpush.msra.mxu0 %v243
    %255 = vmatpush.msra.mxu0 %v242
    %256 = vmatpush.msra.mxu0 %v241
    %257 = vmatpush.msra.mxu0 %v240
    %258 = vmatpush.msra.mxu0 %v239
    %259 = vmatpush.msra.mxu0 %v238
    %260 = vmatpush.msra.mxu0 %v237
    %261 = vmatpush.msra.mxu0 %v236
    %262 = vmatpush.msra.mxu0 %v235
    %263 = vmatpush.msra.mxu0 %v234
    %264 = vmatpush.msra.mxu0 %v233
    %265 = vmatmul.f32.gmra.mxu0 %v231
    %v266 = vpop.f32.mrf.mxu0
    %v267 = vadd.f32 0.0, %v266
    %268 = vmatmul.f32.gmra.mxu0 %v232
    %v269 = vpop.f32.mrf.mxu0
    %v270 = vadd.f32 0.0, %v269
    %271 = vdwg.mxu0
    %vm272 = vcmask 130048
    %v274 = vsel %vm272, %v226, 0
    %v277 = vsel %vm272, %v229, 0
    %279 = vmatpush.msra.mxu0 0.0
    %280 = vmatpush.msra.mxu0 0.0
    %281 = vmatpush.msra.mxu0 0.0
    %282 = vmatpush.msra.mxu0 0.0
    %283 = vmatpush.msra.mxu0 0.0
    %284 = vmatpush.msra.mxu0 0.0
    %285 = vmatpush.msra.mxu0 0.0
    %286 = vmatpush.msra.mxu0 0.0
    %287 = vmatpush.msra.mxu0 0.0
    %288 = vmatpush.msra.mxu0 0.0
    %289 = vmatpush.msra.mxu0 0.0
    %290 = vmatpush.msra.mxu0 0.0
    %291 = vmatpush.msra.mxu0 0.0
    %292 = vmatpush.msra.mxu0 0.0
    %293 = vmatpush.msra.mxu0 %v270
    %294 = vmatpush.msra.mxu0 %v267
    %295 = vmatmul.f32.gmra.mxu0 %v274
    %v296 = vpop.f32.mrf.mxu0
    %v297 = vadd.f32 0.0, %v296
    %298 = vmatmul.f32.gmra.mxu0 %v277
    %v299 = vpop.f32.mrf.mxu0
    %v300 = vadd.f32 0.0, %v299
    %301 = vdwg.mxu0
    %v302 = vld [vmem:[#allocation5] sm:$0xff]
    %v303 = vld [vmem:[#allocation5 + $0x8] sm:$0xff]
    %v304 = vld [vmem:[#allocation5 + $0x10] sm:$0xff]
    %v305 = vld [vmem:[#allocation5 + $0x18] sm:$0xff]
    %v306 = vld [vmem:[#allocation5 + $0x20] sm:$0xff]
    %v307 = vld [vmem:[#allocation5 + $0x28] sm:$0xff]
    %v308 = vld [vmem:[#allocation5 + $0x30] sm:$0xff]
    %v309 = vld [vmem:[#allocation5 + $0x38] sm:$0xff]
    %v310 = vld [vmem:[#allocation5 + $0x40] sm:$0xff]
    %v311 = vld [vmem:[#allocation5 + $0x48] sm:$0xff]
    %v312 = vld [vmem:[#allocation5 + $0x50] sm:$0xff]
    %v313 = vld [vmem:[#allocation5 + $0x58] sm:$0xff]
    %v314 = vld [vmem:[#allocation5 + $0x60] sm:$0xff]
    %v315 = vld [vmem:[#allocation5 + $0x68] sm:$0xff]
    %v316 = vld [vmem:[#allocation5 + $0x70] sm:$0xff]
    %v317 = vld [vmem:[#allocation5 + $0x78] sm:$0xff]
    %v318 = vld [vmem:[%s6] sm:$0x1]
    %v320 = vperm.slane %v318, 0
    %322 = vmatpush.msra.mxu0 %v317
    %323 = vmatpush.msra.mxu0 %v316
    %324 = vmatpush.msra.mxu0 %v315
    %325 = vmatpush.msra.mxu0 %v314
    %326 = vmatpush.msra.mxu0 %v313
    %327 = vmatpush.msra.mxu0 %v312
    %328 = vmatpush.msra.mxu0 %v311
    %329 = vmatpush.msra.mxu0 %v310
    %330 = vmatpush.msra.mxu0 %v309
    %331 = vmatpush.msra.mxu0 %v308
    %332 = vmatpush.msra.mxu0 %v307
    %333 = vmatpush.msra.mxu0 %v306
    %334 = vmatpush.msra.mxu0 %v305
    %335 = vmatpush.msra.mxu0 %v304
    %336 = vmatpush.msra.mxu0 %v303
    %337 = vmatpush.msra.mxu0 %v302
    %338 = vmatmul.f32.gmra.mxu0 %v297
    %v339 = vpop.f32.mrf.mxu0
    %v340 = vadd.f32 %v320, %v339
    %341 = vmatmul.f32.gmra.mxu0 %v300
    %v342 = vpop.f32.mrf.mxu0
    %v343 = vadd.f32 %v320, %v342
    %344 = vdwg.mxu0
    %v345 = vld [vmem:[#allocation7] sm:$0xff]
    %v346 = vld [vmem:[#allocation7 + $0x8] sm:$0xff]
    %v347 = vld [vmem:[#allocation7 + $0x10] sm:$0xff]
    %v348 = vld [vmem:[#allocation7 + $0x18] sm:$0xff]
    %v349 = vld [vmem:[#allocation7 + $0x20] sm:$0xff]
    %v350 = vld [vmem:[#allocation7 + $0x28] sm:$0xff]
    %v351 = vld [vmem:[#allocation7 + $0x30] sm:$0xff]
    %v352 = vld [vmem:[#allocation7 + $0x38] sm:$0xff]
    %v353 = vld [vmem:[#allocation7 + $0x40] sm:$0xff]
    %v354 = vld [vmem:[#allocation7 + $0x48] sm:$0xff]
    %v355 = vld [vmem:[#allocation7 + $0x50] sm:$0xff]
    %v356 = vld [vmem:[#allocation7 + $0x58] sm:$0xff]
    %v357 = vld [vmem:[#allocation7 + $0x60] sm:$0xff]
    %v358 = vld [vmem:[#allocation7 + $0x68] sm:$0xff]
    %v359 = vld [vmem:[#allocation7 + $0x70] sm:$0xff]
    %v360 = vld [vmem:[#allocation7 + $0x78] sm:$0xff]
    %361 = vmatpush.msra.mxu0 %v360
    %362 = vmatpush.msra.mxu0 %v359
    %363 = vmatpush.msra.mxu0 %v358
    %364 = vmatpush.msra.mxu0 %v357
    %365 = vmatpush.msra.mxu0 %v356
    %366 = vmatpush.msra.mxu0 %v355
    %367 = vmatpush.msra.mxu0 %v354
    %368 = vmatpush.msra.mxu0 %v353
    %369 = vmatpush.msra.mxu0 %v352
    %370 = vmatpush.msra.mxu0 %v351
    %371 = vmatpush.msra.mxu0 %v350
    %372 = vmatpush.msra.mxu0 %v349
    %373 = vmatpush.msra.mxu0 %v348
    %374 = vmatpush.msra.mxu0 %v347
    %375 = vmatpush.msra.mxu0 %v346
    %376 = vmatpush.msra.mxu0 %v345
    %377 = vmatmul.f32.gmra.mxu0 %v231
    %v378 = vpop.f32.mrf.mxu0
    %v379 = vadd.f32 0.0, %v378
    %380 = vmatmul.f32.gmra.mxu0 %v232
    %v381 = vpop.f32.mrf.mxu0
    %v382 = vadd.f32 0.0, %v381
    %383 = vdwg.mxu0
    %v384 = vadd.f32 %v340, %v379
    %v385 = vadd.f32 %v343, %v382
    %v386 = vld [vmem:[%s7] sm:$0x1]
    %v388 = vperm.slane %v386, 0
    %v390 = vadd.f32 %v384, %v388
    %v391 = vadd.f32 %v385, %v388
    %v392 = vsub.f32 0.0, %v390
    %v393 = vsub.f32 0.0, %v391
    %v394 = vmul.f32 %v392, 1.442695
    %v395 = vpow.pop %v394
    %v396 = vmul.f32 %v393, 1.442695
    %v397 = vpow.pop %v396
    %v398 = vadd.f32 %v395, 1.0
    %v399 = vadd.f32 %v397, 1.0
    %v400 = vrcp.pop %v398
    %v401 = vmul.f32 %v398, %v400
    %v402 = vsub.f32 1.0, %v401
    %v403 = vmul.f32 %v400, %v402
    %v404 = vadd.f32 %v400, %v403
    %vm405 = vweird.f32 %v398
    %vm406 = vweird.f32 %v400
    %vm407 = vmor %vm405, %vm406
    %v408 = vsel %vm407, %v400, %v404
    %v409 = vand.u32 2147483647, %v398
    %vm410 = vcmp.eq.f32.partialorder %v409, 8.507059e+37
    %v411 = vand.u32 %v398, 2147483648
    %v412 = vor.u32 1.1754944e-38, %v411
    %v413 = vsel %vm410, %v412, %v408
    %v414 = vmul.f32 1.0, %v413
    %v415 = vrcp.pop %v399
    %v416 = vmul.f32 %v399, %v415
    %v417 = vsub.f32 1.0, %v416
    %v418 = vmul.f32 %v415, %v417
    %v419 = vadd.f32 %v415, %v418
    %vm420 = vweird.f32 %v399
    %vm421 = vweird.f32 %v415
    %vm422 = vmor %vm420, %vm421
    %v423 = vsel %vm422, %v415, %v419
    %v424 = vand.u32 2147483647, %v399
    %vm425 = vcmp.eq.f32.partialorder %v424, 8.507059e+37
    %v426 = vand.u32 %v399, 2147483648
    %v427 = vor.u32 1.1754944e-38, %v426
    %v428 = vsel %vm425, %v427, %v423
    %v429 = vmul.f32 1.0, %v428
    %s430 = scalar_lea.vmem [#allocation5], 128
    %v431 = vld [vmem:[%s430] sm:$0xff]
    %v432 = vld [vmem:[%s430 + $0x8] sm:$0xff]
    %v433 = vld [vmem:[%s430 + $0x10] sm:$0xff]
    %v434 = vld [vmem:[%s430 + $0x18] sm:$0xff]
    %v435 = vld [vmem:[%s430 + $0x20] sm:$0xff]
    %v436 = vld [vmem:[%s430 + $0x28] sm:$0xff]
    %v437 = vld [vmem:[%s430 + $0x30] sm:$0xff]
    %v438 = vld [vmem:[%s430 + $0x38] sm:$0xff]
    %v439 = vld [vmem:[%s430 + $0x40] sm:$0xff]
    %v440 = vld [vmem:[%s430 + $0x48] sm:$0xff]
    %v441 = vld [vmem:[%s430 + $0x50] sm:$0xff]
    %v442 = vld [vmem:[%s430 + $0x58] sm:$0xff]
    %v443 = vld [vmem:[%s430 + $0x60] sm:$0xff]
    %v444 = vld [vmem:[%s430 + $0x68] sm:$0xff]
    %v445 = vld [vmem:[%s430 + $0x70] sm:$0xff]
    %v446 = vld [vmem:[%s430 + $0x78] sm:$0xff]
    %s447 = scalar_lea.vmem %s6, 1
    %v448 = vld [vmem:[%s447] sm:$0x1]
    %v450 = vperm.slane %v448, 0
    %452 = vmatpush.msra.mxu0 %v446
    %453 = vmatpush.msra.mxu0 %v445
    %454 = vmatpush.msra.mxu0 %v444
    %455 = vmatpush.msra.mxu0 %v443
    %456 = vmatpush.msra.mxu0 %v442
    %457 = vmatpush.msra.mxu0 %v441
    %458 = vmatpush.msra.mxu0 %v440
    %459 = vmatpush.msra.mxu0 %v439
    %460 = vmatpush.msra.mxu0 %v438
    %461 = vmatpush.msra.mxu0 %v437
    %462 = vmatpush.msra.mxu0 %v436
    %463 = vmatpush.msra.mxu0 %v435
    %464 = vmatpush.msra.mxu0 %v434
    %465 = vmatpush.msra.mxu0 %v433
    %466 = vmatpush.msra.mxu0 %v432
    %467 = vmatpush.msra.mxu0 %v431
    %468 = vmatmul.f32.gmra.mxu0 %v297
    %v469 = vpop.f32.mrf.mxu0
    %v470 = vadd.f32 %v450, %v469
    %471 = vmatmul.f32.gmra.mxu0 %v300
    %v472 = vpop.f32.mrf.mxu0
    %v473 = vadd.f32 %v450, %v472
    %474 = vdwg.mxu0
    %s475 = scalar_lea.vmem [#allocation7], 128
    %v476 = vld [vmem:[%s475] sm:$0xff]
    %v477 = vld [vmem:[%s475 + $0x8] sm:$0xff]
    %v478 = vld [vmem:[%s475 + $0x10] sm:$0xff]
    %v479 = vld [vmem:[%s475 + $0x18] sm:$0xff]
    %v480 = vld [vmem:[%s475 + $0x20] sm:$0xff]
    %v481 = vld [vmem:[%s475 + $0x28] sm:$0xff]
    %v482 = vld [vmem:[%s475 + $0x30] sm:$0xff]
    %v483 = vld [vmem:[%s475 + $0x38] sm:$0xff]
    %v484 = vld [vmem:[%s475 + $0x40] sm:$0xff]
    %v485 = vld [vmem:[%s475 + $0x48] sm:$0xff]
    %v486 = vld [vmem:[%s475 + $0x50] sm:$0xff]
    %v487 = vld [vmem:[%s475 + $0x58] sm:$0xff]
    %v488 = vld [vmem:[%s475 + $0x60] sm:$0xff]
    %v489 = vld [vmem:[%s475 + $0x68] sm:$0xff]
    %v490 = vld [vmem:[%s475 + $0x70] sm:$0xff]
    %v491 = vld [vmem:[%s475 + $0x78] sm:$0xff]
    %492 = vmatpush.msra.mxu0 %v491
    %493 = vmatpush.msra.mxu0 %v490
    %494 = vmatpush.msra.mxu0 %v489
    %495 = vmatpush.msra.mxu0 %v488
    %496 = vmatpush.msra.mxu0 %v487
    %497 = vmatpush.msra.mxu0 %v486
    %498 = vmatpush.msra.mxu0 %v485
    %499 = vmatpush.msra.mxu0 %v484
    %500 = vmatpush.msra.mxu0 %v483
    %501 = vmatpush.msra.mxu0 %v482
    %502 = vmatpush.msra.mxu0 %v481
    %503 = vmatpush.msra.mxu0 %v480
    %504 = vmatpush.msra.mxu0 %v479
    %505 = vmatpush.msra.mxu0 %v478
    %506 = vmatpush.msra.mxu0 %v477
    %507 = vmatpush.msra.mxu0 %v476
    %508 = vmatmul.f32.gmra.mxu0 %v231
    %v509 = vpop.f32.mrf.mxu0
    %v510 = vadd.f32 0.0, %v509
    %511 = vmatmul.f32.gmra.mxu0 %v232
    %v512 = vpop.f32.mrf.mxu0
    %v513 = vadd.f32 0.0, %v512
    %514 = vdwg.mxu0
    %v515 = vadd.f32 %v470, %v510
    %v516 = vadd.f32 %v473, %v513
    %s517 = scalar_lea.vmem %s7, 1
    %v518 = vld [vmem:[%s517] sm:$0x1]
    %v520 = vperm.slane %v518, 0
    %v522 = vadd.f32 %v515, %v520
    %v523 = vadd.f32 %v516, %v520
    %v524 = vsub.f32 0.0, %v522
    %v525 = vsub.f32 0.0, %v523
    %v526 = vmul.f32 %v524, 1.442695
    %v527 = vpow.pop %v526
    %v528 = vmul.f32 %v525, 1.442695
    %v529 = vpow.pop %v528
    %v530 = vadd.f32 %v527, 1.0
    %v531 = vadd.f32 %v529, 1.0
    %v532 = vrcp.pop %v530
    %v533 = vmul.f32 %v530, %v532
    %v534 = vsub.f32 1.0, %v533
    %v535 = vmul.f32 %v532, %v534
    %v536 = vadd.f32 %v532, %v535
    %vm537 = vweird.f32 %v530
    %vm538 = vweird.f32 %v532
    %vm539 = vmor %vm537, %vm538
    %v540 = vsel %vm539, %v532, %v536
    %v541 = vand.u32 2147483647, %v530
    %vm542 = vcmp.eq.f32.partialorder %v541, 8.507059e+37
    %v543 = vand.u32 %v530, 2147483648
    %v544 = vor.u32 1.1754944e-38, %v543
    %v545 = vsel %vm542, %v544, %v540
    %v546 = vmul.f32 1.0, %v545
    %v547 = vrcp.pop %v531
    %v548 = vmul.f32 %v531, %v547
    %v549 = vsub.f32 1.0, %v548
    %v550 = vmul.f32 %v547, %v549
    %v551 = vadd.f32 %v547, %v550
    %vm552 = vweird.f32 %v531
    %vm553 = vweird.f32 %v547
    %vm554 = vmor %vm552, %vm553
    %v555 = vsel %vm554, %v547, %v551
    %v556 = vand.u32 2147483647, %v531
    %vm557 = vcmp.eq.f32.partialorder %v556, 8.507059e+37
    %v558 = vand.u32 %v531, 2147483648
    %v559 = vor.u32 1.1754944e-38, %v558
    %v560 = vsel %vm557, %v559, %v555
    %v561 = vmul.f32 1.0, %v560
    %s562 = scalar_lea.vmem [#allocation5], 256
    %v563 = vld [vmem:[%s562] sm:$0xff]
    %v564 = vld [vmem:[%s562 + $0x8] sm:$0xff]
    %v565 = vld [vmem:[%s562 + $0x10] sm:$0xff]
    %v566 = vld [vmem:[%s562 + $0x18] sm:$0xff]
    %v567 = vld [vmem:[%s562 + $0x20] sm:$0xff]
    %v568 = vld [vmem:[%s562 + $0x28] sm:$0xff]
    %v569 = vld [vmem:[%s562 + $0x30] sm:$0xff]
    %v570 = vld [vmem:[%s562 + $0x38] sm:$0xff]
    %v571 = vld [vmem:[%s562 + $0x40] sm:$0xff]
    %v572 = vld [vmem:[%s562 + $0x48] sm:$0xff]
    %v573 = vld [vmem:[%s562 + $0x50] sm:$0xff]
    %v574 = vld [vmem:[%s562 + $0x58] sm:$0xff]
    %v575 = vld [vmem:[%s562 + $0x60] sm:$0xff]
    %v576 = vld [vmem:[%s562 + $0x68] sm:$0xff]
    %v577 = vld [vmem:[%s562 + $0x70] sm:$0xff]
    %v578 = vld [vmem:[%s562 + $0x78] sm:$0xff]
    %s579 = scalar_lea.vmem %s6, 2
    %v580 = vld [vmem:[%s579] sm:$0x1]
    %v582 = vperm.slane %v580, 0
    %584 = vmatpush.msra.mxu0 %v578
    %585 = vmatpush.msra.mxu0 %v577
    %586 = vmatpush.msra.mxu0 %v576
    %587 = vmatpush.msra.mxu0 %v575
    %588 = vmatpush.msra.mxu0 %v574
    %589 = vmatpush.msra.mxu0 %v573
    %590 = vmatpush.msra.mxu0 %v572
    %591 = vmatpush.msra.mxu0 %v571
    %592 = vmatpush.msra.mxu0 %v570
    %593 = vmatpush.msra.mxu0 %v569
    %594 = vmatpush.msra.mxu0 %v568
    %595 = vmatpush.msra.mxu0 %v567
    %596 = vmatpush.msra.mxu0 %v566
    %597 = vmatpush.msra.mxu0 %v565
    %598 = vmatpush.msra.mxu0 %v564
    %599 = vmatpush.msra.mxu0 %v563
    %600 = vmatmul.f32.gmra.mxu0 %v297
    %v601 = vpop.f32.mrf.mxu0
    %v602 = vadd.f32 %v582, %v601
    %603 = vmatmul.f32.gmra.mxu0 %v300
    %v604 = vpop.f32.mrf.mxu0
    %v605 = vadd.f32 %v582, %v604
    %606 = vdwg.mxu0
    %s607 = scalar_lea.vmem [#allocation7], 256
    %v608 = vld [vmem:[%s607] sm:$0xff]
    %v609 = vld [vmem:[%s607 + $0x8] sm:$0xff]
    %v610 = vld [vmem:[%s607 + $0x10] sm:$0xff]
    %v611 = vld [vmem:[%s607 + $0x18] sm:$0xff]
    %v612 = vld [vmem:[%s607 + $0x20] sm:$0xff]
    %v613 = vld [vmem:[%s607 + $0x28] sm:$0xff]
    %v614 = vld [vmem:[%s607 + $0x30] sm:$0xff]
    %v615 = vld [vmem:[%s607 + $0x38] sm:$0xff]
    %v616 = vld [vmem:[%s607 + $0x40] sm:$0xff]
    %v617 = vld [vmem:[%s607 + $0x48] sm:$0xff]
    %v618 = vld [vmem:[%s607 + $0x50] sm:$0xff]
    %v619 = vld [vmem:[%s607 + $0x58] sm:$0xff]
    %v620 = vld [vmem:[%s607 + $0x60] sm:$0xff]
    %v621 = vld [vmem:[%s607 + $0x68] sm:$0xff]
    %v622 = vld [vmem:[%s607 + $0x70] sm:$0xff]
    %v623 = vld [vmem:[%s607 + $0x78] sm:$0xff]
    %s624 = scalar_lea.vmem %s7, 2
    %v625 = vld [vmem:[%s624] sm:$0x1]
    %v627 = vperm.slane %v625, 0
    %629 = vmatpush.msra.mxu0 %v623
    %630 = vmatpush.msra.mxu0 %v622
    %631 = vmatpush.msra.mxu0 %v621
    %632 = vmatpush.msra.mxu0 %v620
    %633 = vmatpush.msra.mxu0 %v619
    %634 = vmatpush.msra.mxu0 %v618
    %635 = vmatpush.msra.mxu0 %v617
    %636 = vmatpush.msra.mxu0 %v616
    %637 = vmatpush.msra.mxu0 %v615
    %638 = vmatpush.msra.mxu0 %v614
    %639 = vmatpush.msra.mxu0 %v613
    %640 = vmatpush.msra.mxu0 %v612
    %641 = vmatpush.msra.mxu0 %v611
    %642 = vmatpush.msra.mxu0 %v610
    %643 = vmatpush.msra.mxu0 %v609
    %644 = vmatpush.msra.mxu0 %v608
    %645 = vmatmul.f32.gmra.mxu0 %v231
    %v646 = vpop.f32.mrf.mxu0
    %v647 = vadd.f32 %v627, %v646
    %648 = vmatmul.f32.gmra.mxu0 %v232
    %v649 = vpop.f32.mrf.mxu0
    %v650 = vadd.f32 %v627, %v649
    %651 = vdwg.mxu0
    %v652 = vmul.f32 %v414, %v647
    %v653 = vmul.f32 %v429, %v650
    %v654 = vadd.f32 %v602, %v652
    %v655 = vadd.f32 %v605, %v653
    %v656 = vtanh.pop %v654
    %v657 = vtanh.pop %v655
    %v658 = vsub.f32 1.0, %v546
    %v659 = vsub.f32 1.0, %v561
    %v660 = vmul.f32 %v658, %v656
    %v661 = vmul.f32 %v659, %v657
    %v662 = vmul.f32 %v546, %v231
    %v663 = vmul.f32 %v561, %v232
    %v664 = vadd.f32 %v660, %v662
    %v665 = vadd.f32 %v661, %v663
    %s666 = scalar_lea.vmem [#allocation2], 128
    %v667 = vld [vmem:[%s666] sm:$0xff]
    %v668 = vld [vmem:[%s666 + $0x8] sm:$0xff]
    %v669 = vld [vmem:[%s666 + $0x10] sm:$0xff]
    %v670 = vld [vmem:[%s666 + $0x18] sm:$0xff]
    %v671 = vld [vmem:[%s666 + $0x20] sm:$0xff]
    %v672 = vld [vmem:[%s666 + $0x28] sm:$0xff]
    %v673 = vld [vmem:[%s666 + $0x30] sm:$0xff]
    %v674 = vld [vmem:[%s666 + $0x38] sm:$0xff]
    %v675 = vld [vmem:[%s666 + $0x40] sm:$0xff]
    %v676 = vld [vmem:[%s666 + $0x48] sm:$0xff]
    %v677 = vld [vmem:[%s666 + $0x50] sm:$0xff]
    %v678 = vld [vmem:[%s666 + $0x58] sm:$0xff]
    %v679 = vld [vmem:[%s666 + $0x60] sm:$0xff]
    %v680 = vld [vmem:[%s666 + $0x68] sm:$0xff]
    %v681 = vld [vmem:[%s666 + $0x70] sm:$0xff]
    %v682 = vld [vmem:[%s666 + $0x78] sm:$0xff]
    %683 = vmatpush.msra.mxu0 %v682
    %684 = vmatpush.msra.mxu0 %v681
    %685 = vmatpush.msra.mxu0 %v680
    %686 = vmatpush.msra.mxu0 %v679
    %687 = vmatpush.msra.mxu0 %v678
    %688 = vmatpush.msra.mxu0 %v677
    %689 = vmatpush.msra.mxu0 %v676
    %690 = vmatpush.msra.mxu0 %v675
    %691 = vmatpush.msra.mxu0 %v674
    %692 = vmatpush.msra.mxu0 %v673
    %693 = vmatpush.msra.mxu0 %v672
    %694 = vmatpush.msra.mxu0 %v671
    %695 = vmatpush.msra.mxu0 %v670
    %696 = vmatpush.msra.mxu0 %v669
    %697 = vmatpush.msra.mxu0 %v668
    %698 = vmatpush.msra.mxu0 %v667
    %699 = vmatmul.f32.gmra.mxu0 %v664
    %v700 = vpop.f32.mrf.mxu0
    %v701 = vadd.f32 0.0, %v700
    %702 = vmatmul.f32.gmra.mxu0 %v665
    %v703 = vpop.f32.mrf.mxu0
    %v704 = vadd.f32 0.0, %v703
    %705 = vdwg.mxu0
    %706 = vmatpush.msra.mxu0 0.0
    %707 = vmatpush.msra.mxu0 0.0
    %708 = vmatpush.msra.mxu0 0.0
    %709 = vmatpush.msra.mxu0 0.0
    %710 = vmatpush.msra.mxu0 0.0
    %711 = vmatpush.msra.mxu0 0.0
    %712 = vmatpush.msra.mxu0 0.0
    %713 = vmatpush.msra.mxu0 0.0
    %714 = vmatpush.msra.mxu0 0.0
    %715 = vmatpush.msra.mxu0 0.0
    %716 = vmatpush.msra.mxu0 0.0
    %717 = vmatpush.msra.mxu0 0.0
    %718 = vmatpush.msra.mxu0 0.0
    %719 = vmatpush.msra.mxu0 0.0
    %720 = vmatpush.msra.mxu0 %v704
    %721 = vmatpush.msra.mxu0 %v701
    %722 = vmatmul.f32.gmra.mxu0 %v274
    %v723 = vpop.f32.mrf.mxu0
    %v724 = vadd.f32 0.0, %v723
    %725 = vmatmul.f32.gmra.mxu0 %v277
    %v726 = vpop.f32.mrf.mxu0
    %v727 = vadd.f32 0.0, %v726
    %728 = vdwg.mxu0
    %729 = vmatpush.msra.mxu0 %v317
    %730 = vmatpush.msra.mxu0 %v316
    %731 = vmatpush.msra.mxu0 %v315
    %732 = vmatpush.msra.mxu0 %v314
    %733 = vmatpush.msra.mxu0 %v313
    %734 = vmatpush.msra.mxu0 %v312
    %735 = vmatpush.msra.mxu0 %v311
    %736 = vmatpush.msra.mxu0 %v310
    %737 = vmatpush.msra.mxu0 %v309
    %738 = vmatpush.msra.mxu0 %v308
    %739 = vmatpush.msra.mxu0 %v307
    %740 = vmatpush.msra.mxu0 %v306
    %741 = vmatpush.msra.mxu0 %v305
    %742 = vmatpush.msra.mxu0 %v304
    %743 = vmatpush.msra.mxu0 %v303
    %744 = vmatpush.msra.mxu0 %v302
    %745 = vmatmul.f32.gmra.mxu0 %v724
    %v746 = vpop.f32.mrf.mxu0
    %v747 = vadd.f32 %v320, %v746
    %748 = vmatmul.f32.gmra.mxu0 %v727
    %v749 = vpop.f32.mrf.mxu0
    %v750 = vadd.f32 %v320, %v749
    %751 = vdwg.mxu0
    %752 = vmatpush.msra.mxu0 %v360
    %753 = vmatpush.msra.mxu0 %v359
    %754 = vmatpush.msra.mxu0 %v358
    %755 = vmatpush.msra.mxu0 %v357
    %756 = vmatpush.msra.mxu0 %v356
    %757 = vmatpush.msra.mxu0 %v355
    %758 = vmatpush.msra.mxu0 %v354
    %759 = vmatpush.msra.mxu0 %v353
    %760 = vmatpush.msra.mxu0 %v352
    %761 = vmatpush.msra.mxu0 %v351
    %762 = vmatpush.msra.mxu0 %v350
    %763 = vmatpush.msra.mxu0 %v349
    %764 = vmatpush.msra.mxu0 %v348
    %765 = vmatpush.msra.mxu0 %v347
    %766 = vmatpush.msra.mxu0 %v346
    %767 = vmatpush.msra.mxu0 %v345
    %768 = vmatmul.f32.gmra.mxu0 %v664
    %v769 = vpop.f32.mrf.mxu0
    %v770 = vadd.f32 0.0, %v769
    %771 = vmatmul.f32.gmra.mxu0 %v665
    %v772 = vpop.f32.mrf.mxu0
    %v773 = vadd.f32 0.0, %v772
    %774 = vdwg.mxu0
    %v775 = vadd.f32 %v747, %v770
    %v776 = vadd.f32 %v750, %v773
    %v777 = vadd.f32 %v775, %v388
    %v778 = vadd.f32 %v776, %v388
    %v779 = vsub.f32 0.0, %v777
    %v780 = vsub.f32 0.0, %v778
    %v781 = vmul.f32 %v779, 1.442695
    %v782 = vpow.pop %v781
    %v783 = vmul.f32 %v780, 1.442695
    %v784 = vpow.pop %v783
    %v785 = vadd.f32 %v782, 1.0
    %v786 = vadd.f32 %v784, 1.0
    %v787 = vrcp.pop %v785
    %v788 = vmul.f32 %v785, %v787
    %v789 = vsub.f32 1.0, %v788
    %v790 = vmul.f32 %v787, %v789
    %v791 = vadd.f32 %v787, %v790
    %vm792 = vweird.f32 %v785
    %vm793 = vweird.f32 %v787
    %vm794 = vmor %vm792, %vm793
    %v795 = vsel %vm794, %v787, %v791
    %v796 = vand.u32 2147483647, %v785
    %vm797 = vcmp.eq.f32.partialorder %v796, 8.507059e+37
    %v798 = vand.u32 %v785, 2147483648
    %v799 = vor.u32 1.1754944e-38, %v798
    %v800 = vsel %vm797, %v799, %v795
    %v801 = vmul.f32 1.0, %v800
    %v802 = vrcp.pop %v786
    %v803 = vmul.f32 %v786, %v802
    %v804 = vsub.f32 1.0, %v803
    %v805 = vmul.f32 %v802, %v804
    %v806 = vadd.f32 %v802, %v805
    %vm807 = vweird.f32 %v786
    %vm808 = vweird.f32 %v802
    %vm809 = vmor %vm807, %vm808
    %v810 = vsel %vm809, %v802, %v806
    %v811 = vand.u32 2147483647, %v786
    %vm812 = vcmp.eq.f32.partialorder %v811, 8.507059e+37
    %v813 = vand.u32 %v786, 2147483648
    %v814 = vor.u32 1.1754944e-38, %v813
    %v815 = vsel %vm812, %v814, %v810
    %v816 = vmul.f32 1.0, %v815
    %817 = vmatpush.msra.mxu0 %v446
    %818 = vmatpush.msra.mxu0 %v445
    %819 = vmatpush.msra.mxu0 %v444
    %820 = vmatpush.msra.mxu0 %v443
    %821 = vmatpush.msra.mxu0 %v442
    %822 = vmatpush.msra.mxu0 %v441
    %823 = vmatpush.msra.mxu0 %v440
    %824 = vmatpush.msra.mxu0 %v439
    %825 = vmatpush.msra.mxu0 %v438
    %826 = vmatpush.msra.mxu0 %v437
    %827 = vmatpush.msra.mxu0 %v436
    %828 = vmatpush.msra.mxu0 %v435
    %829 = vmatpush.msra.mxu0 %v434
    %830 = vmatpush.msra.mxu0 %v433
    %831 = vmatpush.msra.mxu0 %v432
    %832 = vmatpush.msra.mxu0 %v431
    %833 = vmatmul.f32.gmra.mxu0 %v724
    %v834 = vpop.f32.mrf.mxu0
    %v835 = vadd.f32 %v450, %v834
    %836 = vmatmul.f32.gmra.mxu0 %v727
    %v837 = vpop.f32.mrf.mxu0
    %v838 = vadd.f32 %v450, %v837
    %839 = vdwg.mxu0
    %840 = vmatpush.msra.mxu0 %v491
    %841 = vmatpush.msra.mxu0 %v490
    %842 = vmatpush.msra.mxu0 %v489
    %843 = vmatpush.msra.mxu0 %v488
    %844 = vmatpush.msra.mxu0 %v487
    %845 = vmatpush.msra.mxu0 %v486
    %846 = vmatpush.msra.mxu0 %v485
    %847 = vmatpush.msra.mxu0 %v484
    %848 = vmatpush.msra.mxu0 %v483
    %849 = vmatpush.msra.mxu0 %v482
    %850 = vmatpush.msra.mxu0 %v481
    %851 = vmatpush.msra.mxu0 %v480
    %852 = vmatpush.msra.mxu0 %v479
    %853 = vmatpush.msra.mxu0 %v478
    %854 = vmatpush.msra.mxu0 %v477
    %855 = vmatpush.msra.mxu0 %v476
    %856 = vmatmul.f32.gmra.mxu0 %v664
    %v857 = vpop.f32.mrf.mxu0
    %v858 = vadd.f32 0.0, %v857
    %859 = vmatmul.f32.gmra.mxu0 %v665
    %v860 = vpop.f32.mrf.mxu0
    %v861 = vadd.f32 0.0, %v860
    %862 = vdwg.mxu0
    %v863 = vadd.f32 %v835, %v858
    %v864 = vadd.f32 %v838, %v861
    %v865 = vadd.f32 %v863, %v520
    %v866 = vadd.f32 %v864, %v520
    %v867 = vsub.f32 0.0, %v865
    %v868 = vsub.f32 0.0, %v866
    %v869 = vmul.f32 %v867, 1.442695
    %v870 = vpow.pop %v869
    %v871 = vmul.f32 %v868, 1.442695
    %v872 = vpow.pop %v871
    %v873 = vadd.f32 %v870, 1.0
    %v874 = vadd.f32 %v872, 1.0
    %v875 = vrcp.pop %v873
    %v876 = vmul.f32 %v873, %v875
    %v877 = vsub.f32 1.0, %v876
    %v878 = vmul.f32 %v875, %v877
    %v879 = vadd.f32 %v875, %v878
    %vm880 = vweird.f32 %v873
    %vm881 = vweird.f32 %v875
    %vm882 = vmor %vm880, %vm881
    %v883 = vsel %vm882, %v875, %v879
    %v884 = vand.u32 2147483647, %v873
    %vm885 = vcmp.eq.f32.partialorder %v884, 8.507059e+37
    %v886 = vand.u32 %v873, 2147483648
    %v887 = vor.u32 1.1754944e-38, %v886
    %v888 = vsel %vm885, %v887, %v883
    %v889 = vmul.f32 1.0, %v888
    %v890 = vrcp.pop %v874
    %v891 = vmul.f32 %v874, %v890
    %v892 = vsub.f32 1.0, %v891
    %v893 = vmul.f32 %v890, %v892
    %v894 = vadd.f32 %v890, %v893
    %vm895 = vweird.f32 %v874
    %vm896 = vweird.f32 %v890
    %vm897 = vmor %vm895, %vm896
    %v898 = vsel %vm897, %v890, %v894
    %v899 = vand.u32 2147483647, %v874
    %vm900 = vcmp.eq.f32.partialorder %v899, 8.507059e+37
    %v901 = vand.u32 %v874, 2147483648
    %v902 = vor.u32 1.1754944e-38, %v901
    %v903 = vsel %vm900, %v902, %v898
    %v904 = vmul.f32 1.0, %v903
    %905 = vmatpush.msra.mxu0 %v578
    %906 = vmatpush.msra.mxu0 %v577
    %907 = vmatpush.msra.mxu0 %v576
    %908 = vmatpush.msra.mxu0 %v575
    %909 = vmatpush.msra.mxu0 %v574
    %910 = vmatpush.msra.mxu0 %v573
    %911 = vmatpush.msra.mxu0 %v572
    %912 = vmatpush.msra.mxu0 %v571
    %913 = vmatpush.msra.mxu0 %v570
    %914 = vmatpush.msra.mxu0 %v569
    %915 = vmatpush.msra.mxu0 %v568
    %916 = vmatpush.msra.mxu0 %v567
    %917 = vmatpush.msra.mxu0 %v566
    %918 = vmatpush.msra.mxu0 %v565
    %919 = vmatpush.msra.mxu0 %v564
    %920 = vmatpush.msra.mxu0 %v563
    %921 = vmatmul.f32.gmra.mxu0 %v724
    %v922 = vpop.f32.mrf.mxu0
    %v923 = vadd.f32 %v582, %v922
    %924 = vmatmul.f32.gmra.mxu0 %v727
    %v925 = vpop.f32.mrf.mxu0
    %v926 = vadd.f32 %v582, %v925
    %927 = vdwg.mxu0
    %928 = vmatpush.msra.mxu0 %v623
    %929 = vmatpush.msra.mxu0 %v622
    %930 = vmatpush.msra.mxu0 %v621
    %931 = vmatpush.msra.mxu0 %v620
    %932 = vmatpush.msra.mxu0 %v619
    %933 = vmatpush.msra.mxu0 %v618
    %934 = vmatpush.msra.mxu0 %v617
    %935 = vmatpush.msra.mxu0 %v616
    %936 = vmatpush.msra.mxu0 %v615
    %937 = vmatpush.msra.mxu0 %v614
    %938 = vmatpush.msra.mxu0 %v613
    %939 = vmatpush.msra.mxu0 %v612
    %940 = vmatpush.msra.mxu0 %v611
    %941 = vmatpush.msra.mxu0 %v610
    %942 = vmatpush.msra.mxu0 %v609
    %943 = vmatpush.msra.mxu0 %v608
    %944 = vmatmul.f32.gmra.mxu0 %v664
    %v945 = vpop.f32.mrf.mxu0
    %v946 = vadd.f32 %v627, %v945
    %947 = vmatmul.f32.gmra.mxu0 %v665
    %v948 = vpop.f32.mrf.mxu0
    %v949 = vadd.f32 %v627, %v948
    %950 = vdwg.mxu0
    %v951 = vmul.f32 %v801, %v946
    %v952 = vmul.f32 %v816, %v949
    %v953 = vadd.f32 %v923, %v951
    %v954 = vadd.f32 %v926, %v952
    %v955 = vtanh.pop %v953
    %v956 = vtanh.pop %v954
    %v957 = vsub.f32 1.0, %v889
    %v958 = vsub.f32 1.0, %v904
    %v959 = vmul.f32 %v957, %v955
    %v960 = vmul.f32 %v958, %v956
    %v961 = vmul.f32 %v889, %v664
    %v962 = vmul.f32 %v904, %v665
    %v963 = vadd.f32 %v959, %v961
    %v964 = vadd.f32 %v960, %v962
    %s965 = scalar_lea.vmem [#allocation2], 256
    %v966 = vld [vmem:[%s965] sm:$0xff]
    %v967 = vld [vmem:[%s965 + $0x8] sm:$0xff]
    %v968 = vld [vmem:[%s965 + $0x10] sm:$0xff]
    %v969 = vld [vmem:[%s965 + $0x18] sm:$0xff]
    %v970 = vld [vmem:[%s965 + $0x20] sm:$0xff]
    %v971 = vld [vmem:[%s965 + $0x28] sm:$0xff]
    %v972 = vld [vmem:[%s965 + $0x30] sm:$0xff]
    %v973 = vld [vmem:[%s965 + $0x38] sm:$0xff]
    %v974 = vld [vmem:[%s965 + $0x40] sm:$0xff]
    %v975 = vld [vmem:[%s965 + $0x48] sm:$0xff]
    %v976 = vld [vmem:[%s965 + $0x50] sm:$0xff]
    %v977 = vld [vmem:[%s965 + $0x58] sm:$0xff]
    %v978 = vld [vmem:[%s965 + $0x60] sm:$0xff]
    %v979 = vld [vmem:[%s965 + $0x68] sm:$0xff]
    %v980 = vld [vmem:[%s965 + $0x70] sm:$0xff]
    %v981 = vld [vmem:[%s965 + $0x78] sm:$0xff]
    %982 = vmatpush.msra.mxu0 %v981
    %983 = vmatpush.msra.mxu0 %v980
    %984 = vmatpush.msra.mxu0 %v979
    %985 = vmatpush.msra.mxu0 %v978
    %986 = vmatpush.msra.mxu0 %v977
    %987 = vmatpush.msra.mxu0 %v976
    %988 = vmatpush.msra.mxu0 %v975
    %989 = vmatpush.msra.mxu0 %v974
    %990 = vmatpush.msra.mxu0 %v973
    %991 = vmatpush.msra.mxu0 %v972
    %992 = vmatpush.msra.mxu0 %v971
    %993 = vmatpush.msra.mxu0 %v970
    %994 = vmatpush.msra.mxu0 %v969
    %995 = vmatpush.msra.mxu0 %v968
    %996 = vmatpush.msra.mxu0 %v967
    %997 = vmatpush.msra.mxu0 %v966
    %998 = vmatmul.f32.gmra.mxu0 %v963
    %v999 = vpop.f32.mrf.mxu0
    %v1000 = vadd.f32 0.0, %v999
    %1001 = vmatmul.f32.gmra.mxu0 %v964
    %v1002 = vpop.f32.mrf.mxu0
    %v1003 = vadd.f32 0.0, %v1002
    %1004 = vdwg.mxu0
    %1005 = vmatpush.msra.mxu0 0.0
    %1006 = vmatpush.msra.mxu0 0.0
    %1007 = vmatpush.msra.mxu0 0.0
    %1008 = vmatpush.msra.mxu0 0.0
    %1009 = vmatpush.msra.mxu0 0.0
    %1010 = vmatpush.msra.mxu0 0.0
    %1011 = vmatpush.msra.mxu0 0.0
    %1012 = vmatpush.msra.mxu0 0.0
    %1013 = vmatpush.msra.mxu0 0.0
    %1014 = vmatpush.msra.mxu0 0.0
    %1015 = vmatpush.msra.mxu0 0.0
    %1016 = vmatpush.msra.mxu0 0.0
    %1017 = vmatpush.msra.mxu0 0.0
    %1018 = vmatpush.msra.mxu0 0.0
    %1019 = vmatpush.msra.mxu0 %v1003
    %1020 = vmatpush.msra.mxu0 %v1000
    %1021 = vmatmul.f32.gmra.mxu0 %v274
    %v1022 = vpop.f32.mrf.mxu0
    %v1023 = vadd.f32 0.0, %v1022
    %1024 = vmatmul.f32.gmra.mxu0 %v277
    %v1025 = vpop.f32.mrf.mxu0
    %v1026 = vadd.f32 0.0, %v1025
    %1027 = vdwg.mxu0
    %1028 = vmatpush.msra.mxu0 %v317
    %1029 = vmatpush.msra.mxu0 %v316
    %1030 = vmatpush.msra.mxu0 %v315
    %1031 = vmatpush.msra.mxu0 %v314
    %1032 = vmatpush.msra.mxu0 %v313
    %1033 = vmatpush.msra.mxu0 %v312
    %1034 = vmatpush.msra.mxu0 %v311
    %1035 = vmatpush.msra.mxu0 %v310
    %1036 = vmatpush.msra.mxu0 %v309
    %1037 = vmatpush.msra.mxu0 %v308
    %1038 = vmatpush.msra.mxu0 %v307
    %1039 = vmatpush.msra.mxu0 %v306
    %1040 = vmatpush.msra.mxu0 %v305
    %1041 = vmatpush.msra.mxu0 %v304
    %1042 = vmatpush.msra.mxu0 %v303
    %1043 = vmatpush.msra.mxu0 %v302
    %1044 = vmatmul.f32.gmra.mxu0 %v1023
    %v1045 = vpop.f32.mrf.mxu0
    %v1046 = vadd.f32 %v320, %v1045
    %1047 = vmatmul.f32.gmra.mxu0 %v1026
    %v1048 = vpop.f32.mrf.mxu0
    %v1049 = vadd.f32 %v320, %v1048
    %1050 = vdwg.mxu0
    %1051 = vmatpush.msra.mxu0 %v360
    %1052 = vmatpush.msra.mxu0 %v359
    %1053 = vmatpush.msra.mxu0 %v358
    %1054 = vmatpush.msra.mxu0 %v357
    %1055 = vmatpush.msra.mxu0 %v356
    %1056 = vmatpush.msra.mxu0 %v355
    %1057 = vmatpush.msra.mxu0 %v354
    %1058 = vmatpush.msra.mxu0 %v353
    %1059 = vmatpush.msra.mxu0 %v352
    %1060 = vmatpush.msra.mxu0 %v351
    %1061 = vmatpush.msra.mxu0 %v350
    %1062 = vmatpush.msra.mxu0 %v349
    %1063 = vmatpush.msra.mxu0 %v348
    %1064 = vmatpush.msra.mxu0 %v347
    %1065 = vmatpush.msra.mxu0 %v346
    %1066 = vmatpush.msra.mxu0 %v345
    %1067 = vmatmul.f32.gmra.mxu0 %v963
    %v1068 = vpop.f32.mrf.mxu0
    %v1069 = vadd.f32 0.0, %v1068
    %1070 = vmatmul.f32.gmra.mxu0 %v964
    %v1071 = vpop.f32.mrf.mxu0
    %v1072 = vadd.f32 0.0, %v1071
    %1073 = vdwg.mxu0
    %v1074 = vadd.f32 %v1046, %v1069
    %v1075 = vadd.f32 %v1049, %v1072
    %v1076 = vadd.f32 %v1074, %v388
    %v1077 = vadd.f32 %v1075, %v388
    %v1078 = vsub.f32 0.0, %v1076
    %v1079 = vsub.f32 0.0, %v1077
    %v1080 = vmul.f32 %v1078, 1.442695
    %v1081 = vpow.pop %v1080
    %v1082 = vmul.f32 %v1079, 1.442695
    %v1083 = vpow.pop %v1082
    %v1084 = vadd.f32 %v1081, 1.0
    %v1085 = vadd.f32 %v1083, 1.0
    %v1086 = vrcp.pop %v1084
    %v1087 = vmul.f32 %v1084, %v1086
    %v1088 = vsub.f32 1.0, %v1087
    %v1089 = vmul.f32 %v1086, %v1088
    %v1090 = vadd.f32 %v1086, %v1089
    %vm1091 = vweird.f32 %v1084
    %vm1092 = vweird.f32 %v1086
    %vm1093 = vmor %vm1091, %vm1092
    %v1094 = vsel %vm1093, %v1086, %v1090
    %v1095 = vand.u32 2147483647, %v1084
    %vm1096 = vcmp.eq.f32.partialorder %v1095, 8.507059e+37
    %v1097 = vand.u32 %v1084, 2147483648
    %v1098 = vor.u32 1.1754944e-38, %v1097
    %v1099 = vsel %vm1096, %v1098, %v1094
    %v1100 = vmul.f32 1.0, %v1099
    %v1101 = vrcp.pop %v1085
    %v1102 = vmul.f32 %v1085, %v1101
    %v1103 = vsub.f32 1.0, %v1102
    %v1104 = vmul.f32 %v1101, %v1103
    %v1105 = vadd.f32 %v1101, %v1104
    %vm1106 = vweird.f32 %v1085
    %vm1107 = vweird.f32 %v1101
    %vm1108 = vmor %vm1106, %vm1107
    %v1109 = vsel %vm1108, %v1101, %v1105
    %v1110 = vand.u32 2147483647, %v1085
    %vm1111 = vcmp.eq.f32.partialorder %v1110, 8.507059e+37
    %v1112 = vand.u32 %v1085, 2147483648
    %v1113 = vor.u32 1.1754944e-38, %v1112
    %v1114 = vsel %vm1111, %v1113, %v1109
    %v1115 = vmul.f32 1.0, %v1114
    %1116 = vmatpush.msra.mxu0 %v446
    %1117 = vmatpush.msra.mxu0 %v445
    %1118 = vmatpush.msra.mxu0 %v444
    %1119 = vmatpush.msra.mxu0 %v443
    %1120 = vmatpush.msra.mxu0 %v442
    %1121 = vmatpush.msra.mxu0 %v441
    %1122 = vmatpush.msra.mxu0 %v440
    %1123 = vmatpush.msra.mxu0 %v439
    %1124 = vmatpush.msra.mxu0 %v438
    %1125 = vmatpush.msra.mxu0 %v437
    %1126 = vmatpush.msra.mxu0 %v436
    %1127 = vmatpush.msra.mxu0 %v435
    %1128 = vmatpush.msra.mxu0 %v434
    %1129 = vmatpush.msra.mxu0 %v433
    %1130 = vmatpush.msra.mxu0 %v432
    %1131 = vmatpush.msra.mxu0 %v431
    %1132 = vmatmul.f32.gmra.mxu0 %v1023
    %v1133 = vpop.f32.mrf.mxu0
    %v1134 = vadd.f32 %v450, %v1133
    %1135 = vmatmul.f32.gmra.mxu0 %v1026
    %v1136 = vpop.f32.mrf.mxu0
    %v1137 = vadd.f32 %v450, %v1136
    %1138 = vdwg.mxu0
    %1139 = vmatpush.msra.mxu0 %v491
    %1140 = vmatpush.msra.mxu0 %v490
    %1141 = vmatpush.msra.mxu0 %v489
    %1142 = vmatpush.msra.mxu0 %v488
    %1143 = vmatpush.msra.mxu0 %v487
    %1144 = vmatpush.msra.mxu0 %v486
    %1145 = vmatpush.msra.mxu0 %v485
    %1146 = vmatpush.msra.mxu0 %v484
    %1147 = vmatpush.msra.mxu0 %v483
    %1148 = vmatpush.msra.mxu0 %v482
    %1149 = vmatpush.msra.mxu0 %v481
    %1150 = vmatpush.msra.mxu0 %v480
    %1151 = vmatpush.msra.mxu0 %v479
    %1152 = vmatpush.msra.mxu0 %v478
    %1153 = vmatpush.msra.mxu0 %v477
    %1154 = vmatpush.msra.mxu0 %v476
    %1155 = vmatmul.f32.gmra.mxu0 %v963
    %v1156 = vpop.f32.mrf.mxu0
    %v1157 = vadd.f32 0.0, %v1156
    %1158 = vmatmul.f32.gmra.mxu0 %v964
    %v1159 = vpop.f32.mrf.mxu0
    %v1160 = vadd.f32 0.0, %v1159
    %1161 = vdwg.mxu0
    %v1162 = vadd.f32 %v1134, %v1157
    %v1163 = vadd.f32 %v1137, %v1160
    %v1164 = vadd.f32 %v1162, %v520
    %v1165 = vadd.f32 %v1163, %v520
    %v1166 = vsub.f32 0.0, %v1164
    %v1167 = vsub.f32 0.0, %v1165
    %v1168 = vmul.f32 %v1166, 1.442695
    %v1169 = vpow.pop %v1168
    %v1170 = vmul.f32 %v1167, 1.442695
    %v1171 = vpow.pop %v1170
    %v1172 = vadd.f32 %v1169, 1.0
    %v1173 = vadd.f32 %v1171, 1.0
    %v1174 = vrcp.pop %v1172
    %v1175 = vmul.f32 %v1172, %v1174
    %v1176 = vsub.f32 1.0, %v1175
    %v1177 = vmul.f32 %v1174, %v1176
    %v1178 = vadd.f32 %v1174, %v1177
    %vm1179 = vweird.f32 %v1172
    %vm1180 = vweird.f32 %v1174
    %vm1181 = vmor %vm1179, %vm1180
    %v1182 = vsel %vm1181, %v1174, %v1178
    %v1183 = vand.u32 2147483647, %v1172
    %vm1184 = vcmp.eq.f32.partialorder %v1183, 8.507059e+37
    %v1185 = vand.u32 %v1172, 2147483648
    %v1186 = vor.u32 1.1754944e-38, %v1185
    %v1187 = vsel %vm1184, %v1186, %v1182
    %v1188 = vmul.f32 1.0, %v1187
    %v1189 = vrcp.pop %v1173
    %v1190 = vmul.f32 %v1173, %v1189
    %v1191 = vsub.f32 1.0, %v1190
    %v1192 = vmul.f32 %v1189, %v1191
    %v1193 = vadd.f32 %v1189, %v1192
    %vm1194 = vweird.f32 %v1173
    %vm1195 = vweird.f32 %v1189
    %vm1196 = vmor %vm1194, %vm1195
    %v1197 = vsel %vm1196, %v1189, %v1193
    %v1198 = vand.u32 2147483647, %v1173
    %vm1199 = vcmp.eq.f32.partialorder %v1198, 8.507059e+37
    %v1200 = vand.u32 %v1173, 2147483648
    %v1201 = vor.u32 1.1754944e-38, %v1200
    %v1202 = vsel %vm1199, %v1201, %v1197
    %v1203 = vmul.f32 1.0, %v1202
    %1204 = vmatpush.msra.mxu0 %v578
    %1205 = vmatpush.msra.mxu0 %v577
    %1206 = vmatpush.msra.mxu0 %v576
    %1207 = vmatpush.msra.mxu0 %v575
    %1208 = vmatpush.msra.mxu0 %v574
    %1209 = vmatpush.msra.mxu0 %v573
    %1210 = vmatpush.msra.mxu0 %v572
    %1211 = vmatpush.msra.mxu0 %v571
    %1212 = vmatpush.msra.mxu0 %v570
    %1213 = vmatpush.msra.mxu0 %v569
    %1214 = vmatpush.msra.mxu0 %v568
    %1215 = vmatpush.msra.mxu0 %v567
    %1216 = vmatpush.msra.mxu0 %v566
    %1217 = vmatpush.msra.mxu0 %v565
    %1218 = vmatpush.msra.mxu0 %v564
    %1219 = vmatpush.msra.mxu0 %v563
    %1220 = vmatmul.f32.gmra.mxu0 %v1023
    %v1221 = vpop.f32.mrf.mxu0
    %v1222 = vadd.f32 %v582, %v1221
    %1223 = vmatmul.f32.gmra.mxu0 %v1026
    %v1224 = vpop.f32.mrf.mxu0
    %v1225 = vadd.f32 %v582, %v1224
    %1226 = vdwg.mxu0
    %1227 = vmatpush.msra.mxu0 %v623
    %1228 = vmatpush.msra.mxu0 %v622
    %1229 = vmatpush.msra.mxu0 %v621
    %1230 = vmatpush.msra.mxu0 %v620
    %1231 = vmatpush.msra.mxu0 %v619
    %1232 = vmatpush.msra.mxu0 %v618
    %1233 = vmatpush.msra.mxu0 %v617
    %1234 = vmatpush.msra.mxu0 %v616
    %1235 = vmatpush.msra.mxu0 %v615
    %1236 = vmatpush.msra.mxu0 %v614
    %1237 = vmatpush.msra.mxu0 %v613
    %1238 = vmatpush.msra.mxu0 %v612
    %1239 = vmatpush.msra.mxu0 %v611
    %1240 = vmatpush.msra.mxu0 %v610
    %1241 = vmatpush.msra.mxu0 %v609
    %1242 = vmatpush.msra.mxu0 %v608
    %1243 = vmatmul.f32.gmra.mxu0 %v963
    %v1244 = vpop.f32.mrf.mxu0
    %v1245 = vadd.f32 %v627, %v1244
    %1246 = vmatmul.f32.gmra.mxu0 %v964
    %v1247 = vpop.f32.mrf.mxu0
    %v1248 = vadd.f32 %v627, %v1247
    %1249 = vdwg.mxu0
    %v1250 = vmul.f32 %v1100, %v1245
    %v1251 = vmul.f32 %v1115, %v1248
    %v1252 = vadd.f32 %v1222, %v1250
    %v1253 = vadd.f32 %v1225, %v1251
    %v1254 = vtanh.pop %v1252
    %v1255 = vtanh.pop %v1253
    %v1256 = vsub.f32 1.0, %v1188
    %v1257 = vsub.f32 1.0, %v1203
    %v1258 = vmul.f32 %v1256, %v1254
    %v1259 = vmul.f32 %v1257, %v1255
    %v1260 = vmul.f32 %v1188, %v963
    %v1261 = vmul.f32 %v1203, %v964
    %v1262 = vadd.f32 %v1258, %v1260
    %v1263 = vadd.f32 %v1259, %v1261
    %s1264 = scalar_lea.vmem [#allocation2], 384
    %v1265 = vld [vmem:[%s1264] sm:$0xff]
    %v1266 = vld [vmem:[%s1264 + $0x8] sm:$0xff]
    %v1267 = vld [vmem:[%s1264 + $0x10] sm:$0xff]
    %v1268 = vld [vmem:[%s1264 + $0x18] sm:$0xff]
    %v1269 = vld [vmem:[%s1264 + $0x20] sm:$0xff]
    %v1270 = vld [vmem:[%s1264 + $0x28] sm:$0xff]
    %v1271 = vld [vmem:[%s1264 + $0x30] sm:$0xff]
    %v1272 = vld [vmem:[%s1264 + $0x38] sm:$0xff]
    %v1273 = vld [vmem:[%s1264 + $0x40] sm:$0xff]
    %v1274 = vld [vmem:[%s1264 + $0x48] sm:$0xff]
    %v1275 = vld [vmem:[%s1264 + $0x50] sm:$0xff]
    %v1276 = vld [vmem:[%s1264 + $0x58] sm:$0xff]
    %v1277 = vld [vmem:[%s1264 + $0x60] sm:$0xff]
    %v1278 = vld [vmem:[%s1264 + $0x68] sm:$0xff]
    %v1279 = vld [vmem:[%s1264 + $0x70] sm:$0xff]
    %v1280 = vld [vmem:[%s1264 + $0x78] sm:$0xff]
    %1281 = vmatpush.msra.mxu0 %v1280
    %1282 = vmatpush.msra.mxu0 %v1279
    %1283 = vmatpush.msra.mxu0 %v1278
    %1284 = vmatpush.msra.mxu0 %v1277
    %1285 = vmatpush.msra.mxu0 %v1276
    %1286 = vmatpush.msra.mxu0 %v1275
    %1287 = vmatpush.msra.mxu0 %v1274
    %1288 = vmatpush.msra.mxu0 %v1273
    %1289 = vmatpush.msra.mxu0 %v1272
    %1290 = vmatpush.msra.mxu0 %v1271
    %1291 = vmatpush.msra.mxu0 %v1270
    %1292 = vmatpush.msra.mxu0 %v1269
    %1293 = vmatpush.msra.mxu0 %v1268
    %1294 = vmatpush.msra.mxu0 %v1267
    %1295 = vmatpush.msra.mxu0 %v1266
    %1296 = vmatpush.msra.mxu0 %v1265
    %1297 = vmatmul.f32.gmra.mxu0 %v1262
    %v1298 = vpop.f32.mrf.mxu0
    %v1299 = vadd.f32 0.0, %v1298
    %1300 = vmatmul.f32.gmra.mxu0 %v1263
    %v1301 = vpop.f32.mrf.mxu0
    %v1302 = vadd.f32 0.0, %v1301
    %1303 = vdwg.mxu0
    %1304 = vmatpush.msra.mxu0 0.0
    %1305 = vmatpush.msra.mxu0 0.0
    %1306 = vmatpush.msra.mxu0 0.0
    %1307 = vmatpush.msra.mxu0 0.0
    %1308 = vmatpush.msra.mxu0 0.0
    %1309 = vmatpush.msra.mxu0 0.0
    %1310 = vmatpush.msra.mxu0 0.0
    %1311 = vmatpush.msra.mxu0 0.0
    %1312 = vmatpush.msra.mxu0 0.0
    %1313 = vmatpush.msra.mxu0 0.0
    %1314 = vmatpush.msra.mxu0 0.0
    %1315 = vmatpush.msra.mxu0 0.0
    %1316 = vmatpush.msra.mxu0 0.0
    %1317 = vmatpush.msra.mxu0 0.0
    %1318 = vmatpush.msra.mxu0 %v1302
    %1319 = vmatpush.msra.mxu0 %v1299
    %1320 = vmatmul.f32.gmra.mxu0 %v274
    %v1321 = vpop.f32.mrf.mxu0
    %v1322 = vadd.f32 0.0, %v1321
    %1323 = vmatmul.f32.gmra.mxu0 %v277
    %v1324 = vpop.f32.mrf.mxu0
    %v1325 = vadd.f32 0.0, %v1324
    %1326 = vdwg.mxu0
    %1327 = vmatpush.msra.mxu0 %v317
    %1328 = vmatpush.msra.mxu0 %v316
    %1329 = vmatpush.msra.mxu0 %v315
    %1330 = vmatpush.msra.mxu0 %v314
    %1331 = vmatpush.msra.mxu0 %v313
    %1332 = vmatpush.msra.mxu0 %v312
    %1333 = vmatpush.msra.mxu0 %v311
    %1334 = vmatpush.msra.mxu0 %v310
    %1335 = vmatpush.msra.mxu0 %v309
    %1336 = vmatpush.msra.mxu0 %v308
    %1337 = vmatpush.msra.mxu0 %v307
    %1338 = vmatpush.msra.mxu0 %v306
    %1339 = vmatpush.msra.mxu0 %v305
    %1340 = vmatpush.msra.mxu0 %v304
    %1341 = vmatpush.msra.mxu0 %v303
    %1342 = vmatpush.msra.mxu0 %v302
    %1343 = vmatmul.f32.gmra.mxu0 %v1322
    %v1344 = vpop.f32.mrf.mxu0
    %v1345 = vadd.f32 %v320, %v1344
    %1346 = vmatmul.f32.gmra.mxu0 %v1325
    %v1347 = vpop.f32.mrf.mxu0
    %v1348 = vadd.f32 %v320, %v1347
    %1349 = vdwg.mxu0
    %1350 = vmatpush.msra.mxu0 %v360
    %1351 = vmatpush.msra.mxu0 %v359
    %1352 = vmatpush.msra.mxu0 %v358
    %1353 = vmatpush.msra.mxu0 %v357
    %1354 = vmatpush.msra.mxu0 %v356
    %1355 = vmatpush.msra.mxu0 %v355
    %1356 = vmatpush.msra.mxu0 %v354
    %1357 = vmatpush.msra.mxu0 %v353
    %1358 = vmatpush.msra.mxu0 %v352
    %1359 = vmatpush.msra.mxu0 %v351
    %1360 = vmatpush.msra.mxu0 %v350
    %1361 = vmatpush.msra.mxu0 %v349
    %1362 = vmatpush.msra.mxu0 %v348
    %1363 = vmatpush.msra.mxu0 %v347
    %1364 = vmatpush.msra.mxu0 %v346
    %1365 = vmatpush.msra.mxu0 %v345
    %1366 = vmatmul.f32.gmra.mxu0 %v1262
    %v1367 = vpop.f32.mrf.mxu0
    %v1368 = vadd.f32 0.0, %v1367
    %1369 = vmatmul.f32.gmra.mxu0 %v1263
    %v1370 = vpop.f32.mrf.mxu0
    %v1371 = vadd.f32 0.0, %v1370
    %1372 = vdwg.mxu0
    %v1373 = vadd.f32 %v1345, %v1368
    %v1374 = vadd.f32 %v1348, %v1371
    %v1375 = vadd.f32 %v1373, %v388
    %v1376 = vadd.f32 %v1374, %v388
    %v1377 = vsub.f32 0.0, %v1375
    %v1378 = vsub.f32 0.0, %v1376
    %v1379 = vmul.f32 %v1377, 1.442695
    %v1380 = vpow.pop %v1379
    %v1381 = vmul.f32 %v1378, 1.442695
    %v1382 = vpow.pop %v1381
    %v1383 = vadd.f32 %v1380, 1.0
    %v1384 = vadd.f32 %v1382, 1.0
    %v1385 = vrcp.pop %v1383
    %v1386 = vmul.f32 %v1383, %v1385
    %v1387 = vsub.f32 1.0, %v1386
    %v1388 = vmul.f32 %v1385, %v1387
    %v1389 = vadd.f32 %v1385, %v1388
    %vm1390 = vweird.f32 %v1383
    %vm1391 = vweird.f32 %v1385
    %vm1392 = vmor %vm1390, %vm1391
    %v1393 = vsel %vm1392, %v1385, %v1389
    %v1394 = vand.u32 2147483647, %v1383
    %vm1395 = vcmp.eq.f32.partialorder %v1394, 8.507059e+37
    %v1396 = vand.u32 %v1383, 2147483648
    %v1397 = vor.u32 1.1754944e-38, %v1396
    %v1398 = vsel %vm1395, %v1397, %v1393
    %v1399 = vmul.f32 1.0, %v1398
    %v1400 = vrcp.pop %v1384
    %v1401 = vmul.f32 %v1384, %v1400
    %v1402 = vsub.f32 1.0, %v1401
    %v1403 = vmul.f32 %v1400, %v1402
    %v1404 = vadd.f32 %v1400, %v1403
    %vm1405 = vweird.f32 %v1384
    %vm1406 = vweird.f32 %v1400
    %vm1407 = vmor %vm1405, %vm1406
    %v1408 = vsel %vm1407, %v1400, %v1404
    %v1409 = vand.u32 2147483647, %v1384
    %vm1410 = vcmp.eq.f32.partialorder %v1409, 8.507059e+37
    %v1411 = vand.u32 %v1384, 2147483648
    %v1412 = vor.u32 1.1754944e-38, %v1411
    %v1413 = vsel %vm1410, %v1412, %v1408
    %v1414 = vmul.f32 1.0, %v1413
    %1415 = vmatpush.msra.mxu0 %v446
    %1416 = vmatpush.msra.mxu0 %v445
    %1417 = vmatpush.msra.mxu0 %v444
    %1418 = vmatpush.msra.mxu0 %v443
    %1419 = vmatpush.msra.mxu0 %v442
    %1420 = vmatpush.msra.mxu0 %v441
    %1421 = vmatpush.msra.mxu0 %v440
    %1422 = vmatpush.msra.mxu0 %v439
    %1423 = vmatpush.msra.mxu0 %v438
    %1424 = vmatpush.msra.mxu0 %v437
    %1425 = vmatpush.msra.mxu0 %v436
    %1426 = vmatpush.msra.mxu0 %v435
    %1427 = vmatpush.msra.mxu0 %v434
    %1428 = vmatpush.msra.mxu0 %v433
    %1429 = vmatpush.msra.mxu0 %v432
    %1430 = vmatpush.msra.mxu0 %v431
    %1431 = vmatmul.f32.gmra.mxu0 %v1322
    %v1432 = vpop.f32.mrf.mxu0
    %v1433 = vadd.f32 %v450, %v1432
    %1434 = vmatmul.f32.gmra.mxu0 %v1325
    %v1435 = vpop.f32.mrf.mxu0
    %v1436 = vadd.f32 %v450, %v1435
    %1437 = vdwg.mxu0
    %1438 = vmatpush.msra.mxu0 %v491
    %1439 = vmatpush.msra.mxu0 %v490
    %1440 = vmatpush.msra.mxu0 %v489
    %1441 = vmatpush.msra.mxu0 %v488
    %1442 = vmatpush.msra.mxu0 %v487
    %1443 = vmatpush.msra.mxu0 %v486
    %1444 = vmatpush.msra.mxu0 %v485
    %1445 = vmatpush.msra.mxu0 %v484
    %1446 = vmatpush.msra.mxu0 %v483
    %1447 = vmatpush.msra.mxu0 %v482
    %1448 = vmatpush.msra.mxu0 %v481
    %1449 = vmatpush.msra.mxu0 %v480
    %1450 = vmatpush.msra.mxu0 %v479
    %1451 = vmatpush.msra.mxu0 %v478
    %1452 = vmatpush.msra.mxu0 %v477
    %1453 = vmatpush.msra.mxu0 %v476
    %1454 = vmatmul.f32.gmra.mxu0 %v1262
    %v1455 = vpop.f32.mrf.mxu0
    %v1456 = vadd.f32 0.0, %v1455
    %1457 = vmatmul.f32.gmra.mxu0 %v1263
    %v1458 = vpop.f32.mrf.mxu0
    %v1459 = vadd.f32 0.0, %v1458
    %1460 = vdwg.mxu0
    %v1461 = vadd.f32 %v1433, %v1456
    %v1462 = vadd.f32 %v1436, %v1459
    %v1463 = vadd.f32 %v1461, %v520
    %v1464 = vadd.f32 %v1462, %v520
    %v1465 = vsub.f32 0.0, %v1463
    %v1466 = vsub.f32 0.0, %v1464
    %v1467 = vmul.f32 %v1465, 1.442695
    %v1468 = vpow.pop %v1467
    %v1469 = vmul.f32 %v1466, 1.442695
    %v1470 = vpow.pop %v1469
    %v1471 = vadd.f32 %v1468, 1.0
    %v1472 = vadd.f32 %v1470, 1.0
    %v1473 = vrcp.pop %v1471
    %v1474 = vmul.f32 %v1471, %v1473
    %v1475 = vsub.f32 1.0, %v1474
    %v1476 = vmul.f32 %v1473, %v1475
    %v1477 = vadd.f32 %v1473, %v1476
    %vm1478 = vweird.f32 %v1471
    %vm1479 = vweird.f32 %v1473
    %vm1480 = vmor %vm1478, %vm1479
    %v1481 = vsel %vm1480, %v1473, %v1477
    %v1482 = vand.u32 2147483647, %v1471
    %vm1483 = vcmp.eq.f32.partialorder %v1482, 8.507059e+37
    %v1484 = vand.u32 %v1471, 2147483648
    %v1485 = vor.u32 1.1754944e-38, %v1484
    %v1486 = vsel %vm1483, %v1485, %v1481
    %v1487 = vmul.f32 1.0, %v1486
    %v1488 = vrcp.pop %v1472
    %v1489 = vmul.f32 %v1472, %v1488
    %v1490 = vsub.f32 1.0, %v1489
    %v1491 = vmul.f32 %v1488, %v1490
    %v1492 = vadd.f32 %v1488, %v1491
    %vm1493 = vweird.f32 %v1472
    %vm1494 = vweird.f32 %v1488
    %vm1495 = vmor %vm1493, %vm1494
    %v1496 = vsel %vm1495, %v1488, %v1492
    %v1497 = vand.u32 2147483647, %v1472
    %vm1498 = vcmp.eq.f32.partialorder %v1497, 8.507059e+37
    %v1499 = vand.u32 %v1472, 2147483648
    %v1500 = vor.u32 1.1754944e-38, %v1499
    %v1501 = vsel %vm1498, %v1500, %v1496
    %v1502 = vmul.f32 1.0, %v1501
    %1503 = vmatpush.msra.mxu0 %v578
    %1504 = vmatpush.msra.mxu0 %v577
    %1505 = vmatpush.msra.mxu0 %v576
    %1506 = vmatpush.msra.mxu0 %v575
    %1507 = vmatpush.msra.mxu0 %v574
    %1508 = vmatpush.msra.mxu0 %v573
    %1509 = vmatpush.msra.mxu0 %v572
    %1510 = vmatpush.msra.mxu0 %v571
    %1511 = vmatpush.msra.mxu0 %v570
    %1512 = vmatpush.msra.mxu0 %v569
    %1513 = vmatpush.msra.mxu0 %v568
    %1514 = vmatpush.msra.mxu0 %v567
    %1515 = vmatpush.msra.mxu0 %v566
    %1516 = vmatpush.msra.mxu0 %v565
    %1517 = vmatpush.msra.mxu0 %v564
    %1518 = vmatpush.msra.mxu0 %v563
    %1519 = vmatmul.f32.gmra.mxu0 %v1322
    %v1520 = vpop.f32.mrf.mxu0
    %v1521 = vadd.f32 %v582, %v1520
    %1522 = vmatmul.f32.gmra.mxu0 %v1325
    %v1523 = vpop.f32.mrf.mxu0
    %v1524 = vadd.f32 %v582, %v1523
    %1525 = vdwg.mxu0
    %1526 = vmatpush.msra.mxu0 %v623
    %1527 = vmatpush.msra.mxu0 %v622
    %1528 = vmatpush.msra.mxu0 %v621
    %1529 = vmatpush.msra.mxu0 %v620
    %1530 = vmatpush.msra.mxu0 %v619
    %1531 = vmatpush.msra.mxu0 %v618
    %1532 = vmatpush.msra.mxu0 %v617
    %1533 = vmatpush.msra.mxu0 %v616
    %1534 = vmatpush.msra.mxu0 %v615
    %1535 = vmatpush.msra.mxu0 %v614
    %1536 = vmatpush.msra.mxu0 %v613
    %1537 = vmatpush.msra.mxu0 %v612
    %1538 = vmatpush.msra.mxu0 %v611
    %1539 = vmatpush.msra.mxu0 %v610
    %1540 = vmatpush.msra.mxu0 %v609
    %1541 = vmatpush.msra.mxu0 %v608
    %1542 = vmatmul.f32.gmra.mxu0 %v1262
    %v1543 = vpop.f32.mrf.mxu0
    %v1544 = vadd.f32 %v627, %v1543
    %1545 = vmatmul.f32.gmra.mxu0 %v1263
    %v1546 = vpop.f32.mrf.mxu0
    %v1547 = vadd.f32 %v627, %v1546
    %1548 = vdwg.mxu0
    %v1549 = vmul.f32 %v1399, %v1544
    %v1550 = vmul.f32 %v1414, %v1547
    %v1551 = vadd.f32 %v1521, %v1549
    %v1552 = vadd.f32 %v1524, %v1550
    %v1553 = vtanh.pop %v1551
    %v1554 = vtanh.pop %v1552
    %v1555 = vsub.f32 1.0, %v1487
    %v1556 = vsub.f32 1.0, %v1502
    %v1557 = vmul.f32 %v1555, %v1553
    %v1558 = vmul.f32 %v1556, %v1554
    %v1559 = vmul.f32 %v1487, %v1262
    %v1560 = vmul.f32 %v1502, %v1263
    %v1561 = vadd.f32 %v1557, %v1559
    %v1562 = vadd.f32 %v1558, %v1560
    %s1563 = scalar_lea.vmem [#allocation2], 512
    %v1564 = vld [vmem:[%s1563] sm:$0xff]
    %v1565 = vld [vmem:[%s1563 + $0x8] sm:$0xff]
    %v1566 = vld [vmem:[%s1563 + $0x10] sm:$0xff]
    %v1567 = vld [vmem:[%s1563 + $0x18] sm:$0xff]
    %v1568 = vld [vmem:[%s1563 + $0x20] sm:$0xff]
    %v1569 = vld [vmem:[%s1563 + $0x28] sm:$0xff]
    %v1570 = vld [vmem:[%s1563 + $0x30] sm:$0xff]
    %v1571 = vld [vmem:[%s1563 + $0x38] sm:$0xff]
    %v1572 = vld [vmem:[%s1563 + $0x40] sm:$0xff]
    %v1573 = vld [vmem:[%s1563 + $0x48] sm:$0xff]
    %v1574 = vld [vmem:[%s1563 + $0x50] sm:$0xff]
    %v1575 = vld [vmem:[%s1563 + $0x58] sm:$0xff]
    %v1576 = vld [vmem:[%s1563 + $0x60] sm:$0xff]
    %v1577 = vld [vmem:[%s1563 + $0x68] sm:$0xff]
    %v1578 = vld [vmem:[%s1563 + $0x70] sm:$0xff]
    %v1579 = vld [vmem:[%s1563 + $0x78] sm:$0xff]
    %1580 = vmatpush.msra.mxu0 %v1579
    %1581 = vmatpush.msra.mxu0 %v1578
    %1582 = vmatpush.msra.mxu0 %v1577
    %1583 = vmatpush.msra.mxu0 %v1576
    %1584 = vmatpush.msra.mxu0 %v1575
    %1585 = vmatpush.msra.mxu0 %v1574
    %1586 = vmatpush.msra.mxu0 %v1573
    %1587 = vmatpush.msra.mxu0 %v1572
    %1588 = vmatpush.msra.mxu0 %v1571
    %1589 = vmatpush.msra.mxu0 %v1570
    %1590 = vmatpush.msra.mxu0 %v1569
    %1591 = vmatpush.msra.mxu0 %v1568
    %1592 = vmatpush.msra.mxu0 %v1567
    %1593 = vmatpush.msra.mxu0 %v1566
    %1594 = vmatpush.msra.mxu0 %v1565
    %1595 = vmatpush.msra.mxu0 %v1564
    %1596 = vmatmul.f32.gmra.mxu0 %v1561
    %v1597 = vpop.f32.mrf.mxu0
    %v1598 = vadd.f32 0.0, %v1597
    %1599 = vmatmul.f32.gmra.mxu0 %v1562
    %v1600 = vpop.f32.mrf.mxu0
    %v1601 = vadd.f32 0.0, %v1600
    %1602 = vdwg.mxu0
    %1603 = vmatpush.msra.mxu0 0.0
    %1604 = vmatpush.msra.mxu0 0.0
    %1605 = vmatpush.msra.mxu0 0.0
    %1606 = vmatpush.msra.mxu0 0.0
    %1607 = vmatpush.msra.mxu0 0.0
    %1608 = vmatpush.msra.mxu0 0.0
    %1609 = vmatpush.msra.mxu0 0.0
    %1610 = vmatpush.msra.mxu0 0.0
    %1611 = vmatpush.msra.mxu0 0.0
    %1612 = vmatpush.msra.mxu0 0.0
    %1613 = vmatpush.msra.mxu0 0.0
    %1614 = vmatpush.msra.mxu0 0.0
    %1615 = vmatpush.msra.mxu0 0.0
    %1616 = vmatpush.msra.mxu0 0.0
    %1617 = vmatpush.msra.mxu0 %v1601
    %1618 = vmatpush.msra.mxu0 %v1598
    %1619 = vmatmul.f32.gmra.mxu0 %v274
    %v1620 = vpop.f32.mrf.mxu0
    %v1621 = vadd.f32 0.0, %v1620
    %1622 = vmatmul.f32.gmra.mxu0 %v277
    %v1623 = vpop.f32.mrf.mxu0
    %v1624 = vadd.f32 0.0, %v1623
    %1625 = vdwg.mxu0
    %1626 = vmatpush.msra.mxu0 %v317
    %1627 = vmatpush.msra.mxu0 %v316
    %1628 = vmatpush.msra.mxu0 %v315
    %1629 = vmatpush.msra.mxu0 %v314
    %1630 = vmatpush.msra.mxu0 %v313
    %1631 = vmatpush.msra.mxu0 %v312
    %1632 = vmatpush.msra.mxu0 %v311
    %1633 = vmatpush.msra.mxu0 %v310
    %1634 = vmatpush.msra.mxu0 %v309
    %1635 = vmatpush.msra.mxu0 %v308
    %1636 = vmatpush.msra.mxu0 %v307
    %1637 = vmatpush.msra.mxu0 %v306
    %1638 = vmatpush.msra.mxu0 %v305
    %1639 = vmatpush.msra.mxu0 %v304
    %1640 = vmatpush.msra.mxu0 %v303
    %1641 = vmatpush.msra.mxu0 %v302
    %1642 = vmatmul.f32.gmra.mxu0 %v1621
    %v1643 = vpop.f32.mrf.mxu0
    %v1644 = vadd.f32 %v320, %v1643
    %1645 = vmatmul.f32.gmra.mxu0 %v1624
    %v1646 = vpop.f32.mrf.mxu0
    %v1647 = vadd.f32 %v320, %v1646
    %1648 = vdwg.mxu0
    %1649 = vmatpush.msra.mxu0 %v360
    %1650 = vmatpush.msra.mxu0 %v359
    %1651 = vmatpush.msra.mxu0 %v358
    %1652 = vmatpush.msra.mxu0 %v357
    %1653 = vmatpush.msra.mxu0 %v356
    %1654 = vmatpush.msra.mxu0 %v355
    %1655 = vmatpush.msra.mxu0 %v354
    %1656 = vmatpush.msra.mxu0 %v353
    %1657 = vmatpush.msra.mxu0 %v352
    %1658 = vmatpush.msra.mxu0 %v351
    %1659 = vmatpush.msra.mxu0 %v350
    %1660 = vmatpush.msra.mxu0 %v349
    %1661 = vmatpush.msra.mxu0 %v348
    %1662 = vmatpush.msra.mxu0 %v347
    %1663 = vmatpush.msra.mxu0 %v346
    %1664 = vmatpush.msra.mxu0 %v345
    %1665 = vmatmul.f32.gmra.mxu0 %v1561
    %v1666 = vpop.f32.mrf.mxu0
    %v1667 = vadd.f32 0.0, %v1666
    %1668 = vmatmul.f32.gmra.mxu0 %v1562
    %v1669 = vpop.f32.mrf.mxu0
    %v1670 = vadd.f32 0.0, %v1669
    %1671 = vdwg.mxu0
    %v1672 = vadd.f32 %v1644, %v1667
    %v1673 = vadd.f32 %v1647, %v1670
    %v1674 = vadd.f32 %v1672, %v388
    %v1675 = vadd.f32 %v1673, %v388
    %v1676 = vsub.f32 0.0, %v1674
    %v1677 = vsub.f32 0.0, %v1675
    %v1678 = vmul.f32 %v1676, 1.442695
    %v1679 = vpow.pop %v1678
    %v1680 = vmul.f32 %v1677, 1.442695
    %v1681 = vpow.pop %v1680
    %v1682 = vadd.f32 %v1679, 1.0
    %v1683 = vadd.f32 %v1681, 1.0
    %v1684 = vrcp.pop %v1682
    %v1685 = vmul.f32 %v1682, %v1684
    %v1686 = vsub.f32 1.0, %v1685
    %v1687 = vmul.f32 %v1684, %v1686
    %v1688 = vadd.f32 %v1684, %v1687
    %vm1689 = vweird.f32 %v1682
    %vm1690 = vweird.f32 %v1684
    %vm1691 = vmor %vm1689, %vm1690
    %v1692 = vsel %vm1691, %v1684, %v1688
    %v1693 = vand.u32 2147483647, %v1682
    %vm1694 = vcmp.eq.f32.partialorder %v1693, 8.507059e+37
    %v1695 = vand.u32 %v1682, 2147483648
    %v1696 = vor.u32 1.1754944e-38, %v1695
    %v1697 = vsel %vm1694, %v1696, %v1692
    %v1698 = vmul.f32 1.0, %v1697
    %v1699 = vrcp.pop %v1683
    %v1700 = vmul.f32 %v1683, %v1699
    %v1701 = vsub.f32 1.0, %v1700
    %v1702 = vmul.f32 %v1699, %v1701
    %v1703 = vadd.f32 %v1699, %v1702
    %vm1704 = vweird.f32 %v1683
    %vm1705 = vweird.f32 %v1699
    %vm1706 = vmor %vm1704, %vm1705
    %v1707 = vsel %vm1706, %v1699, %v1703
    %v1708 = vand.u32 2147483647, %v1683
    %vm1709 = vcmp.eq.f32.partialorder %v1708, 8.507059e+37
    %v1710 = vand.u32 %v1683, 2147483648
    %v1711 = vor.u32 1.1754944e-38, %v1710
    %v1712 = vsel %vm1709, %v1711, %v1707
    %v1713 = vmul.f32 1.0, %v1712
    %1714 = vmatpush.msra.mxu0 %v446
    %1715 = vmatpush.msra.mxu0 %v445
    %1716 = vmatpush.msra.mxu0 %v444
    %1717 = vmatpush.msra.mxu0 %v443
    %1718 = vmatpush.msra.mxu0 %v442
    %1719 = vmatpush.msra.mxu0 %v441
    %1720 = vmatpush.msra.mxu0 %v440
    %1721 = vmatpush.msra.mxu0 %v439
    %1722 = vmatpush.msra.mxu0 %v438
    %1723 = vmatpush.msra.mxu0 %v437
    %1724 = vmatpush.msra.mxu0 %v436
    %1725 = vmatpush.msra.mxu0 %v435
    %1726 = vmatpush.msra.mxu0 %v434
    %1727 = vmatpush.msra.mxu0 %v433
    %1728 = vmatpush.msra.mxu0 %v432
    %1729 = vmatpush.msra.mxu0 %v431
    %1730 = vmatmul.f32.gmra.mxu0 %v1621
    %v1731 = vpop.f32.mrf.mxu0
    %v1732 = vadd.f32 %v450, %v1731
    %1733 = vmatmul.f32.gmra.mxu0 %v1624
    %v1734 = vpop.f32.mrf.mxu0
    %v1735 = vadd.f32 %v450, %v1734
    %1736 = vdwg.mxu0
    %1737 = vmatpush.msra.mxu0 %v491
    %1738 = vmatpush.msra.mxu0 %v490
    %1739 = vmatpush.msra.mxu0 %v489
    %1740 = vmatpush.msra.mxu0 %v488
    %1741 = vmatpush.msra.mxu0 %v487
    %1742 = vmatpush.msra.mxu0 %v486
    %1743 = vmatpush.msra.mxu0 %v485
    %1744 = vmatpush.msra.mxu0 %v484
    %1745 = vmatpush.msra.mxu0 %v483
    %1746 = vmatpush.msra.mxu0 %v482
    %1747 = vmatpush.msra.mxu0 %v481
    %1748 = vmatpush.msra.mxu0 %v480
    %1749 = vmatpush.msra.mxu0 %v479
    %1750 = vmatpush.msra.mxu0 %v478
    %1751 = vmatpush.msra.mxu0 %v477
    %1752 = vmatpush.msra.mxu0 %v476
    %1753 = vmatmul.f32.gmra.mxu0 %v1561
    %v1754 = vpop.f32.mrf.mxu0
    %v1755 = vadd.f32 0.0, %v1754
    %1756 = vmatmul.f32.gmra.mxu0 %v1562
    %v1757 = vpop.f32.mrf.mxu0
    %v1758 = vadd.f32 0.0, %v1757
    %1759 = vdwg.mxu0
    %v1760 = vadd.f32 %v1732, %v1755
    %v1761 = vadd.f32 %v1735, %v1758
    %v1762 = vadd.f32 %v1760, %v520
    %v1763 = vadd.f32 %v1761, %v520
    %v1764 = vsub.f32 0.0, %v1762
    %v1765 = vsub.f32 0.0, %v1763
    %v1766 = vmul.f32 %v1764, 1.442695
    %v1767 = vpow.pop %v1766
    %v1768 = vmul.f32 %v1765, 1.442695
    %v1769 = vpow.pop %v1768
    %v1770 = vadd.f32 %v1767, 1.0
    %v1771 = vadd.f32 %v1769, 1.0
    %v1772 = vrcp.pop %v1770
    %v1773 = vmul.f32 %v1770, %v1772
    %v1774 = vsub.f32 1.0, %v1773
    %v1775 = vmul.f32 %v1772, %v1774
    %v1776 = vadd.f32 %v1772, %v1775
    %vm1777 = vweird.f32 %v1770
    %vm1778 = vweird.f32 %v1772
    %vm1779 = vmor %vm1777, %vm1778
    %v1780 = vsel %vm1779, %v1772, %v1776
    %v1781 = vand.u32 2147483647, %v1770
    %vm1782 = vcmp.eq.f32.partialorder %v1781, 8.507059e+37
    %v1783 = vand.u32 %v1770, 2147483648
    %v1784 = vor.u32 1.1754944e-38, %v1783
    %v1785 = vsel %vm1782, %v1784, %v1780
    %v1786 = vmul.f32 1.0, %v1785
    %v1787 = vrcp.pop %v1771
    %v1788 = vmul.f32 %v1771, %v1787
    %v1789 = vsub.f32 1.0, %v1788
    %v1790 = vmul.f32 %v1787, %v1789
    %v1791 = vadd.f32 %v1787, %v1790
    %vm1792 = vweird.f32 %v1771
    %vm1793 = vweird.f32 %v1787
    %vm1794 = vmor %vm1792, %vm1793
    %v1795 = vsel %vm1794, %v1787, %v1791
    %v1796 = vand.u32 2147483647, %v1771
    %vm1797 = vcmp.eq.f32.partialorder %v1796, 8.507059e+37
    %v1798 = vand.u32 %v1771, 2147483648
    %v1799 = vor.u32 1.1754944e-38, %v1798
    %v1800 = vsel %vm1797, %v1799, %v1795
    %v1801 = vmul.f32 1.0, %v1800
    %1802 = vmatpush.msra.mxu0 %v578
    %1803 = vmatpush.msra.mxu0 %v577
    %1804 = vmatpush.msra.mxu0 %v576
    %1805 = vmatpush.msra.mxu0 %v575
    %1806 = vmatpush.msra.mxu0 %v574
    %1807 = vmatpush.msra.mxu0 %v573
    %1808 = vmatpush.msra.mxu0 %v572
    %1809 = vmatpush.msra.mxu0 %v571
    %1810 = vmatpush.msra.mxu0 %v570
    %1811 = vmatpush.msra.mxu0 %v569
    %1812 = vmatpush.msra.mxu0 %v568
    %1813 = vmatpush.msra.mxu0 %v567
    %1814 = vmatpush.msra.mxu0 %v566
    %1815 = vmatpush.msra.mxu0 %v565
    %1816 = vmatpush.msra.mxu0 %v564
    %1817 = vmatpush.msra.mxu0 %v563
    %1818 = vmatmul.f32.gmra.mxu0 %v1621
    %v1819 = vpop.f32.mrf.mxu0
    %v1820 = vadd.f32 %v582, %v1819
    %1821 = vmatmul.f32.gmra.mxu0 %v1624
    %v1822 = vpop.f32.mrf.mxu0
    %v1823 = vadd.f32 %v582, %v1822
    %1824 = vdwg.mxu0
    %1825 = vmatpush.msra.mxu0 %v623
    %1826 = vmatpush.msra.mxu0 %v622
    %1827 = vmatpush.msra.mxu0 %v621
    %1828 = vmatpush.msra.mxu0 %v620
    %1829 = vmatpush.msra.mxu0 %v619
    %1830 = vmatpush.msra.mxu0 %v618
    %1831 = vmatpush.msra.mxu0 %v617
    %1832 = vmatpush.msra.mxu0 %v616
    %1833 = vmatpush.msra.mxu0 %v615
    %1834 = vmatpush.msra.mxu0 %v614
    %1835 = vmatpush.msra.mxu0 %v613
    %1836 = vmatpush.msra.mxu0 %v612
    %1837 = vmatpush.msra.mxu0 %v611
    %1838 = vmatpush.msra.mxu0 %v610
    %1839 = vmatpush.msra.mxu0 %v609
    %1840 = vmatpush.msra.mxu0 %v608
    %1841 = vmatmul.f32.gmra.mxu0 %v1561
    %v1842 = vpop.f32.mrf.mxu0
    %v1843 = vadd.f32 %v627, %v1842
    %1844 = vmatmul.f32.gmra.mxu0 %v1562
    %v1845 = vpop.f32.mrf.mxu0
    %v1846 = vadd.f32 %v627, %v1845
    %1847 = vdwg.mxu0
    %v1848 = vmul.f32 %v1698, %v1843
    %v1849 = vmul.f32 %v1713, %v1846
    %v1850 = vadd.f32 %v1820, %v1848
    %v1851 = vadd.f32 %v1823, %v1849
    %v1852 = vtanh.pop %v1850
    %v1853 = vtanh.pop %v1851
    %v1854 = vsub.f32 1.0, %v1786
    %v1855 = vsub.f32 1.0, %v1801
    %v1856 = vmul.f32 %v1854, %v1852
    %v1857 = vmul.f32 %v1855, %v1853
    %v1858 = vmul.f32 %v1786, %v1561
    %v1859 = vmul.f32 %v1801, %v1562
    %v1860 = vadd.f32 %v1856, %v1858
    %v1861 = vadd.f32 %v1857, %v1859
    %s1862 = scalar_lea.vmem [#allocation2], 640
    %v1863 = vld [vmem:[%s1862] sm:$0xff]
    %v1864 = vld [vmem:[%s1862 + $0x8] sm:$0xff]
    %v1865 = vld [vmem:[%s1862 + $0x10] sm:$0xff]
    %v1866 = vld [vmem:[%s1862 + $0x18] sm:$0xff]
    %v1867 = vld [vmem:[%s1862 + $0x20] sm:$0xff]
    %v1868 = vld [vmem:[%s1862 + $0x28] sm:$0xff]
    %v1869 = vld [vmem:[%s1862 + $0x30] sm:$0xff]
    %v1870 = vld [vmem:[%s1862 + $0x38] sm:$0xff]
    %v1871 = vld [vmem:[%s1862 + $0x40] sm:$0xff]
    %v1872 = vld [vmem:[%s1862 + $0x48] sm:$0xff]
    %v1873 = vld [vmem:[%s1862 + $0x50] sm:$0xff]
    %v1874 = vld [vmem:[%s1862 + $0x58] sm:$0xff]
    %v1875 = vld [vmem:[%s1862 + $0x60] sm:$0xff]
    %v1876 = vld [vmem:[%s1862 + $0x68] sm:$0xff]
    %v1877 = vld [vmem:[%s1862 + $0x70] sm:$0xff]
    %v1878 = vld [vmem:[%s1862 + $0x78] sm:$0xff]
    %1879 = vmatpush.msra.mxu0 %v1878
    %1880 = vmatpush.msra.mxu0 %v1877
    %1881 = vmatpush.msra.mxu0 %v1876
    %1882 = vmatpush.msra.mxu0 %v1875
    %1883 = vmatpush.msra.mxu0 %v1874
    %1884 = vmatpush.msra.mxu0 %v1873
    %1885 = vmatpush.msra.mxu0 %v1872
    %1886 = vmatpush.msra.mxu0 %v1871
    %1887 = vmatpush.msra.mxu0 %v1870
    %1888 = vmatpush.msra.mxu0 %v1869
    %1889 = vmatpush.msra.mxu0 %v1868
    %1890 = vmatpush.msra.mxu0 %v1867
    %1891 = vmatpush.msra.mxu0 %v1866
    %1892 = vmatpush.msra.mxu0 %v1865
    %1893 = vmatpush.msra.mxu0 %v1864
    %1894 = vmatpush.msra.mxu0 %v1863
    %1895 = vmatmul.f32.gmra.mxu0 %v1860
    %v1896 = vpop.f32.mrf.mxu0
    %v1897 = vadd.f32 0.0, %v1896
    %1898 = vmatmul.f32.gmra.mxu0 %v1861
    %v1899 = vpop.f32.mrf.mxu0
    %v1900 = vadd.f32 0.0, %v1899
    %1901 = vdwg.mxu0
    %1902 = vmatpush.msra.mxu0 0.0
    %1903 = vmatpush.msra.mxu0 0.0
    %1904 = vmatpush.msra.mxu0 0.0
    %1905 = vmatpush.msra.mxu0 0.0
    %1906 = vmatpush.msra.mxu0 0.0
    %1907 = vmatpush.msra.mxu0 0.0
    %1908 = vmatpush.msra.mxu0 0.0
    %1909 = vmatpush.msra.mxu0 0.0
    %1910 = vmatpush.msra.mxu0 0.0
    %1911 = vmatpush.msra.mxu0 0.0
    %1912 = vmatpush.msra.mxu0 0.0
    %1913 = vmatpush.msra.mxu0 0.0
    %1914 = vmatpush.msra.mxu0 0.0
    %1915 = vmatpush.msra.mxu0 0.0
    %1916 = vmatpush.msra.mxu0 %v1900
    %1917 = vmatpush.msra.mxu0 %v1897
    %1918 = vmatmul.f32.gmra.mxu0 %v274
    %v1919 = vpop.f32.mrf.mxu0
    %v1920 = vadd.f32 0.0, %v1919
    %1921 = vmatmul.f32.gmra.mxu0 %v277
    %v1922 = vpop.f32.mrf.mxu0
    %v1923 = vadd.f32 0.0, %v1922
    %1924 = vdwg.mxu0
    %1925 = vmatpush.msra.mxu0 %v317
    %1926 = vmatpush.msra.mxu0 %v316
    %1927 = vmatpush.msra.mxu0 %v315
    %1928 = vmatpush.msra.mxu0 %v314
    %1929 = vmatpush.msra.mxu0 %v313
    %1930 = vmatpush.msra.mxu0 %v312
    %1931 = vmatpush.msra.mxu0 %v311
    %1932 = vmatpush.msra.mxu0 %v310
    %1933 = vmatpush.msra.mxu0 %v309
    %1934 = vmatpush.msra.mxu0 %v308
    %1935 = vmatpush.msra.mxu0 %v307
    %1936 = vmatpush.msra.mxu0 %v306
    %1937 = vmatpush.msra.mxu0 %v305
    %1938 = vmatpush.msra.mxu0 %v304
    %1939 = vmatpush.msra.mxu0 %v303
    %1940 = vmatpush.msra.mxu0 %v302
    %1941 = vmatmul.f32.gmra.mxu0 %v1920
    %v1942 = vpop.f32.mrf.mxu0
    %v1943 = vadd.f32 %v320, %v1942
    %1944 = vmatmul.f32.gmra.mxu0 %v1923
    %v1945 = vpop.f32.mrf.mxu0
    %v1946 = vadd.f32 %v320, %v1945
    %1947 = vdwg.mxu0
    %1948 = vmatpush.msra.mxu0 %v360
    %1949 = vmatpush.msra.mxu0 %v359
    %1950 = vmatpush.msra.mxu0 %v358
    %1951 = vmatpush.msra.mxu0 %v357
    %1952 = vmatpush.msra.mxu0 %v356
    %1953 = vmatpush.msra.mxu0 %v355
    %1954 = vmatpush.msra.mxu0 %v354
    %1955 = vmatpush.msra.mxu0 %v353
    %1956 = vmatpush.msra.mxu0 %v352
    %1957 = vmatpush.msra.mxu0 %v351
    %1958 = vmatpush.msra.mxu0 %v350
    %1959 = vmatpush.msra.mxu0 %v349
    %1960 = vmatpush.msra.mxu0 %v348
    %1961 = vmatpush.msra.mxu0 %v347
    %1962 = vmatpush.msra.mxu0 %v346
    %1963 = vmatpush.msra.mxu0 %v345
    %1964 = vmatmul.f32.gmra.mxu0 %v1860
    %v1965 = vpop.f32.mrf.mxu0
    %v1966 = vadd.f32 0.0, %v1965
    %1967 = vmatmul.f32.gmra.mxu0 %v1861
    %v1968 = vpop.f32.mrf.mxu0
    %v1969 = vadd.f32 0.0, %v1968
    %1970 = vdwg.mxu0
    %v1971 = vadd.f32 %v1943, %v1966
    %v1972 = vadd.f32 %v1946, %v1969
    %v1973 = vadd.f32 %v1971, %v388
    %v1974 = vadd.f32 %v1972, %v388
    %v1975 = vsub.f32 0.0, %v1973
    %v1976 = vsub.f32 0.0, %v1974
    %v1977 = vmul.f32 %v1975, 1.442695
    %v1978 = vpow.pop %v1977
    %v1979 = vmul.f32 %v1976, 1.442695
    %v1980 = vpow.pop %v1979
    %v1981 = vadd.f32 %v1978, 1.0
    %v1982 = vadd.f32 %v1980, 1.0
    %v1983 = vrcp.pop %v1981
    %v1984 = vmul.f32 %v1981, %v1983
    %v1985 = vsub.f32 1.0, %v1984
    %v1986 = vmul.f32 %v1983, %v1985
    %v1987 = vadd.f32 %v1983, %v1986
    %vm1988 = vweird.f32 %v1981
    %vm1989 = vweird.f32 %v1983
    %vm1990 = vmor %vm1988, %vm1989
    %v1991 = vsel %vm1990, %v1983, %v1987
    %v1992 = vand.u32 2147483647, %v1981
    %vm1993 = vcmp.eq.f32.partialorder %v1992, 8.507059e+37
    %v1994 = vand.u32 %v1981, 2147483648
    %v1995 = vor.u32 1.1754944e-38, %v1994
    %v1996 = vsel %vm1993, %v1995, %v1991
    %v1997 = vmul.f32 1.0, %v1996
    %v1998 = vrcp.pop %v1982
    %v1999 = vmul.f32 %v1982, %v1998
    %v2000 = vsub.f32 1.0, %v1999
    %v2001 = vmul.f32 %v1998, %v2000
    %v2002 = vadd.f32 %v1998, %v2001
    %vm2003 = vweird.f32 %v1982
    %vm2004 = vweird.f32 %v1998
    %vm2005 = vmor %vm2003, %vm2004
    %v2006 = vsel %vm2005, %v1998, %v2002
    %v2007 = vand.u32 2147483647, %v1982
    %vm2008 = vcmp.eq.f32.partialorder %v2007, 8.507059e+37
    %v2009 = vand.u32 %v1982, 2147483648
    %v2010 = vor.u32 1.1754944e-38, %v2009
    %v2011 = vsel %vm2008, %v2010, %v2006
    %v2012 = vmul.f32 1.0, %v2011
    %2013 = vmatpush.msra.mxu0 %v446
    %2014 = vmatpush.msra.mxu0 %v445
    %2015 = vmatpush.msra.mxu0 %v444
    %2016 = vmatpush.msra.mxu0 %v443
    %2017 = vmatpush.msra.mxu0 %v442
    %2018 = vmatpush.msra.mxu0 %v441
    %2019 = vmatpush.msra.mxu0 %v440
    %2020 = vmatpush.msra.mxu0 %v439
    %2021 = vmatpush.msra.mxu0 %v438
    %2022 = vmatpush.msra.mxu0 %v437
    %2023 = vmatpush.msra.mxu0 %v436
    %2024 = vmatpush.msra.mxu0 %v435
    %2025 = vmatpush.msra.mxu0 %v434
    %2026 = vmatpush.msra.mxu0 %v433
    %2027 = vmatpush.msra.mxu0 %v432
    %2028 = vmatpush.msra.mxu0 %v431
    %2029 = vmatmul.f32.gmra.mxu0 %v1920
    %v2030 = vpop.f32.mrf.mxu0
    %v2031 = vadd.f32 %v450, %v2030
    %2032 = vmatmul.f32.gmra.mxu0 %v1923
    %v2033 = vpop.f32.mrf.mxu0
    %v2034 = vadd.f32 %v450, %v2033
    %2035 = vdwg.mxu0
    %2036 = vmatpush.msra.mxu0 %v491
    %2037 = vmatpush.msra.mxu0 %v490
    %2038 = vmatpush.msra.mxu0 %v489
    %2039 = vmatpush.msra.mxu0 %v488
    %2040 = vmatpush.msra.mxu0 %v487
    %2041 = vmatpush.msra.mxu0 %v486
    %2042 = vmatpush.msra.mxu0 %v485
    %2043 = vmatpush.msra.mxu0 %v484
    %2044 = vmatpush.msra.mxu0 %v483
    %2045 = vmatpush.msra.mxu0 %v482
    %2046 = vmatpush.msra.mxu0 %v481
    %2047 = vmatpush.msra.mxu0 %v480
    %2048 = vmatpush.msra.mxu0 %v479
    %2049 = vmatpush.msra.mxu0 %v478
    %2050 = vmatpush.msra.mxu0 %v477
    %2051 = vmatpush.msra.mxu0 %v476
    %2052 = vmatmul.f32.gmra.mxu0 %v1860
    %v2053 = vpop.f32.mrf.mxu0
    %v2054 = vadd.f32 0.0, %v2053
    %2055 = vmatmul.f32.gmra.mxu0 %v1861
    %v2056 = vpop.f32.mrf.mxu0
    %v2057 = vadd.f32 0.0, %v2056
    %2058 = vdwg.mxu0
    %v2059 = vadd.f32 %v2031, %v2054
    %v2060 = vadd.f32 %v2034, %v2057
    %v2061 = vadd.f32 %v2059, %v520
    %v2062 = vadd.f32 %v2060, %v520
    %v2063 = vsub.f32 0.0, %v2061
    %v2064 = vsub.f32 0.0, %v2062
    %v2065 = vmul.f32 %v2063, 1.442695
    %v2066 = vpow.pop %v2065
    %v2067 = vmul.f32 %v2064, 1.442695
    %v2068 = vpow.pop %v2067
    %v2069 = vadd.f32 %v2066, 1.0
    %v2070 = vadd.f32 %v2068, 1.0
    %v2071 = vrcp.pop %v2069
    %v2072 = vmul.f32 %v2069, %v2071
    %v2073 = vsub.f32 1.0, %v2072
    %v2074 = vmul.f32 %v2071, %v2073
    %v2075 = vadd.f32 %v2071, %v2074
    %vm2076 = vweird.f32 %v2069
    %vm2077 = vweird.f32 %v2071
    %vm2078 = vmor %vm2076, %vm2077
    %v2079 = vsel %vm2078, %v2071, %v2075
    %v2080 = vand.u32 2147483647, %v2069
    %vm2081 = vcmp.eq.f32.partialorder %v2080, 8.507059e+37
    %v2082 = vand.u32 %v2069, 2147483648
    %v2083 = vor.u32 1.1754944e-38, %v2082
    %v2084 = vsel %vm2081, %v2083, %v2079
    %v2085 = vmul.f32 1.0, %v2084
    %v2086 = vrcp.pop %v2070
    %v2087 = vmul.f32 %v2070, %v2086
    %v2088 = vsub.f32 1.0, %v2087
    %v2089 = vmul.f32 %v2086, %v2088
    %v2090 = vadd.f32 %v2086, %v2089
    %vm2091 = vweird.f32 %v2070
    %vm2092 = vweird.f32 %v2086
    %vm2093 = vmor %vm2091, %vm2092
    %v2094 = vsel %vm2093, %v2086, %v2090
    %v2095 = vand.u32 2147483647, %v2070
    %vm2096 = vcmp.eq.f32.partialorder %v2095, 8.507059e+37
    %v2097 = vand.u32 %v2070, 2147483648
    %v2098 = vor.u32 1.1754944e-38, %v2097
    %v2099 = vsel %vm2096, %v2098, %v2094
    %v2100 = vmul.f32 1.0, %v2099
    %2101 = vmatpush.msra.mxu0 %v578
    %2102 = vmatpush.msra.mxu0 %v577
    %2103 = vmatpush.msra.mxu0 %v576
    %2104 = vmatpush.msra.mxu0 %v575
    %2105 = vmatpush.msra.mxu0 %v574
    %2106 = vmatpush.msra.mxu0 %v573
    %2107 = vmatpush.msra.mxu0 %v572
    %2108 = vmatpush.msra.mxu0 %v571
    %2109 = vmatpush.msra.mxu0 %v570
    %2110 = vmatpush.msra.mxu0 %v569
    %2111 = vmatpush.msra.mxu0 %v568
    %2112 = vmatpush.msra.mxu0 %v567
    %2113 = vmatpush.msra.mxu0 %v566
    %2114 = vmatpush.msra.mxu0 %v565
    %2115 = vmatpush.msra.mxu0 %v564
    %2116 = vmatpush.msra.mxu0 %v563
    %2117 = vmatmul.f32.gmra.mxu0 %v1920
    %v2118 = vpop.f32.mrf.mxu0
    %v2119 = vadd.f32 %v582, %v2118
    %2120 = vmatmul.f32.gmra.mxu0 %v1923
    %v2121 = vpop.f32.mrf.mxu0
    %v2122 = vadd.f32 %v582, %v2121
    %2123 = vdwg.mxu0
    %2124 = vmatpush.msra.mxu0 %v623
    %2125 = vmatpush.msra.mxu0 %v622
    %2126 = vmatpush.msra.mxu0 %v621
    %2127 = vmatpush.msra.mxu0 %v620
    %2128 = vmatpush.msra.mxu0 %v619
    %2129 = vmatpush.msra.mxu0 %v618
    %2130 = vmatpush.msra.mxu0 %v617
    %2131 = vmatpush.msra.mxu0 %v616
    %2132 = vmatpush.msra.mxu0 %v615
    %2133 = vmatpush.msra.mxu0 %v614
    %2134 = vmatpush.msra.mxu0 %v613
    %2135 = vmatpush.msra.mxu0 %v612
    %2136 = vmatpush.msra.mxu0 %v611
    %2137 = vmatpush.msra.mxu0 %v610
    %2138 = vmatpush.msra.mxu0 %v609
    %2139 = vmatpush.msra.mxu0 %v608
    %2140 = vmatmul.f32.gmra.mxu0 %v1860
    %v2141 = vpop.f32.mrf.mxu0
    %v2142 = vadd.f32 %v627, %v2141
    %2143 = vmatmul.f32.gmra.mxu0 %v1861
    %v2144 = vpop.f32.mrf.mxu0
    %v2145 = vadd.f32 %v627, %v2144
    %2146 = vdwg.mxu0
    %v2147 = vmul.f32 %v1997, %v2142
    %v2148 = vmul.f32 %v2012, %v2145
    %v2149 = vadd.f32 %v2119, %v2147
    %v2150 = vadd.f32 %v2122, %v2148
    %v2151 = vtanh.pop %v2149
    %v2152 = vtanh.pop %v2150
    %v2153 = vsub.f32 1.0, %v2085
    %v2154 = vsub.f32 1.0, %v2100
    %v2155 = vmul.f32 %v2153, %v2151
    %v2156 = vmul.f32 %v2154, %v2152
    %v2157 = vmul.f32 %v2085, %v1860
    %v2158 = vmul.f32 %v2100, %v1861
    %v2159 = vadd.f32 %v2155, %v2157
    %v2160 = vadd.f32 %v2156, %v2158
    %v2161 = vmax.f32 %v2159, 0.0
    %v2162 = vmax.f32 %v2160, 0.0
    %v2163 = vmax.f32 %v2161, %v2162
    %v2164 = vrot.slane %v2163, 4
    %v2165 = vmax.f32 %v2163, %v2164
    %v2166 = vrot.slane %v2165, 2
    %v2167 = vmax.f32 %v2165, %v2166
    %v2168 = vrot.slane %v2167, 1
    %v2169 = vmax.f32 %v2167, %v2168
    %v2170 = vld [vmem:[%s8] sm:$0xff]
    %v2171 = vld [vmem:[%s8 + $0x8] sm:$0xff]
    %v2172 = vld [vmem:[%s8 + $0x10] sm:$0xff]
    %v2173 = vld [vmem:[%s8 + $0x18] sm:$0xff]
    %v2174 = vld [vmem:[%s8 + $0x20] sm:$0xff]
    %v2175 = vld [vmem:[%s8 + $0x28] sm:$0xff]
    %v2176 = vld [vmem:[%s8 + $0x30] sm:$0xff]
    %v2177 = vld [vmem:[%s8 + $0x38] sm:$0xff]
    %v2178 = vld [vmem:[%s8 + $0x40] sm:$0xff]
    %v2179 = vld [vmem:[%s8 + $0x48] sm:$0xff]
    %v2180 = vld [vmem:[%s8 + $0x50] sm:$0xff]
    %v2181 = vld [vmem:[%s8 + $0x58] sm:$0xff]
    %v2182 = vld [vmem:[%s8 + $0x60] sm:$0xff]
    %v2183 = vld [vmem:[%s8 + $0x68] sm:$0xff]
    %v2184 = vld [vmem:[%s8 + $0x70] sm:$0xff]
    %v2185 = vld [vmem:[%s8 + $0x78] sm:$0xff]
    %v2186 = vld [vmem:[%s9] sm:$0x1]
    %2187 = vmatpush.msra.mxu0 %v2185
    %2188 = vmatpush.msra.mxu0 %v2184
    %2189 = vmatpush.msra.mxu0 %v2183
    %2190 = vmatpush.msra.mxu0 %v2182
    %2191 = vmatpush.msra.mxu0 %v2181
    %2192 = vmatpush.msra.mxu0 %v2180
    %2193 = vmatpush.msra.mxu0 %v2179
    %2194 = vmatpush.msra.mxu0 %v2178
    %2195 = vmatpush.msra.mxu0 %v2177
    %2196 = vmatpush.msra.mxu0 %v2176
    %2197 = vmatpush.msra.mxu0 %v2175
    %2198 = vmatpush.msra.mxu0 %v2174
    %2199 = vmatpush.msra.mxu0 %v2173
    %2200 = vmatpush.msra.mxu0 %v2172
    %2201 = vmatpush.msra.mxu0 %v2171
    %2202 = vmatpush.msra.mxu0 %v2170
    %2203 = vmatmul.f32.gmra.mxu0 %v2169
    %v2204 = vpop.f32.mrf.mxu0
    %v2205 = vadd.f32 %v2186, %v2204
    %2206 = vdwg.mxu0
    %v2207 = vsub.f32 0.0, %v2205
    %v2208 = vmul.f32 %v2207, 1.442695
    %v2209 = vpow.pop %v2208
    %v2210 = vadd.f32 %v2209, 1.0
    %v2211 = vrcp.pop %v2210
    %v2212 = vmul.f32 %v2210, %v2211
    %v2213 = vsub.f32 1.0, %v2212
    %v2214 = vmul.f32 %v2211, %v2213
    %v2215 = vadd.f32 %v2211, %v2214
    %vm2216 = vweird.f32 %v2210
    %vm2217 = vweird.f32 %v2211
    %vm2218 = vmor %vm2216, %vm2217
    %v2219 = vsel %vm2218, %v2211, %v2215
    %v2220 = vand.u32 2147483647, %v2210
    %vm2221 = vcmp.eq.f32.partialorder %v2220, 8.507059e+37
    %v2222 = vand.u32 %v2210, 2147483648
    %v2223 = vor.u32 1.1754944e-38, %v2222
    %v2224 = vsel %vm2221, %v2223, %v2219
    %v2225 = vmul.f32 1.0, %v2224
    %vm2226 = vcmask 8192
    %2227 = vst.msk [vmem:[#allocation8] sm:$0x1] %vm2226, %v2225
    // Predicated region
    $region54: #{ggnn_simplify_forward.1} parent=1 // pred_check
      _
    $region55: #{ggnn_simplify_forward.1} parent=1 // pred_check_branch
      %2229 = sbr.rel (0) target = $region57
    $region56: #{ggnn_simplify_forward.1} parent=1 // pred_region
      %2231 = vsyncadd [#allocation4], 0
      %s2233 = sshll.u32 [#allocation8], 4
      %s2234 = int_to_ptr.vmem [resolvable:$true] %s2233
      %s2235 = sshll.u32 %s10, 4
      %s2236 = int_to_ptr.hbm [resolvable:$true] %s2235
      %2238 = dma.vmem_to_hbm [thread:$0]  %s2234, 16, %s2236, [#allocation4]
    $region57: #{ggnn_simplify_forward.1} parent=1 // pred_fallthru
      _
    // Predicated region
    $region58: #{ggnn_simplify_forward.1} parent=1 // pred_check
      _
    $region59: #{ggnn_simplify_forward.1} parent=1 // pred_check_branch
      %2240 = sbr.rel (0) target = $region61
    $region60: #{ggnn_simplify_forward.1} parent=1 // pred_region
      %2242 = dma.done [#allocation4], 16
    $region61: #{ggnn_simplify_forward.1} parent=1 // pred_fallthru
      _
    %2243 = vsyncpa [#allocation3], 1
    %2244 = vsyncpa [#allocation6], 1
    %2245 = vsyncpa [#allocation4], 1

</llo_original>
